<compile_context>
chip_gen: v7x
topology: tpu7x:2x2x1
jax: 0.10.0
libtpu: 0.0.40
codegen_flags: <defaults>
</compile_context>

<pallas_src>
import functools

import jax
import jax.numpy as jnp
from jax.experimental import pallas as pl
from jax.experimental.pallas import tpu as pltpu


def _erf_poly(z):
    """erf(z) via Abramowitz & Stegun 7.1.26 (max abs err ~1.5e-7), f32.

    Uses only exp / mul / add / where so it is guaranteed to lower in Mosaic.
    """
    a1, a2, a3, a4, a5 = (0.254829592, -0.284496736, 1.421413741,
                          -1.453152027, 1.061405429)
    p = 0.3275911
    za = jnp.abs(z)
    t = 1.0 / (1.0 + p * za)
    poly = ((((a5 * t + a4) * t + a3) * t + a2) * t + a1) * t
    y = 1.0 - poly * jnp.exp(-za * za)
    return jnp.where(z >= 0, y, -y)


def _gelu_exact(x):
    """Exact (erf) GELU, matching torch.nn.GELU() to f32 rounding."""
    return 0.5 * x * (1.0 + _erf_poly(x * 0.7071067811865476))


def convnext_kernel(xp_ref, dww_ref, dwb_ref, w1_ref, b1_ref, w2_ref, b2_ref,
                    o_ref, *, th, tw, c):
    """One (batch, H-row-tile) step.

    xp_ref : (1, H+6, W+6, C) padded NHWC input for this batch element
    dww_ref: (7, 7, C) depthwise conv weight, dwb_ref: (1, C) bias
    w1_ref : (C, 4C)  [LN affine folded in],  b1_ref: (1, 4C)
    w2_ref : (4C, C)  [gamma folded in],      b2_ref: (1, C)
    o_ref  : (1, th, W, C) output tile
    """
    t = pl.program_id(1)
    row0 = pl.multiple_of(t * th, th)              # first padded row of the halo window

    # Rows [row0, row0 + th + 6) of the padded image = th output rows + 6-row halo.
    xrows = xp_ref[0, pl.ds(row0, th + 6), :, :]   # (th+6, W+6, C), f32

    # ---- depthwise 7x7 conv (padding already applied in the wrapper) -------
    dww = dww_ref[...]                             # (7, 7, C)
    acc = jnp.zeros((th, tw, c), jnp.float32)
    x_resid = None
    for kw in range(7):                            # 7 sublane-offset slices (not 49)
        xw = xrows[:, kw:kw + tw, :]               # (th+6, W, C)
        if kw == 3:
            x_resid = xw[3:3 + th]                 # original (unpadded) input tile
        for kh in range(7):                        # cheap leading-axis taps
            acc = acc + xw[kh:kh + th] * dww[kh, kw]
    dw = acc + dwb_ref[0]                          # (th, W, C)

    # ---- LayerNorm over C (eps=1e-6); affine folded into w1/b1 -------------
    u = jnp.mean(dw, axis=-1, keepdims=True)
    d = dw - u
    var = jnp.mean(d * d, axis=-1, keepdims=True)
    xn = d * jax.lax.rsqrt(var + 1e-6)

    # ---- pointwise MLP: Linear -> exact GELU -> Linear (MXU, f32 accum) ----
    tok = xn.reshape(th * tw, c)                   # free when W % 8 == 0
    mm_dtype = w1_ref.dtype                        # bf16 (default) or f32
    h1 = jnp.dot(tok.astype(mm_dtype), w1_ref[...],
                 preferred_element_type=jnp.float32) + b1_ref[0]
    h1 = _gelu_exact(h1)                           # exact erf GELU (see _erf_poly)
    h2 = jnp.dot(h1.astype(mm_dtype), w2_ref[...],
                 preferred_element_type=jnp.float32) + b2_ref[0]

    # ---- residual (gamma already folded into w2/b2) -------------------------
    o_ref[0] = (x_resid + h2.reshape(th, tw, c)).astype(o_ref.dtype)


def convnext_block_pallas_nhwc(x_nhwc, params, *, tile_h=8,
                               matmul_dtype=jnp.bfloat16):
    """NHWC entry point (use this end-to-end to avoid NCHW<->NHWC transposes)."""
    B, H, W, C = x_nhwc.shape
    dww, dwb, lnw, lnb, w1, b1, w2, b2, gamma = params
    C4 = 4 * C
    th = tile_h if (tile_h is not None and H % tile_h == 0) else H

    # One-time wrapper folding: LN affine into pwconv1, gamma into pwconv2.
    w1f = (lnw.reshape(C, 1) * w1).astype(matmul_dtype)            # (C, 4C)
    b1f = (lnb.reshape(1, C) @ w1 + b1.reshape(1, C4))             # (1, 4C) f32
    w2f = (w2 * gamma.reshape(1, C)).astype(matmul_dtype)          # (4C, C)
    b2f = (b2 * gamma).reshape(1, C)                               # (1, C)  f32
    dwb2 = dwb.reshape(1, C)

    # Pad spatially once so the kernel never concatenates.
    xpad = jnp.pad(x_nhwc, ((0, 0), (3, 3), (3, 3), (0, 0)))
    Hp, Wp = H + 6, W + 6
    grid = (B, H // th)

    kernel = functools.partial(convnext_kernel, th=th, tw=W, c=C)
    out = pl.pallas_call(
        kernel,
        out_shape=jax.ShapeDtypeStruct((B, H, W, C), x_nhwc.dtype),
        grid=grid,
        in_specs=[
            pl.BlockSpec((1, Hp, Wp, C), lambda b, t: (b, 0, 0, 0)),  # padded input
            pl.BlockSpec((7, 7, C),      lambda b, t: (0, 0, 0)),     # dw weight
            pl.BlockSpec((1, C),         lambda b, t: (0, 0)),        # dw bias
            pl.BlockSpec((C, C4),        lambda b, t: (0, 0)),        # pwconv1 w (folded)
            pl.BlockSpec((1, C4),        lambda b, t: (0, 0)),        # pwconv1 b (folded)
            pl.BlockSpec((C4, C),        lambda b, t: (0, 0)),        # pwconv2 w (folded)
            pl.BlockSpec((1, C),         lambda b, t: (0, 0)),        # pwconv2 b (folded)
        ],
        out_specs=pl.BlockSpec((1, th, W, C), lambda b, t: (b, t, 0, 0)),
        compiler_params=pltpu.CompilerParams(
            dimension_semantics=("parallel", "parallel"),
            vmem_limit_bytes=32 * 1024 * 1024,
        ),
    )(xpad, dww, dwb2, w1f, b1f, w2f, b2f)
    return out


def convnext_block_pallas(x_nchw, params, *, tile_h=8, matmul_dtype=jnp.bfloat16):
    """NCHW wrapper matching the PyTorch module: returns (out, None)."""
    x_nhwc = jnp.transpose(x_nchw, (0, 2, 3, 1))
    out = convnext_block_pallas_nhwc(x_nhwc, params, tile_h=tile_h,
                                     matmul_dtype=matmul_dtype)
    # drop_path=0.0 in the reference module -> Identity (nothing to do).
    return jnp.transpose(out, (0, 3, 1, 2)), None


def convnext_block_ref(x_nchw, params):
    """Pure-JAX reference mirroring the PyTorch forward (f32, highest precision)."""
    dww, dwb, lnw, lnb, w1, b1, w2, b2, gamma = params
    B, C, H, W = x_nchw.shape
    prec = jax.lax.Precision.HIGHEST
    x = jnp.transpose(x_nchw, (0, 2, 3, 1))                         # NHWC
    dn = jax.lax.conv_dimension_numbers(x.shape, (7, 7, 1, C),
                                        ("NHWC", "HWIO", "NHWC"))
    dw = jax.lax.conv_general_dilated(
        x, dww.reshape(7, 7, 1, C), (1, 1), [(3, 3), (3, 3)],
        dimension_numbers=dn, feature_group_count=C, precision=prec) + dwb
    u = jnp.mean(dw, axis=-1, keepdims=True)
    s = jnp.mean((dw - u) ** 2, axis=-1, keepdims=True)
    xn = (dw - u) / jnp.sqrt(s + 1e-6) * lnw + lnb
    h1 = jax.nn.gelu(jnp.dot(xn, w1, precision=prec) + b1, approximate=False)
    h2 = (jnp.dot(h1, w2, precision=prec) + b2) * gamma
    out = x + h2
    return jnp.transpose(out, (0, 3, 1, 2)), None


def make_params(key, dim, layer_scale_init_value=1e-6):
    ks = jax.random.split(key, 8)
    dww = jax.random.normal(ks[0], (7, 7, dim), jnp.float32) * 0.05     # dwconv weight (kh, kw, C)
    dwb = jax.random.normal(ks[1], (dim,), jnp.float32) * 0.05          # dwconv bias
    # LN weight/bias are perturbed from the module's (ones, zeros) init so the
    # affine-folding path is actually exercised by the correctness check.
    lnw = 1.0 + 0.1 * jax.random.normal(ks[2], (dim,), jnp.float32)
    lnb = 0.1 * jax.random.normal(ks[3], (dim,), jnp.float32)
    w1 = jax.random.normal(ks[4], (dim, 4 * dim), jnp.float32) * 0.05   # pwconv1 (in, out)
    b1 = jax.random.normal(ks[5], (4 * dim,), jnp.float32) * 0.05
    w2 = jax.random.normal(ks[6], (4 * dim, dim), jnp.float32) * 0.05   # pwconv2 (in, out)
    b2 = jax.random.normal(ks[7], (dim,), jnp.float32) * 0.05
    gamma = layer_scale_init_value * jnp.ones((dim,), jnp.float32)      # layer scale
    return (dww, dwb, lnw, lnb, w1, b1, w2, b2, gamma)


if __name__ == "__main__":
    B, C, H, W = 2, 32, 16, 16            # dim=32 -> MLP hidden 4*dim=128
    key = jax.random.PRNGKey(0)
    kx, kp = jax.random.split(key)
    x = jax.random.normal(kx, (B, C, H, W), jnp.float32)

    # layer_scale_init_value=0.5 (instead of the module default 1e-6) so the
    # conv/LN/MLP branch is visible in the output and the check is meaningful.
    params = make_params(kp, C, layer_scale_init_value=0.5)

    ref, _ = convnext_block_ref(x, params)
    ref = jax.block_until_ready(ref)

    # f32-operand matmul path (tight correctness check).
    out_f32, aux = convnext_block_pallas(x, params, matmul_dtype=jnp.float32)
    out_f32 = jax.block_until_ready(out_f32)
    assert aux is None and out_f32.shape == (B, C, H, W)
    err32 = float(jnp.max(jnp.abs(out_f32 - ref)))
    assert jnp.allclose(out_f32, ref, rtol=1e-2, atol=1e-2), \
        f"f32 path max abs err {err32}"

    # Default bf16-operand matmul path (MXU-native rate, f32 accumulation).
    out_bf16, _ = convnext_block_pallas(x, params)
    out_bf16 = jax.block_until_ready(out_bf16)
    err16 = float(jnp.max(jnp.abs(out_bf16 - ref)))
    assert jnp.allclose(out_bf16, ref, rtol=3e-2, atol=3e-2), \
        f"bf16 path max abs err {err16}"

    print("KERNEL_OK")
</pallas_src>

<mosaic_0001>
module attributes {stable_mosaic.version = 11 : i64} {
  func.func @convnext_kernel(%arg0: i32, %arg1: i32, %arg2: memref<1x22x22x32xf32, #tpu.memory_space<vmem>>, %arg3: memref<7x7x32xf32, #tpu.memory_space<vmem>>, %arg4: memref<1x32xf32, #tpu.memory_space<vmem>>, %arg5: memref<32x128xf32, #tpu.memory_space<vmem>>, %arg6: memref<1x128xf32, #tpu.memory_space<vmem>>, %arg7: memref<128x32xf32, #tpu.memory_space<vmem>>, %arg8: memref<1x32xf32, #tpu.memory_space<vmem>>, %arg9: memref<1x8x16x32xf32, #tpu.memory_space<vmem>>) attributes {dimension_semantics = [#tpu.dimension_semantics<parallel>, #tpu.dimension_semantics<parallel>], iteration_bounds = array<i64: 2, 2>, scalar_prefetch = 0 : i64, scratch_operands = 0 : i64, tpu.core_type = #tpu.core_type<tc>, window_params = [{transform_indices = @transform_0, window_bounds = array<i64: 1, 22, 22, 32>}, {pipeline_mode = #tpu.pipeline_mode<synchronous>, transform_indices = @transform_1, window_bounds = array<i64: 7, 7, 32>}, {pipeline_mode = #tpu.pipeline_mode<synchronous>, transform_indices = @transform_2, window_bounds = array<i64: 1, 32>}, {pipeline_mode = #tpu.pipeline_mode<synchronous>, transform_indices = @transform_3, window_bounds = array<i64: 32, 128>}, {pipeline_mode = #tpu.pipeline_mode<synchronous>, transform_indices = @transform_4, window_bounds = array<i64: 1, 128>}, {pipeline_mode = #tpu.pipeline_mode<synchronous>, transform_indices = @transform_5, window_bounds = array<i64: 128, 32>}, {pipeline_mode = #tpu.pipeline_mode<synchronous>, transform_indices = @transform_6, window_bounds = array<i64: 1, 32>}, {transform_indices = @transform_7, window_bounds = array<i64: 1, 8, 16, 32>}]} {
    %c8_i32 = arith.constant 8 : i32
    %0 = arith.muli %arg1, %c8_i32 : i32
    %1 = tpu.assume_multiple %0, 8 : i32
    %c0 = arith.constant 0 : index
    %2 = arith.index_cast %1 : i32 to index
    %c0_0 = arith.constant 0 : index
    %c0_1 = arith.constant 0 : index
    %3 = vector.load %arg2[%c0, %2, %c0_0, %c0_1] : memref<1x22x22x32xf32, #tpu.memory_space<vmem>>, vector<1x14x22x32xf32>
    %4 = vector.shape_cast %3 : vector<1x14x22x32xf32> to vector<14x22x32xf32>
    %c0_2 = arith.constant 0 : index
    %c0_3 = arith.constant 0 : index
    %c0_4 = arith.constant 0 : index
    %5 = vector.load %arg3[%c0_2, %c0_3, %c0_4] : memref<7x7x32xf32, #tpu.memory_space<vmem>>, vector<7x7x32xf32>
    %cst = arith.constant 0.000000e+00 : f32
    %6 = vector.broadcast %cst : f32 to vector<8x16x32xf32>
    %7 = vector.extract_strided_slice %4 {offsets = [0, 0, 0], sizes = [14, 16, 32], strides = [1, 1, 1]} : vector<14x22x32xf32> to vector<14x16x32xf32>
    %8 = vector.extract_strided_slice %7 {offsets = [0, 0, 0], sizes = [8, 16, 32], strides = [1, 1, 1]} : vector<14x16x32xf32> to vector<8x16x32xf32>
    %9 = vector.extract_strided_slice %5 {offsets = [0, 0, 0], sizes = [1, 1, 32], strides = [1, 1, 1]} : vector<7x7x32xf32> to vector<1x1x32xf32>
    %10 = vector.shape_cast %9 : vector<1x1x32xf32> to vector<32xf32>
    %11 = vector.shape_cast %10 : vector<32xf32> to vector<1x1x32xf32>
    %12 = vector.broadcast %11 : vector<1x1x32xf32> to vector<8x16x32xf32>
    %13 = arith.mulf %8, %12 : vector<8x16x32xf32>
    %14 = arith.addf %6, %13 : vector<8x16x32xf32>
    %15 = vector.extract_strided_slice %7 {offsets = [1, 0, 0], sizes = [8, 16, 32], strides = [1, 1, 1]} : vector<14x16x32xf32> to vector<8x16x32xf32>
    %16 = vector.extract_strided_slice %5 {offsets = [1, 0, 0], sizes = [1, 1, 32], strides = [1, 1, 1]} : vector<7x7x32xf32> to vector<1x1x32xf32>
    %17 = vector.shape_cast %16 : vector<1x1x32xf32> to vector<32xf32>
    %18 = vector.shape_cast %17 : vector<32xf32> to vector<1x1x32xf32>
    %19 = vector.broadcast %18 : vector<1x1x32xf32> to vector<8x16x32xf32>
    %20 = arith.mulf %15, %19 : vector<8x16x32xf32>
    %21 = arith.addf %14, %20 : vector<8x16x32xf32>
    %22 = vector.extract_strided_slice %7 {offsets = [2, 0, 0], sizes = [8, 16, 32], strides = [1, 1, 1]} : vector<14x16x32xf32> to vector<8x16x32xf32>
    %23 = vector.extract_strided_slice %5 {offsets = [2, 0, 0], sizes = [1, 1, 32], strides = [1, 1, 1]} : vector<7x7x32xf32> to vector<1x1x32xf32>
    %24 = vector.shape_cast %23 : vector<1x1x32xf32> to vector<32xf32>
    %25 = vector.shape_cast %24 : vector<32xf32> to vector<1x1x32xf32>
    %26 = vector.broadcast %25 : vector<1x1x32xf32> to vector<8x16x32xf32>
    %27 = arith.mulf %22, %26 : vector<8x16x32xf32>
    %28 = arith.addf %21, %27 : vector<8x16x32xf32>
    %29 = vector.extract_strided_slice %7 {offsets = [3, 0, 0], sizes = [8, 16, 32], strides = [1, 1, 1]} : vector<14x16x32xf32> to vector<8x16x32xf32>
    %30 = vector.extract_strided_slice %5 {offsets = [3, 0, 0], sizes = [1, 1, 32], strides = [1, 1, 1]} : vector<7x7x32xf32> to vector<1x1x32xf32>
    %31 = vector.shape_cast %30 : vector<1x1x32xf32> to vector<32xf32>
    %32 = vector.shape_cast %31 : vector<32xf32> to vector<1x1x32xf32>
    %33 = vector.broadcast %32 : vector<1x1x32xf32> to vector<8x16x32xf32>
    %34 = arith.mulf %29, %33 : vector<8x16x32xf32>
    %35 = arith.addf %28, %34 : vector<8x16x32xf32>
    %36 = vector.extract_strided_slice %7 {offsets = [4, 0, 0], sizes = [8, 16, 32], strides = [1, 1, 1]} : vector<14x16x32xf32> to vector<8x16x32xf32>
    %37 = vector.extract_strided_slice %5 {offsets = [4, 0, 0], sizes = [1, 1, 32], strides = [1, 1, 1]} : vector<7x7x32xf32> to vector<1x1x32xf32>
    %38 = vector.shape_cast %37 : vector<1x1x32xf32> to vector<32xf32>
    %39 = vector.shape_cast %38 : vector<32xf32> to vector<1x1x32xf32>
    %40 = vector.broadcast %39 : vector<1x1x32xf32> to vector<8x16x32xf32>
    %41 = arith.mulf %36, %40 : vector<8x16x32xf32>
    %42 = arith.addf %35, %41 : vector<8x16x32xf32>
    %43 = vector.extract_strided_slice %7 {offsets = [5, 0, 0], sizes = [8, 16, 32], strides = [1, 1, 1]} : vector<14x16x32xf32> to vector<8x16x32xf32>
    %44 = vector.extract_strided_slice %5 {offsets = [5, 0, 0], sizes = [1, 1, 32], strides = [1, 1, 1]} : vector<7x7x32xf32> to vector<1x1x32xf32>
    %45 = vector.shape_cast %44 : vector<1x1x32xf32> to vector<32xf32>
    %46 = vector.shape_cast %45 : vector<32xf32> to vector<1x1x32xf32>
    %47 = vector.broadcast %46 : vector<1x1x32xf32> to vector<8x16x32xf32>
    %48 = arith.mulf %43, %47 : vector<8x16x32xf32>
    %49 = arith.addf %42, %48 : vector<8x16x32xf32>
    %50 = vector.extract_strided_slice %7 {offsets = [6, 0, 0], sizes = [8, 16, 32], strides = [1, 1, 1]} : vector<14x16x32xf32> to vector<8x16x32xf32>
    %51 = vector.extract_strided_slice %5 {offsets = [6, 0, 0], sizes = [1, 1, 32], strides = [1, 1, 1]} : vector<7x7x32xf32> to vector<1x1x32xf32>
    %52 = vector.shape_cast %51 : vector<1x1x32xf32> to vector<32xf32>
    %53 = vector.shape_cast %52 : vector<32xf32> to vector<1x1x32xf32>
    %54 = vector.broadcast %53 : vector<1x1x32xf32> to vector<8x16x32xf32>
    %55 = arith.mulf %50, %54 : vector<8x16x32xf32>
    %56 = arith.addf %49, %55 : vector<8x16x32xf32>
    %57 = vector.extract_strided_slice %4 {offsets = [0, 1, 0], sizes = [14, 16, 32], strides = [1, 1, 1]} : vector<14x22x32xf32> to vector<14x16x32xf32>
    %58 = vector.extract_strided_slice %57 {offsets = [0, 0, 0], sizes = [8, 16, 32], strides = [1, 1, 1]} : vector<14x16x32xf32> to vector<8x16x32xf32>
    %59 = vector.extract_strided_slice %5 {offsets = [0, 1, 0], sizes = [1, 1, 32], strides = [1, 1, 1]} : vector<7x7x32xf32> to vector<1x1x32xf32>
    %60 = vector.shape_cast %59 : vector<1x1x32xf32> to vector<32xf32>
    %61 = vector.shape_cast %60 : vector<32xf32> to vector<1x1x32xf32>
    %62 = vector.broadcast %61 : vector<1x1x32xf32> to vector<8x16x32xf32>
    %63 = arith.mulf %58, %62 : vector<8x16x32xf32>
    %64 = arith.addf %56, %63 : vector<8x16x32xf32>
    %65 = vector.extract_strided_slice %57 {offsets = [1, 0, 0], sizes = [8, 16, 32], strides = [1, 1, 1]} : vector<14x16x32xf32> to vector<8x16x32xf32>
    %66 = vector.extract_strided_slice %5 {offsets = [1, 1, 0], sizes = [1, 1, 32], strides = [1, 1, 1]} : vector<7x7x32xf32> to vector<1x1x32xf32>
    %67 = vector.shape_cast %66 : vector<1x1x32xf32> to vector<32xf32>
    %68 = vector.shape_cast %67 : vector<32xf32> to vector<1x1x32xf32>
    %69 = vector.broadcast %68 : vector<1x1x32xf32> to vector<8x16x32xf32>
    %70 = arith.mulf %65, %69 : vector<8x16x32xf32>
    %71 = arith.addf %64, %70 : vector<8x16x32xf32>
    %72 = vector.extract_strided_slice %57 {offsets = [2, 0, 0], sizes = [8, 16, 32], strides = [1, 1, 1]} : vector<14x16x32xf32> to vector<8x16x32xf32>
    %73 = vector.extract_strided_slice %5 {offsets = [2, 1, 0], sizes = [1, 1, 32], strides = [1, 1, 1]} : vector<7x7x32xf32> to vector<1x1x32xf32>
    %74 = vector.shape_cast %73 : vector<1x1x32xf32> to vector<32xf32>
    %75 = vector.shape_cast %74 : vector<32xf32> to vector<1x1x32xf32>
    %76 = vector.broadcast %75 : vector<1x1x32xf32> to vector<8x16x32xf32>
    %77 = arith.mulf %72, %76 : vector<8x16x32xf32>
    %78 = arith.addf %71, %77 : vector<8x16x32xf32>
    %79 = vector.extract_strided_slice %57 {offsets = [3, 0, 0], sizes = [8, 16, 32], strides = [1, 1, 1]} : vector<14x16x32xf32> to vector<8x16x32xf32>
    %80 = vector.extract_strided_slice %5 {offsets = [3, 1, 0], sizes = [1, 1, 32], strides = [1, 1, 1]} : vector<7x7x32xf32> to vector<1x1x32xf32>
    %81 = vector.shape_cast %80 : vector<1x1x32xf32> to vector<32xf32>
    %82 = vector.shape_cast %81 : vector<32xf32> to vector<1x1x32xf32>
    %83 = vector.broadcast %82 : vector<1x1x32xf32> to vector<8x16x32xf32>
    %84 = arith.mulf %79, %83 : vector<8x16x32xf32>
    %85 = arith.addf %78, %84 : vector<8x16x32xf32>
    %86 = vector.extract_strided_slice %57 {offsets = [4, 0, 0], sizes = [8, 16, 32], strides = [1, 1, 1]} : vector<14x16x32xf32> to vector<8x16x32xf32>
    %87 = vector.extract_strided_slice %5 {offsets = [4, 1, 0], sizes = [1, 1, 32], strides = [1, 1, 1]} : vector<7x7x32xf32> to vector<1x1x32xf32>
    %88 = vector.shape_cast %87 : vector<1x1x32xf32> to vector<32xf32>
    %89 = vector.shape_cast %88 : vector<32xf32> to vector<1x1x32xf32>
    %90 = vector.broadcast %89 : vector<1x1x32xf32> to vector<8x16x32xf32>
    %91 = arith.mulf %86, %90 : vector<8x16x32xf32>
    %92 = arith.addf %85, %91 : vector<8x16x32xf32>
    %93 = vector.extract_strided_slice %57 {offsets = [5, 0, 0], sizes = [8, 16, 32], strides = [1, 1, 1]} : vector<14x16x32xf32> to vector<8x16x32xf32>
    %94 = vector.extract_strided_slice %5 {offsets = [5, 1, 0], sizes = [1, 1, 32], strides = [1, 1, 1]} : vector<7x7x32xf32> to vector<1x1x32xf32>
    %95 = vector.shape_cast %94 : vector<1x1x32xf32> to vector<32xf32>
    %96 = vector.shape_cast %95 : vector<32xf32> to vector<1x1x32xf32>
    %97 = vector.broadcast %96 : vector<1x1x32xf32> to vector<8x16x32xf32>
    %98 = arith.mulf %93, %97 : vector<8x16x32xf32>
    %99 = arith.addf %92, %98 : vector<8x16x32xf32>
    %100 = vector.extract_strided_slice %57 {offsets = [6, 0, 0], sizes = [8, 16, 32], strides = [1, 1, 1]} : vector<14x16x32xf32> to vector<8x16x32xf32>
    %101 = vector.extract_strided_slice %5 {offsets = [6, 1, 0], sizes = [1, 1, 32], strides = [1, 1, 1]} : vector<7x7x32xf32> to vector<1x1x32xf32>
    %102 = vector.shape_cast %101 : vector<1x1x32xf32> to vector<32xf32>
    %103 = vector.shape_cast %102 : vector<32xf32> to vector<1x1x32xf32>
    %104 = vector.broadcast %103 : vector<1x1x32xf32> to vector<8x16x32xf32>
    %105 = arith.mulf %100, %104 : vector<8x16x32xf32>
    %106 = arith.addf %99, %105 : vector<8x16x32xf32>
    %107 = vector.extract_strided_slice %4 {offsets = [0, 2, 0], sizes = [14, 16, 32], strides = [1, 1, 1]} : vector<14x22x32xf32> to vector<14x16x32xf32>
    %108 = vector.extract_strided_slice %107 {offsets = [0, 0, 0], sizes = [8, 16, 32], strides = [1, 1, 1]} : vector<14x16x32xf32> to vector<8x16x32xf32>
    %109 = vector.extract_strided_slice %5 {offsets = [0, 2, 0], sizes = [1, 1, 32], strides = [1, 1, 1]} : vector<7x7x32xf32> to vector<1x1x32xf32>
    %110 = vector.shape_cast %109 : vector<1x1x32xf32> to vector<32xf32>
    %111 = vector.shape_cast %110 : vector<32xf32> to vector<1x1x32xf32>
    %112 = vector.broadcast %111 : vector<1x1x32xf32> to vector<8x16x32xf32>
    %113 = arith.mulf %108, %112 : vector<8x16x32xf32>
    %114 = arith.addf %106, %113 : vector<8x16x32xf32>
    %115 = vector.extract_strided_slice %107 {offsets = [1, 0, 0], sizes = [8, 16, 32], strides = [1, 1, 1]} : vector<14x16x32xf32> to vector<8x16x32xf32>
    %116 = vector.extract_strided_slice %5 {offsets = [1, 2, 0], sizes = [1, 1, 32], strides = [1, 1, 1]} : vector<7x7x32xf32> to vector<1x1x32xf32>
    %117 = vector.shape_cast %116 : vector<1x1x32xf32> to vector<32xf32>
    %118 = vector.shape_cast %117 : vector<32xf32> to vector<1x1x32xf32>
    %119 = vector.broadcast %118 : vector<1x1x32xf32> to vector<8x16x32xf32>
    %120 = arith.mulf %115, %119 : vector<8x16x32xf32>
    %121 = arith.addf %114, %120 : vector<8x16x32xf32>
    %122 = vector.extract_strided_slice %107 {offsets = [2, 0, 0], sizes = [8, 16, 32], strides = [1, 1, 1]} : vector<14x16x32xf32> to vector<8x16x32xf32>
    %123 = vector.extract_strided_slice %5 {offsets = [2, 2, 0], sizes = [1, 1, 32], strides = [1, 1, 1]} : vector<7x7x32xf32> to vector<1x1x32xf32>
    %124 = vector.shape_cast %123 : vector<1x1x32xf32> to vector<32xf32>
    %125 = vector.shape_cast %124 : vector<32xf32> to vector<1x1x32xf32>
    %126 = vector.broadcast %125 : vector<1x1x32xf32> to vector<8x16x32xf32>
    %127 = arith.mulf %122, %126 : vector<8x16x32xf32>
    %128 = arith.addf %121, %127 : vector<8x16x32xf32>
    %129 = vector.extract_strided_slice %107 {offsets = [3, 0, 0], sizes = [8, 16, 32], strides = [1, 1, 1]} : vector<14x16x32xf32> to vector<8x16x32xf32>
    %130 = vector.extract_strided_slice %5 {offsets = [3, 2, 0], sizes = [1, 1, 32], strides = [1, 1, 1]} : vector<7x7x32xf32> to vector<1x1x32xf32>
    %131 = vector.shape_cast %130 : vector<1x1x32xf32> to vector<32xf32>
    %132 = vector.shape_cast %131 : vector<32xf32> to vector<1x1x32xf32>
    %133 = vector.broadcast %132 : vector<1x1x32xf32> to vector<8x16x32xf32>
    %134 = arith.mulf %129, %133 : vector<8x16x32xf32>
    %135 = arith.addf %128, %134 : vector<8x16x32xf32>
    %136 = vector.extract_strided_slice %107 {offsets = [4, 0, 0], sizes = [8, 16, 32], strides = [1, 1, 1]} : vector<14x16x32xf32> to vector<8x16x32xf32>
    %137 = vector.extract_strided_slice %5 {offsets = [4, 2, 0], sizes = [1, 1, 32], strides = [1, 1, 1]} : vector<7x7x32xf32> to vector<1x1x32xf32>
    %138 = vector.shape_cast %137 : vector<1x1x32xf32> to vector<32xf32>
    %139 = vector.shape_cast %138 : vector<32xf32> to vector<1x1x32xf32>
    %140 = vector.broadcast %139 : vector<1x1x32xf32> to vector<8x16x32xf32>
    %141 = arith.mulf %136, %140 : vector<8x16x32xf32>
    %142 = arith.addf %135, %141 : vector<8x16x32xf32>
    %143 = vector.extract_strided_slice %107 {offsets = [5, 0, 0], sizes = [8, 16, 32], strides = [1, 1, 1]} : vector<14x16x32xf32> to vector<8x16x32xf32>
    %144 = vector.extract_strided_slice %5 {offsets = [5, 2, 0], sizes = [1, 1, 32], strides = [1, 1, 1]} : vector<7x7x32xf32> to vector<1x1x32xf32>
    %145 = vector.shape_cast %144 : vector<1x1x32xf32> to vector<32xf32>
    %146 = vector.shape_cast %145 : vector<32xf32> to vector<1x1x32xf32>
    %147 = vector.broadcast %146 : vector<1x1x32xf32> to vector<8x16x32xf32>
    %148 = arith.mulf %143, %147 : vector<8x16x32xf32>
    %149 = arith.addf %142, %148 : vector<8x16x32xf32>
    %150 = vector.extract_strided_slice %107 {offsets = [6, 0, 0], sizes = [8, 16, 32], strides = [1, 1, 1]} : vector<14x16x32xf32> to vector<8x16x32xf32>
    %151 = vector.extract_strided_slice %5 {offsets = [6, 2, 0], sizes = [1, 1, 32], strides = [1, 1, 1]} : vector<7x7x32xf32> to vector<1x1x32xf32>
    %152 = vector.shape_cast %151 : vector<1x1x32xf32> to vector<32xf32>
    %153 = vector.shape_cast %152 : vector<32xf32> to vector<1x1x32xf32>
    %154 = vector.broadcast %153 : vector<1x1x32xf32> to vector<8x16x32xf32>
    %155 = arith.mulf %150, %154 : vector<8x16x32xf32>
    %156 = arith.addf %149, %155 : vector<8x16x32xf32>
    %157 = vector.extract_strided_slice %4 {offsets = [0, 3, 0], sizes = [14, 16, 32], strides = [1, 1, 1]} : vector<14x22x32xf32> to vector<14x16x32xf32>
    %158 = vector.extract_strided_slice %157 {offsets = [3, 0, 0], sizes = [8, 16, 32], strides = [1, 1, 1]} : vector<14x16x32xf32> to vector<8x16x32xf32>
    %159 = vector.extract_strided_slice %157 {offsets = [0, 0, 0], sizes = [8, 16, 32], strides = [1, 1, 1]} : vector<14x16x32xf32> to vector<8x16x32xf32>
    %160 = vector.extract_strided_slice %5 {offsets = [0, 3, 0], sizes = [1, 1, 32], strides = [1, 1, 1]} : vector<7x7x32xf32> to vector<1x1x32xf32>
    %161 = vector.shape_cast %160 : vector<1x1x32xf32> to vector<32xf32>
    %162 = vector.shape_cast %161 : vector<32xf32> to vector<1x1x32xf32>
    %163 = vector.broadcast %162 : vector<1x1x32xf32> to vector<8x16x32xf32>
    %164 = arith.mulf %159, %163 : vector<8x16x32xf32>
    %165 = arith.addf %156, %164 : vector<8x16x32xf32>
    %166 = vector.extract_strided_slice %157 {offsets = [1, 0, 0], sizes = [8, 16, 32], strides = [1, 1, 1]} : vector<14x16x32xf32> to vector<8x16x32xf32>
    %167 = vector.extract_strided_slice %5 {offsets = [1, 3, 0], sizes = [1, 1, 32], strides = [1, 1, 1]} : vector<7x7x32xf32> to vector<1x1x32xf32>
    %168 = vector.shape_cast %167 : vector<1x1x32xf32> to vector<32xf32>
    %169 = vector.shape_cast %168 : vector<32xf32> to vector<1x1x32xf32>
    %170 = vector.broadcast %169 : vector<1x1x32xf32> to vector<8x16x32xf32>
    %171 = arith.mulf %166, %170 : vector<8x16x32xf32>
    %172 = arith.addf %165, %171 : vector<8x16x32xf32>
    %173 = vector.extract_strided_slice %157 {offsets = [2, 0, 0], sizes = [8, 16, 32], strides = [1, 1, 1]} : vector<14x16x32xf32> to vector<8x16x32xf32>
    %174 = vector.extract_strided_slice %5 {offsets = [2, 3, 0], sizes = [1, 1, 32], strides = [1, 1, 1]} : vector<7x7x32xf32> to vector<1x1x32xf32>
    %175 = vector.shape_cast %174 : vector<1x1x32xf32> to vector<32xf32>
    %176 = vector.shape_cast %175 : vector<32xf32> to vector<1x1x32xf32>
    %177 = vector.broadcast %176 : vector<1x1x32xf32> to vector<8x16x32xf32>
    %178 = arith.mulf %173, %177 : vector<8x16x32xf32>
    %179 = arith.addf %172, %178 : vector<8x16x32xf32>
    %180 = vector.extract_strided_slice %157 {offsets = [3, 0, 0], sizes = [8, 16, 32], strides = [1, 1, 1]} : vector<14x16x32xf32> to vector<8x16x32xf32>
    %181 = vector.extract_strided_slice %5 {offsets = [3, 3, 0], sizes = [1, 1, 32], strides = [1, 1, 1]} : vector<7x7x32xf32> to vector<1x1x32xf32>
    %182 = vector.shape_cast %181 : vector<1x1x32xf32> to vector<32xf32>
    %183 = vector.shape_cast %182 : vector<32xf32> to vector<1x1x32xf32>
    %184 = vector.broadcast %183 : vector<1x1x32xf32> to vector<8x16x32xf32>
    %185 = arith.mulf %180, %184 : vector<8x16x32xf32>
    %186 = arith.addf %179, %185 : vector<8x16x32xf32>
    %187 = vector.extract_strided_slice %157 {offsets = [4, 0, 0], sizes = [8, 16, 32], strides = [1, 1, 1]} : vector<14x16x32xf32> to vector<8x16x32xf32>
    %188 = vector.extract_strided_slice %5 {offsets = [4, 3, 0], sizes = [1, 1, 32], strides = [1, 1, 1]} : vector<7x7x32xf32> to vector<1x1x32xf32>
    %189 = vector.shape_cast %188 : vector<1x1x32xf32> to vector<32xf32>
    %190 = vector.shape_cast %189 : vector<32xf32> to vector<1x1x32xf32>
    %191 = vector.broadcast %190 : vector<1x1x32xf32> to vector<8x16x32xf32>
    %192 = arith.mulf %187, %191 : vector<8x16x32xf32>
    %193 = arith.addf %186, %192 : vector<8x16x32xf32>
    %194 = vector.extract_strided_slice %157 {offsets = [5, 0, 0], sizes = [8, 16, 32], strides = [1, 1, 1]} : vector<14x16x32xf32> to vector<8x16x32xf32>
    %195 = vector.extract_strided_slice %5 {offsets = [5, 3, 0], sizes = [1, 1, 32], strides = [1, 1, 1]} : vector<7x7x32xf32> to vector<1x1x32xf32>
    %196 = vector.shape_cast %195 : vector<1x1x32xf32> to vector<32xf32>
    %197 = vector.shape_cast %196 : vector<32xf32> to vector<1x1x32xf32>
    %198 = vector.broadcast %197 : vector<1x1x32xf32> to vector<8x16x32xf32>
    %199 = arith.mulf %194, %198 : vector<8x16x32xf32>
    %200 = arith.addf %193, %199 : vector<8x16x32xf32>
    %201 = vector.extract_strided_slice %157 {offsets = [6, 0, 0], sizes = [8, 16, 32], strides = [1, 1, 1]} : vector<14x16x32xf32> to vector<8x16x32xf32>
    %202 = vector.extract_strided_slice %5 {offsets = [6, 3, 0], sizes = [1, 1, 32], strides = [1, 1, 1]} : vector<7x7x32xf32> to vector<1x1x32xf32>
    %203 = vector.shape_cast %202 : vector<1x1x32xf32> to vector<32xf32>
    %204 = vector.shape_cast %203 : vector<32xf32> to vector<1x1x32xf32>
    %205 = vector.broadcast %204 : vector<1x1x32xf32> to vector<8x16x32xf32>
    %206 = arith.mulf %201, %205 : vector<8x16x32xf32>
    %207 = arith.addf %200, %206 : vector<8x16x32xf32>
    %208 = vector.extract_strided_slice %4 {offsets = [0, 4, 0], sizes = [14, 16, 32], strides = [1, 1, 1]} : vector<14x22x32xf32> to vector<14x16x32xf32>
    %209 = vector.extract_strided_slice %208 {offsets = [0, 0, 0], sizes = [8, 16, 32], strides = [1, 1, 1]} : vector<14x16x32xf32> to vector<8x16x32xf32>
    %210 = vector.extract_strided_slice %5 {offsets = [0, 4, 0], sizes = [1, 1, 32], strides = [1, 1, 1]} : vector<7x7x32xf32> to vector<1x1x32xf32>
    %211 = vector.shape_cast %210 : vector<1x1x32xf32> to vector<32xf32>
    %212 = vector.shape_cast %211 : vector<32xf32> to vector<1x1x32xf32>
    %213 = vector.broadcast %212 : vector<1x1x32xf32> to vector<8x16x32xf32>
    %214 = arith.mulf %209, %213 : vector<8x16x32xf32>
    %215 = arith.addf %207, %214 : vector<8x16x32xf32>
    %216 = vector.extract_strided_slice %208 {offsets = [1, 0, 0], sizes = [8, 16, 32], strides = [1, 1, 1]} : vector<14x16x32xf32> to vector<8x16x32xf32>
    %217 = vector.extract_strided_slice %5 {offsets = [1, 4, 0], sizes = [1, 1, 32], strides = [1, 1, 1]} : vector<7x7x32xf32> to vector<1x1x32xf32>
    %218 = vector.shape_cast %217 : vector<1x1x32xf32> to vector<32xf32>
    %219 = vector.shape_cast %218 : vector<32xf32> to vector<1x1x32xf32>
    %220 = vector.broadcast %219 : vector<1x1x32xf32> to vector<8x16x32xf32>
    %221 = arith.mulf %216, %220 : vector<8x16x32xf32>
    %222 = arith.addf %215, %221 : vector<8x16x32xf32>
    %223 = vector.extract_strided_slice %208 {offsets = [2, 0, 0], sizes = [8, 16, 32], strides = [1, 1, 1]} : vector<14x16x32xf32> to vector<8x16x32xf32>
    %224 = vector.extract_strided_slice %5 {offsets = [2, 4, 0], sizes = [1, 1, 32], strides = [1, 1, 1]} : vector<7x7x32xf32> to vector<1x1x32xf32>
    %225 = vector.shape_cast %224 : vector<1x1x32xf32> to vector<32xf32>
    %226 = vector.shape_cast %225 : vector<32xf32> to vector<1x1x32xf32>
    %227 = vector.broadcast %226 : vector<1x1x32xf32> to vector<8x16x32xf32>
    %228 = arith.mulf %223, %227 : vector<8x16x32xf32>
    %229 = arith.addf %222, %228 : vector<8x16x32xf32>
    %230 = vector.extract_strided_slice %208 {offsets = [3, 0, 0], sizes = [8, 16, 32], strides = [1, 1, 1]} : vector<14x16x32xf32> to vector<8x16x32xf32>
    %231 = vector.extract_strided_slice %5 {offsets = [3, 4, 0], sizes = [1, 1, 32], strides = [1, 1, 1]} : vector<7x7x32xf32> to vector<1x1x32xf32>
    %232 = vector.shape_cast %231 : vector<1x1x32xf32> to vector<32xf32>
    %233 = vector.shape_cast %232 : vector<32xf32> to vector<1x1x32xf32>
    %234 = vector.broadcast %233 : vector<1x1x32xf32> to vector<8x16x32xf32>
    %235 = arith.mulf %230, %234 : vector<8x16x32xf32>
    %236 = arith.addf %229, %235 : vector<8x16x32xf32>
    %237 = vector.extract_strided_slice %208 {offsets = [4, 0, 0], sizes = [8, 16, 32], strides = [1, 1, 1]} : vector<14x16x32xf32> to vector<8x16x32xf32>
    %238 = vector.extract_strided_slice %5 {offsets = [4, 4, 0], sizes = [1, 1, 32], strides = [1, 1, 1]} : vector<7x7x32xf32> to vector<1x1x32xf32>
    %239 = vector.shape_cast %238 : vector<1x1x32xf32> to vector<32xf32>
    %240 = vector.shape_cast %239 : vector<32xf32> to vector<1x1x32xf32>
    %241 = vector.broadcast %240 : vector<1x1x32xf32> to vector<8x16x32xf32>
    %242 = arith.mulf %237, %241 : vector<8x16x32xf32>
    %243 = arith.addf %236, %242 : vector<8x16x32xf32>
    %244 = vector.extract_strided_slice %208 {offsets = [5, 0, 0], sizes = [8, 16, 32], strides = [1, 1, 1]} : vector<14x16x32xf32> to vector<8x16x32xf32>
    %245 = vector.extract_strided_slice %5 {offsets = [5, 4, 0], sizes = [1, 1, 32], strides = [1, 1, 1]} : vector<7x7x32xf32> to vector<1x1x32xf32>
    %246 = vector.shape_cast %245 : vector<1x1x32xf32> to vector<32xf32>
    %247 = vector.shape_cast %246 : vector<32xf32> to vector<1x1x32xf32>
    %248 = vector.broadcast %247 : vector<1x1x32xf32> to vector<8x16x32xf32>
    %249 = arith.mulf %244, %248 : vector<8x16x32xf32>
    %250 = arith.addf %243, %249 : vector<8x16x32xf32>
    %251 = vector.extract_strided_slice %208 {offsets = [6, 0, 0], sizes = [8, 16, 32], strides = [1, 1, 1]} : vector<14x16x32xf32> to vector<8x16x32xf32>
    %252 = vector.extract_strided_slice %5 {offsets = [6, 4, 0], sizes = [1, 1, 32], strides = [1, 1, 1]} : vector<7x7x32xf32> to vector<1x1x32xf32>
    %253 = vector.shape_cast %252 : vector<1x1x32xf32> to vector<32xf32>
    %254 = vector.shape_cast %253 : vector<32xf32> to vector<1x1x32xf32>
    %255 = vector.broadcast %254 : vector<1x1x32xf32> to vector<8x16x32xf32>
    %256 = arith.mulf %251, %255 : vector<8x16x32xf32>
    %257 = arith.addf %250, %256 : vector<8x16x32xf32>
    %258 = vector.extract_strided_slice %4 {offsets = [0, 5, 0], sizes = [14, 16, 32], strides = [1, 1, 1]} : vector<14x22x32xf32> to vector<14x16x32xf32>
    %259 = vector.extract_strided_slice %258 {offsets = [0, 0, 0], sizes = [8, 16, 32], strides = [1, 1, 1]} : vector<14x16x32xf32> to vector<8x16x32xf32>
    %260 = vector.extract_strided_slice %5 {offsets = [0, 5, 0], sizes = [1, 1, 32], strides = [1, 1, 1]} : vector<7x7x32xf32> to vector<1x1x32xf32>
    %261 = vector.shape_cast %260 : vector<1x1x32xf32> to vector<32xf32>
    %262 = vector.shape_cast %261 : vector<32xf32> to vector<1x1x32xf32>
    %263 = vector.broadcast %262 : vector<1x1x32xf32> to vector<8x16x32xf32>
    %264 = arith.mulf %259, %263 : vector<8x16x32xf32>
    %265 = arith.addf %257, %264 : vector<8x16x32xf32>
    %266 = vector.extract_strided_slice %258 {offsets = [1, 0, 0], sizes = [8, 16, 32], strides = [1, 1, 1]} : vector<14x16x32xf32> to vector<8x16x32xf32>
    %267 = vector.extract_strided_slice %5 {offsets = [1, 5, 0], sizes = [1, 1, 32], strides = [1, 1, 1]} : vector<7x7x32xf32> to vector<1x1x32xf32>
    %268 = vector.shape_cast %267 : vector<1x1x32xf32> to vector<32xf32>
    %269 = vector.shape_cast %268 : vector<32xf32> to vector<1x1x32xf32>
    %270 = vector.broadcast %269 : vector<1x1x32xf32> to vector<8x16x32xf32>
    %271 = arith.mulf %266, %270 : vector<8x16x32xf32>
    %272 = arith.addf %265, %271 : vector<8x16x32xf32>
    %273 = vector.extract_strided_slice %258 {offsets = [2, 0, 0], sizes = [8, 16, 32], strides = [1, 1, 1]} : vector<14x16x32xf32> to vector<8x16x32xf32>
    %274 = vector.extract_strided_slice %5 {offsets = [2, 5, 0], sizes = [1, 1, 32], strides = [1, 1, 1]} : vector<7x7x32xf32> to vector<1x1x32xf32>
    %275 = vector.shape_cast %274 : vector<1x1x32xf32> to vector<32xf32>
    %276 = vector.shape_cast %275 : vector<32xf32> to vector<1x1x32xf32>
    %277 = vector.broadcast %276 : vector<1x1x32xf32> to vector<8x16x32xf32>
    %278 = arith.mulf %273, %277 : vector<8x16x32xf32>
    %279 = arith.addf %272, %278 : vector<8x16x32xf32>
    %280 = vector.extract_strided_slice %258 {offsets = [3, 0, 0], sizes = [8, 16, 32], strides = [1, 1, 1]} : vector<14x16x32xf32> to vector<8x16x32xf32>
    %281 = vector.extract_strided_slice %5 {offsets = [3, 5, 0], sizes = [1, 1, 32], strides = [1, 1, 1]} : vector<7x7x32xf32> to vector<1x1x32xf32>
    %282 = vector.shape_cast %281 : vector<1x1x32xf32> to vector<32xf32>
    %283 = vector.shape_cast %282 : vector<32xf32> to vector<1x1x32xf32>
    %284 = vector.broadcast %283 : vector<1x1x32xf32> to vector<8x16x32xf32>
    %285 = arith.mulf %280, %284 : vector<8x16x32xf32>
    %286 = arith.addf %279, %285 : vector<8x16x32xf32>
    %287 = vector.extract_strided_slice %258 {offsets = [4, 0, 0], sizes = [8, 16, 32], strides = [1, 1, 1]} : vector<14x16x32xf32> to vector<8x16x32xf32>
    %288 = vector.extract_strided_slice %5 {offsets = [4, 5, 0], sizes = [1, 1, 32], strides = [1, 1, 1]} : vector<7x7x32xf32> to vector<1x1x32xf32>
    %289 = vector.shape_cast %288 : vector<1x1x32xf32> to vector<32xf32>
    %290 = vector.shape_cast %289 : vector<32xf32> to vector<1x1x32xf32>
    %291 = vector.broadcast %290 : vector<1x1x32xf32> to vector<8x16x32xf32>
    %292 = arith.mulf %287, %291 : vector<8x16x32xf32>
    %293 = arith.addf %286, %292 : vector<8x16x32xf32>
    %294 = vector.extract_strided_slice %258 {offsets = [5, 0, 0], sizes = [8, 16, 32], strides = [1, 1, 1]} : vector<14x16x32xf32> to vector<8x16x32xf32>
    %295 = vector.extract_strided_slice %5 {offsets = [5, 5, 0], sizes = [1, 1, 32], strides = [1, 1, 1]} : vector<7x7x32xf32> to vector<1x1x32xf32>
    %296 = vector.shape_cast %295 : vector<1x1x32xf32> to vector<32xf32>
    %297 = vector.shape_cast %296 : vector<32xf32> to vector<1x1x32xf32>
    %298 = vector.broadcast %297 : vector<1x1x32xf32> to vector<8x16x32xf32>
    %299 = arith.mulf %294, %298 : vector<8x16x32xf32>
    %300 = arith.addf %293, %299 : vector<8x16x32xf32>
    %301 = vector.extract_strided_slice %258 {offsets = [6, 0, 0], sizes = [8, 16, 32], strides = [1, 1, 1]} : vector<14x16x32xf32> to vector<8x16x32xf32>
    %302 = vector.extract_strided_slice %5 {offsets = [6, 5, 0], sizes = [1, 1, 32], strides = [1, 1, 1]} : vector<7x7x32xf32> to vector<1x1x32xf32>
    %303 = vector.shape_cast %302 : vector<1x1x32xf32> to vector<32xf32>
    %304 = vector.shape_cast %303 : vector<32xf32> to vector<1x1x32xf32>
    %305 = vector.broadcast %304 : vector<1x1x32xf32> to vector<8x16x32xf32>
    %306 = arith.mulf %301, %305 : vector<8x16x32xf32>
    %307 = arith.addf %300, %306 : vector<8x16x32xf32>
    %308 = vector.extract_strided_slice %4 {offsets = [0, 6, 0], sizes = [14, 16, 32], strides = [1, 1, 1]} : vector<14x22x32xf32> to vector<14x16x32xf32>
    %309 = vector.extract_strided_slice %308 {offsets = [0, 0, 0], sizes = [8, 16, 32], strides = [1, 1, 1]} : vector<14x16x32xf32> to vector<8x16x32xf32>
    %310 = vector.extract_strided_slice %5 {offsets = [0, 6, 0], sizes = [1, 1, 32], strides = [1, 1, 1]} : vector<7x7x32xf32> to vector<1x1x32xf32>
    %311 = vector.shape_cast %310 : vector<1x1x32xf32> to vector<32xf32>
    %312 = vector.shape_cast %311 : vector<32xf32> to vector<1x1x32xf32>
    %313 = vector.broadcast %312 : vector<1x1x32xf32> to vector<8x16x32xf32>
    %314 = arith.mulf %309, %313 : vector<8x16x32xf32>
    %315 = arith.addf %307, %314 : vector<8x16x32xf32>
    %316 = vector.extract_strided_slice %308 {offsets = [1, 0, 0], sizes = [8, 16, 32], strides = [1, 1, 1]} : vector<14x16x32xf32> to vector<8x16x32xf32>
    %317 = vector.extract_strided_slice %5 {offsets = [1, 6, 0], sizes = [1, 1, 32], strides = [1, 1, 1]} : vector<7x7x32xf32> to vector<1x1x32xf32>
    %318 = vector.shape_cast %317 : vector<1x1x32xf32> to vector<32xf32>
    %319 = vector.shape_cast %318 : vector<32xf32> to vector<1x1x32xf32>
    %320 = vector.broadcast %319 : vector<1x1x32xf32> to vector<8x16x32xf32>
    %321 = arith.mulf %316, %320 : vector<8x16x32xf32>
    %322 = arith.addf %315, %321 : vector<8x16x32xf32>
    %323 = vector.extract_strided_slice %308 {offsets = [2, 0, 0], sizes = [8, 16, 32], strides = [1, 1, 1]} : vector<14x16x32xf32> to vector<8x16x32xf32>
    %324 = vector.extract_strided_slice %5 {offsets = [2, 6, 0], sizes = [1, 1, 32], strides = [1, 1, 1]} : vector<7x7x32xf32> to vector<1x1x32xf32>
    %325 = vector.shape_cast %324 : vector<1x1x32xf32> to vector<32xf32>
    %326 = vector.shape_cast %325 : vector<32xf32> to vector<1x1x32xf32>
    %327 = vector.broadcast %326 : vector<1x1x32xf32> to vector<8x16x32xf32>
    %328 = arith.mulf %323, %327 : vector<8x16x32xf32>
    %329 = arith.addf %322, %328 : vector<8x16x32xf32>
    %330 = vector.extract_strided_slice %308 {offsets = [3, 0, 0], sizes = [8, 16, 32], strides = [1, 1, 1]} : vector<14x16x32xf32> to vector<8x16x32xf32>
    %331 = vector.extract_strided_slice %5 {offsets = [3, 6, 0], sizes = [1, 1, 32], strides = [1, 1, 1]} : vector<7x7x32xf32> to vector<1x1x32xf32>
    %332 = vector.shape_cast %331 : vector<1x1x32xf32> to vector<32xf32>
    %333 = vector.shape_cast %332 : vector<32xf32> to vector<1x1x32xf32>
    %334 = vector.broadcast %333 : vector<1x1x32xf32> to vector<8x16x32xf32>
    %335 = arith.mulf %330, %334 : vector<8x16x32xf32>
    %336 = arith.addf %329, %335 : vector<8x16x32xf32>
    %337 = vector.extract_strided_slice %308 {offsets = [4, 0, 0], sizes = [8, 16, 32], strides = [1, 1, 1]} : vector<14x16x32xf32> to vector<8x16x32xf32>
    %338 = vector.extract_strided_slice %5 {offsets = [4, 6, 0], sizes = [1, 1, 32], strides = [1, 1, 1]} : vector<7x7x32xf32> to vector<1x1x32xf32>
    %339 = vector.shape_cast %338 : vector<1x1x32xf32> to vector<32xf32>
    %340 = vector.shape_cast %339 : vector<32xf32> to vector<1x1x32xf32>
    %341 = vector.broadcast %340 : vector<1x1x32xf32> to vector<8x16x32xf32>
    %342 = arith.mulf %337, %341 : vector<8x16x32xf32>
    %343 = arith.addf %336, %342 : vector<8x16x32xf32>
    %344 = vector.extract_strided_slice %308 {offsets = [5, 0, 0], sizes = [8, 16, 32], strides = [1, 1, 1]} : vector<14x16x32xf32> to vector<8x16x32xf32>
    %345 = vector.extract_strided_slice %5 {offsets = [5, 6, 0], sizes = [1, 1, 32], strides = [1, 1, 1]} : vector<7x7x32xf32> to vector<1x1x32xf32>
    %346 = vector.shape_cast %345 : vector<1x1x32xf32> to vector<32xf32>
    %347 = vector.shape_cast %346 : vector<32xf32> to vector<1x1x32xf32>
    %348 = vector.broadcast %347 : vector<1x1x32xf32> to vector<8x16x32xf32>
    %349 = arith.mulf %344, %348 : vector<8x16x32xf32>
    %350 = arith.addf %343, %349 : vector<8x16x32xf32>
    %351 = vector.extract_strided_slice %308 {offsets = [6, 0, 0], sizes = [8, 16, 32], strides = [1, 1, 1]} : vector<14x16x32xf32> to vector<8x16x32xf32>
    %352 = vector.extract_strided_slice %5 {offsets = [6, 6, 0], sizes = [1, 1, 32], strides = [1, 1, 1]} : vector<7x7x32xf32> to vector<1x1x32xf32>
    %353 = vector.shape_cast %352 : vector<1x1x32xf32> to vector<32xf32>
    %354 = vector.shape_cast %353 : vector<32xf32> to vector<1x1x32xf32>
    %355 = vector.broadcast %354 : vector<1x1x32xf32> to vector<8x16x32xf32>
    %356 = arith.mulf %351, %355 : vector<8x16x32xf32>
    %357 = arith.addf %350, %356 : vector<8x16x32xf32>
    %c0_5 = arith.constant 0 : index
    %c0_6 = arith.constant 0 : index
    %358 = vector.load %arg4[%c0_5, %c0_6] : memref<1x32xf32, #tpu.memory_space<vmem>>, vector<1x32xf32>
    %359 = vector.shape_cast %358 : vector<1x32xf32> to vector<32xf32>
    %360 = vector.shape_cast %359 : vector<32xf32> to vector<1x1x32xf32>
    %361 = vector.broadcast %360 : vector<1x1x32xf32> to vector<8x16x32xf32>
    %362 = arith.addf %357, %361 : vector<8x16x32xf32>
    %cst_7 = arith.constant dense<0.000000e+00> : vector<8x16xf32>
    %363 = vector.multi_reduction <add>, %362, %cst_7 [2] : vector<8x16x32xf32> to vector<8x16xf32>
    %364 = vector.shape_cast %363 : vector<8x16xf32> to vector<8x16x1xf32>
    %cst_8 = arith.constant 3.200000e+01 : f32
    %365 = vector.broadcast %cst_8 : f32 to vector<8x16x1xf32>
    %366 = arith.divf %364, %365 : vector<8x16x1xf32>
    %367 = vector.broadcast %366 : vector<8x16x1xf32> to vector<8x16x32xf32>
    %368 = arith.subf %362, %367 : vector<8x16x32xf32>
    %369 = arith.mulf %368, %368 : vector<8x16x32xf32>
    %cst_9 = arith.constant dense<0.000000e+00> : vector<8x16xf32>
    %370 = vector.multi_reduction <add>, %369, %cst_9 [2] : vector<8x16x32xf32> to vector<8x16xf32>
    %371 = vector.shape_cast %370 : vector<8x16xf32> to vector<8x16x1xf32>
    %cst_10 = arith.constant 3.200000e+01 : f32
    %372 = vector.broadcast %cst_10 : f32 to vector<8x16x1xf32>
    %373 = arith.divf %371, %372 : vector<8x16x1xf32>
    %cst_11 = arith.constant 9.99999997E-7 : f32
    %374 = vector.broadcast %cst_11 : f32 to vector<8x16x1xf32>
    %375 = arith.addf %373, %374 : vector<8x16x1xf32>
    %376 = math.rsqrt %375 : vector<8x16x1xf32>
    %377 = vector.broadcast %376 : vector<8x16x1xf32> to vector<8x16x32xf32>
    %378 = arith.mulf %368, %377 : vector<8x16x32xf32>
    %379 = vector.shape_cast %378 : vector<8x16x32xf32> to vector<128x32xf32>
    %c0_12 = arith.constant 0 : index
    %c0_13 = arith.constant 0 : index
    %380 = vector.load %arg5[%c0_12, %c0_13] : memref<32x128xf32, #tpu.memory_space<vmem>>, vector<32x128xf32>
    %cst_14 = arith.constant dense<0.000000e+00> : vector<128x128xf32>
    %381 = tpu.matmul %379, %380, %cst_14 {dimension_numbers = #tpu.dot_dimension_numbers<[1], [0], [0], [1], [0, 0, 1, 1], [], []>} : vector<128x32xf32>, vector<32x128xf32>, vector<128x128xf32> -> vector<128x128xf32>
    %c0_15 = arith.constant 0 : index
    %c0_16 = arith.constant 0 : index
    %382 = vector.load %arg6[%c0_15, %c0_16] : memref<1x128xf32, #tpu.memory_space<vmem>>, vector<1x128xf32>
    %383 = vector.shape_cast %382 : vector<1x128xf32> to vector<128xf32>
    %384 = vector.shape_cast %383 : vector<128xf32> to vector<1x128xf32>
    %385 = vector.broadcast %384 : vector<1x128xf32> to vector<128x128xf32>
    %386 = arith.addf %381, %385 : vector<128x128xf32>
    %cst_17 = arith.constant 5.000000e-01 : f32
    %387 = vector.broadcast %cst_17 : f32 to vector<128x128xf32>
    %388 = arith.mulf %387, %386 : vector<128x128xf32>
    %cst_18 = arith.constant 0.707106769 : f32
    %389 = vector.broadcast %cst_18 : f32 to vector<128x128xf32>
    %390 = arith.mulf %386, %389 : vector<128x128xf32>
    %391 = math.absf %390 : vector<128x128xf32>
    %cst_19 = arith.constant 0.327591091 : f32
    %392 = vector.broadcast %cst_19 : f32 to vector<128x128xf32>
    %393 = arith.mulf %392, %391 : vector<128x128xf32>
    %cst_20 = arith.constant 1.000000e+00 : f32
    %394 = vector.broadcast %cst_20 : f32 to vector<128x128xf32>
    %395 = arith.addf %394, %393 : vector<128x128xf32>
    %cst_21 = arith.constant 1.000000e+00 : f32
    %396 = vector.broadcast %cst_21 : f32 to vector<128x128xf32>
    %397 = arith.divf %396, %395 : vector<128x128xf32>
    %cst_22 = arith.constant 1.06140542 : f32
    %398 = vector.broadcast %cst_22 : f32 to vector<128x128xf32>
    %399 = arith.mulf %398, %397 : vector<128x128xf32>
    %cst_23 = arith.constant -1.45315206 : f32
    %400 = vector.broadcast %cst_23 : f32 to vector<128x128xf32>
    %401 = arith.addf %399, %400 : vector<128x128xf32>
    %402 = arith.mulf %401, %397 : vector<128x128xf32>
    %cst_24 = arith.constant 1.42141378 : f32
    %403 = vector.broadcast %cst_24 : f32 to vector<128x128xf32>
    %404 = arith.addf %402, %403 : vector<128x128xf32>
    %405 = arith.mulf %404, %397 : vector<128x128xf32>
    %cst_25 = arith.constant -0.284496725 : f32
    %406 = vector.broadcast %cst_25 : f32 to vector<128x128xf32>
    %407 = arith.addf %405, %406 : vector<128x128xf32>
    %408 = arith.mulf %407, %397 : vector<128x128xf32>
    %cst_26 = arith.constant 0.254829586 : f32
    %409 = vector.broadcast %cst_26 : f32 to vector<128x128xf32>
    %410 = arith.addf %408, %409 : vector<128x128xf32>
    %411 = arith.mulf %410, %397 : vector<128x128xf32>
    %cst_27 = arith.constant 0.000000e+00 : f32
    %412 = vector.broadcast %cst_27 : f32 to vector<128x128xf32>
    %413 = arith.subf %412, %391 : vector<128x128xf32>
    %414 = arith.mulf %413, %391 : vector<128x128xf32>
    %415 = math.exp %414 : vector<128x128xf32>
    %416 = arith.mulf %411, %415 : vector<128x128xf32>
    %cst_28 = arith.constant 1.000000e+00 : f32
    %417 = vector.broadcast %cst_28 : f32 to vector<128x128xf32>
    %418 = arith.subf %417, %416 : vector<128x128xf32>
    %cst_29 = arith.constant 0.000000e+00 : f32
    %419 = vector.broadcast %cst_29 : f32 to vector<128x128xf32>
    %420 = arith.cmpf oge, %390, %419 : vector<128x128xf32>
    %cst_30 = arith.constant 0.000000e+00 : f32
    %421 = vector.broadcast %cst_30 : f32 to vector<128x128xf32>
    %422 = arith.subf %421, %418 : vector<128x128xf32>
    %423 = arith.select %420, %418, %422 : vector<128x128xi1>, vector<128x128xf32>
    %cst_31 = arith.constant 1.000000e+00 : f32
    %424 = vector.broadcast %cst_31 : f32 to vector<128x128xf32>
    %425 = arith.addf %424, %423 : vector<128x128xf32>
    %426 = arith.mulf %388, %425 : vector<128x128xf32>
    %c0_32 = arith.constant 0 : index
    %c0_33 = arith.constant 0 : index
    %427 = vector.load %arg7[%c0_32, %c0_33] : memref<128x32xf32, #tpu.memory_space<vmem>>, vector<128x32xf32>
    %cst_34 = arith.constant dense<0.000000e+00> : vector<128x32xf32>
    %428 = tpu.matmul %426, %427, %cst_34 {dimension_numbers = #tpu.dot_dimension_numbers<[1], [0], [0], [1], [0, 0, 1, 1], [], []>} : vector<128x128xf32>, vector<128x32xf32>, vector<128x32xf32> -> vector<128x32xf32>
    %c0_35 = arith.constant 0 : index
    %c0_36 = arith.constant 0 : index
    %429 = vector.load %arg8[%c0_35, %c0_36] : memref<1x32xf32, #tpu.memory_space<vmem>>, vector<1x32xf32>
    %430 = vector.shape_cast %429 : vector<1x32xf32> to vector<32xf32>
    %431 = vector.shape_cast %430 : vector<32xf32> to vector<1x32xf32>
    %432 = vector.broadcast %431 : vector<1x32xf32> to vector<128x32xf32>
    %433 = arith.addf %428, %432 : vector<128x32xf32>
    %434 = vector.shape_cast %433 : vector<128x32xf32> to vector<8x16x32xf32>
    %435 = arith.addf %158, %434 : vector<8x16x32xf32>
    %c0_37 = arith.constant 0 : index
    %c0_38 = arith.constant 0 : index
    %c0_39 = arith.constant 0 : index
    %c0_40 = arith.constant 0 : index
    %436 = vector.load %arg9[%c0_37, %c0_38, %c0_39, %c0_40] : memref<1x8x16x32xf32, #tpu.memory_space<vmem>>, vector<1x8x16x32xf32>
    %437 = vector.shape_cast %436 : vector<1x8x16x32xf32> to vector<8x16x32xf32>
    %438 = vector.shape_cast %435 : vector<8x16x32xf32> to vector<1x8x16x32xf32>
    tpu.vector_store %arg9[%c0_37, %c0_38, %c0_39, %c0_40], %438 {strides = array<i32>} : memref<1x8x16x32xf32, #tpu.memory_space<vmem>>, vector<1x8x16x32xf32>,
    return
  }
  func.func @transform_0(%arg0: i32, %arg1: i32) -> (i32, i32, i32, i32) {
    %c0_i32 = arith.constant 0 : i32
    %c0_i32_0 = arith.constant 0 : i32
    %c0_i32_1 = arith.constant 0 : i32
    %c0_i32_2 = arith.constant 0 : i32
    return %arg0, %c0_i32, %c0_i32_0, %c0_i32_1 : i32, i32, i32, i32
  }
  func.func @transform_1(%arg0: i32, %arg1: i32) -> (i32, i32, i32) {
    %c0_i32 = arith.constant 0 : i32
    %c0_i32_0 = arith.constant 0 : i32
    %c0_i32_1 = arith.constant 0 : i32
    %c0_i32_2 = arith.constant 0 : i32
    return %c0_i32, %c0_i32_0, %c0_i32_1 : i32, i32, i32
  }
  func.func @transform_2(%arg0: i32, %arg1: i32) -> (i32, i32) {
    %c0_i32 = arith.constant 0 : i32
    %c0_i32_0 = arith.constant 0 : i32
    %c0_i32_1 = arith.constant 0 : i32
    return %c0_i32, %c0_i32_0 : i32, i32
  }
  func.func @transform_3(%arg0: i32, %arg1: i32) -> (i32, i32) {
    %c0_i32 = arith.constant 0 : i32
    %c0_i32_0 = arith.constant 0 : i32
    %c0_i32_1 = arith.constant 0 : i32
    return %c0_i32, %c0_i32_0 : i32, i32
  }
  func.func @transform_4(%arg0: i32, %arg1: i32) -> (i32, i32) {
    %c0_i32 = arith.constant 0 : i32
    %c0_i32_0 = arith.constant 0 : i32
    %c0_i32_1 = arith.constant 0 : i32
    return %c0_i32, %c0_i32_0 : i32, i32
  }
  func.func @transform_5(%arg0: i32, %arg1: i32) -> (i32, i32) {
    %c0_i32 = arith.constant 0 : i32
    %c0_i32_0 = arith.constant 0 : i32
    %c0_i32_1 = arith.constant 0 : i32
    return %c0_i32, %c0_i32_0 : i32, i32
  }
  func.func @transform_6(%arg0: i32, %arg1: i32) -> (i32, i32) {
    %c0_i32 = arith.constant 0 : i32
    %c0_i32_0 = arith.constant 0 : i32
    %c0_i32_1 = arith.constant 0 : i32
    return %c0_i32, %c0_i32_0 : i32, i32
  }
  func.func @transform_7(%arg0: i32, %arg1: i32) -> (i32, i32, i32, i32) {
    %c0_i32 = arith.constant 0 : i32
    %c0_i32_0 = arith.constant 0 : i32
    %c0_i32_1 = arith.constant 0 : i32
    return %arg0, %arg1, %c0_i32, %c0_i32_0 : i32, i32, i32, i32
  }
}

</mosaic_0001>

<llo_original>
// kernel: tpu_custom_call.1
$region0: #{tpu_custom_call.1}
  #allocation0 [shape = 'u32[]', space=smem, size = 0x4, offset = 0x4, fixed_abs, tag = 'smem constant byte address 0x4 - core index']
  #allocation1 [shape = 'u32[144,128]{1,0:T(1,128)}', space=vmem, size = 0x12000, scoped, tag = 'internal scratch']
  %s0 = inlined_call_operand.vmem [shape: f32[2,22,22,32], index: 0, kind: input, shape index: {}]
  %s1 = inlined_call_operand.vmem [shape: f32[7,7,32], index: 1, kind: input, shape index: {}]
  %s2 = inlined_call_operand.vmem [shape: f32[1,32], index: 2, kind: input, shape index: {}]
  %s3 = inlined_call_operand.vmem [shape: f32[32,128], index: 3, kind: input, shape index: {}]
  %s4 = inlined_call_operand.vmem [shape: f32[1,128], index: 4, kind: input, shape index: {}]
  %s5 = inlined_call_operand.vmem [shape: f32[128,32], index: 5, kind: input, shape index: {}]
  %s6 = inlined_call_operand.vmem [shape: f32[1,32], index: 6, kind: input, shape index: {}]
  %s7 = inlined_call_operand.hbm [shape: f32[2,16,16,32], index: 7, kind: output, shape index: {}]
  %s8 = sld [smem:[#allocation0]]
  $region61: #{tpu_custom_call.1} parent=0
    _
  %s10 = ssub.s32 1, %s8
  %s11 = scalar_select 0, %s10, %s8
  $region1: #{tpu_custom_call.1} parent=0
    #allocation2 [shape = 'u8[131072]{0}', space=vmem, size = 0x20000, scoped, tag = 'output window, operand 0']
    #allocation3 [shape = 's32[2]{0}', space=sflag, size = 0x8, scoped, tag = 'scoped memory for tpu_custom_call.1']
    %12 = vsyncpa [#allocation3], 0
    %s13 = scalar_lea.sflag [#allocation3], 1
    %14 = vsyncpa %s13, 0
    loop: start=0, step=1, limit=6
    $region2: #{tpu_custom_call.1} parent=1 // loop_pre_header
      _
    $region3: #{tpu_custom_call.1} parent=1 // loop_header
      %s16 = sphi 0, %s20
      %p17 = scmp.ge.s32.totalorder %s16, 6
      %s23 = sphi 0, %s35
      %s24 = sphi 0, %s31
      %s25 = sphi 0, %s23
      %s26 = sphi 0, %s24
      %s27 = sphi 0, %s25
      %s28 = sphi 0, %s26
      %s38 = sphi 0, %s40
      %s41 = sphi 0, %s38
      %s42 = sphi 0, %s41
      %s58 = sphi 0, %s42
      %s62 = sphi 0, %s62
      %s64 = sphi 0, %s62
      %s65 = sphi 0, %s64
      %s79 = sphi 0, %s65
      %s83 = sphi 0, %s83
      %s85 = sphi 0, %s83
      %s86 = sphi 0, %s85
      %s100 = sphi 0, %s86
      %s104 = sphi 0, %s104
      %s106 = sphi 0, %s104
      %s107 = sphi 0, %s106
      %s121 = sphi 0, %s107
      %s125 = sphi 0, %s125
      %s127 = sphi 0, %s125
      %s128 = sphi 0, %s127
      %s142 = sphi 0, %s128
      %s146 = sphi 0, %s146
      %s148 = sphi 0, %s146
      %s149 = sphi 0, %s148
      %s163 = sphi 0, %s149
      %s167 = sphi 0, %s167
      %s169 = sphi 0, %s167
      %s170 = sphi 0, %s169
      %s184 = sphi 0, %s170
      %s192 = sphi 0, %s194
      %s195 = sphi 0, %s192
      %s196 = sphi 0, %s195
      %s212 = sphi 0, %s196
    $region4: #{tpu_custom_call.1} parent=1 // loop_header_branch
      %19 = sbr.rel (%p17) target = $region8
    $region5: #{tpu_custom_call.1} parent=1 // loop_body
      %s21 = ssub.s32 %s16, 1
      %s22 = ssub.s32 %s16, 2
      %s29 = sadd.s32 1, %s24
      %p30 = scmp.ge.s32.totalorder %s29, 2
      %s31 = scalar_select %p30, 0, %s29
      %s32 = sadd.s32 1, %s23
      %s33 = scalar_select %p30, %s32, %s23
      %p34 = scmp.ge.s32.totalorder %s33, 2
      %s35 = scalar_select %p34, 0, %s33
      %s36 = ssub.s32 %s23, %s35
      %p37 = scmp.eq.s32.totalorder %s36, 0
      %s39 = sadd.s32 %s38, 1
      %s40 = scalar_select %p37, %s38, %s39
      %p43 = pneg %p37
      %p44 = scmp.eq.s32.totalorder %s16, 3
      %p45 = por %p43, %p44
      %p46 = scmp.ne.s32.totalorder %s38, %s41
      %p47 = scmp.eq.s32.totalorder %s16, 0
      %p48 = por %p46, %p47
      %p49 = scmp.ne.s32.totalorder %s38, %s41
      %p50 = scmp.eq.s32.totalorder %s21, 3
      %p51 = por %p49, %p50
      %p52 = scmp.ne.s32.totalorder %s41, %s42
      %p53 = scmp.eq.s32.totalorder %s21, 0
      %p54 = por %p52, %p53
      %p55 = scmp.ne.s32.totalorder %s41, %s42
      %p56 = scmp.eq.s32.totalorder %s22, 3
      %p57 = por %p55, %p56
      %p59 = scmp.ne.s32.totalorder %s42, %s58
      %p60 = scmp.eq.s32.totalorder %s22, 0
      %p61 = por %p59, %p60
      %s63 = sadd.s32 %s62, 1
      %p66 = scmp.eq.s32.totalorder %s16, 3
      %p67 = scmp.ne.s32.totalorder %s62, %s64
      %p68 = scmp.eq.s32.totalorder %s16, 0
      %p69 = por %p67, %p68
      %p70 = scmp.ne.s32.totalorder %s62, %s64
      %p71 = scmp.eq.s32.totalorder %s21, 3
      %p72 = por %p70, %p71
      %p73 = scmp.ne.s32.totalorder %s64, %s65
      %p74 = scmp.eq.s32.totalorder %s21, 0
      %p75 = por %p73, %p74
      %p76 = scmp.ne.s32.totalorder %s64, %s65
      %p77 = scmp.eq.s32.totalorder %s22, 3
      %p78 = por %p76, %p77
      %p80 = scmp.ne.s32.totalorder %s65, %s79
      %p81 = scmp.eq.s32.totalorder %s22, 0
      %p82 = por %p80, %p81
      %s84 = sadd.s32 %s83, 1
      %p87 = scmp.eq.s32.totalorder %s16, 3
      %p88 = scmp.ne.s32.totalorder %s83, %s85
      %p89 = scmp.eq.s32.totalorder %s16, 0
      %p90 = por %p88, %p89
      %p91 = scmp.ne.s32.totalorder %s83, %s85
      %p92 = scmp.eq.s32.totalorder %s21, 3
      %p93 = por %p91, %p92
      %p94 = scmp.ne.s32.totalorder %s85, %s86
      %p95 = scmp.eq.s32.totalorder %s21, 0
      %p96 = por %p94, %p95
      %p97 = scmp.ne.s32.totalorder %s85, %s86
      %p98 = scmp.eq.s32.totalorder %s22, 3
      %p99 = por %p97, %p98
      %p101 = scmp.ne.s32.totalorder %s86, %s100
      %p102 = scmp.eq.s32.totalorder %s22, 0
      %p103 = por %p101, %p102
      %s105 = sadd.s32 %s104, 1
      %p108 = scmp.eq.s32.totalorder %s16, 3
      %p109 = scmp.ne.s32.totalorder %s104, %s106
      %p110 = scmp.eq.s32.totalorder %s16, 0
      %p111 = por %p109, %p110
      %p112 = scmp.ne.s32.totalorder %s104, %s106
      %p113 = scmp.eq.s32.totalorder %s21, 3
      %p114 = por %p112, %p113
      %p115 = scmp.ne.s32.totalorder %s106, %s107
      %p116 = scmp.eq.s32.totalorder %s21, 0
      %p117 = por %p115, %p116
      %p118 = scmp.ne.s32.totalorder %s106, %s107
      %p119 = scmp.eq.s32.totalorder %s22, 3
      %p120 = por %p118, %p119
      %p122 = scmp.ne.s32.totalorder %s107, %s121
      %p123 = scmp.eq.s32.totalorder %s22, 0
      %p124 = por %p122, %p123
      %s126 = sadd.s32 %s125, 1
      %p129 = scmp.eq.s32.totalorder %s16, 3
      %p130 = scmp.ne.s32.totalorder %s125, %s127
      %p131 = scmp.eq.s32.totalorder %s16, 0
      %p132 = por %p130, %p131
      %p133 = scmp.ne.s32.totalorder %s125, %s127
      %p134 = scmp.eq.s32.totalorder %s21, 3
      %p135 = por %p133, %p134
      %p136 = scmp.ne.s32.totalorder %s127, %s128
      %p137 = scmp.eq.s32.totalorder %s21, 0
      %p138 = por %p136, %p137
      %p139 = scmp.ne.s32.totalorder %s127, %s128
      %p140 = scmp.eq.s32.totalorder %s22, 3
      %p141 = por %p139, %p140
      %p143 = scmp.ne.s32.totalorder %s128, %s142
      %p144 = scmp.eq.s32.totalorder %s22, 0
      %p145 = por %p143, %p144
      %s147 = sadd.s32 %s146, 1
      %p150 = scmp.eq.s32.totalorder %s16, 3
      %p151 = scmp.ne.s32.totalorder %s146, %s148
      %p152 = scmp.eq.s32.totalorder %s16, 0
      %p153 = por %p151, %p152
      %p154 = scmp.ne.s32.totalorder %s146, %s148
      %p155 = scmp.eq.s32.totalorder %s21, 3
      %p156 = por %p154, %p155
      %p157 = scmp.ne.s32.totalorder %s148, %s149
      %p158 = scmp.eq.s32.totalorder %s21, 0
      %p159 = por %p157, %p158
      %p160 = scmp.ne.s32.totalorder %s148, %s149
      %p161 = scmp.eq.s32.totalorder %s22, 3
      %p162 = por %p160, %p161
      %p164 = scmp.ne.s32.totalorder %s149, %s163
      %p165 = scmp.eq.s32.totalorder %s22, 0
      %p166 = por %p164, %p165
      %s168 = sadd.s32 %s167, 1
      %p171 = scmp.eq.s32.totalorder %s16, 3
      %p172 = scmp.ne.s32.totalorder %s167, %s169
      %p173 = scmp.eq.s32.totalorder %s16, 0
      %p174 = por %p172, %p173
      %p175 = scmp.ne.s32.totalorder %s167, %s169
      %p176 = scmp.eq.s32.totalorder %s21, 3
      %p177 = por %p175, %p176
      %p178 = scmp.ne.s32.totalorder %s169, %s170
      %p179 = scmp.eq.s32.totalorder %s21, 0
      %p180 = por %p178, %p179
      %p181 = scmp.ne.s32.totalorder %s169, %s170
      %p182 = scmp.eq.s32.totalorder %s22, 3
      %p183 = por %p181, %p182
      %p185 = scmp.ne.s32.totalorder %s170, %s184
      %p186 = scmp.eq.s32.totalorder %s22, 0
      %p187 = por %p185, %p186
      %s188 = ssub.s32 %s23, %s35
      %s189 = ssub.s32 %s24, %s31
      %s190 = sor.u32 %s188, %s189
      %p191 = scmp.eq.s32.totalorder %s190, 0
      %s193 = sadd.s32 %s192, 1
      %s194 = scalar_select %p191, %s192, %s193
      %p197 = pneg %p191
      %p198 = scmp.eq.s32.totalorder %s16, 3
      %p199 = por %p197, %p198
      %p200 = scmp.ne.s32.totalorder %s192, %s195
      %p201 = scmp.eq.s32.totalorder %s16, 0
      %p202 = por %p200, %p201
      %p203 = scmp.ne.s32.totalorder %s192, %s195
      %p204 = scmp.eq.s32.totalorder %s21, 3
      %p205 = por %p203, %p204
      %p206 = scmp.ne.s32.totalorder %s195, %s196
      %p207 = scmp.eq.s32.totalorder %s21, 0
      %p208 = por %p206, %p207
      %p209 = scmp.ne.s32.totalorder %s195, %s196
      %p210 = scmp.eq.s32.totalorder %s22, 3
      %p211 = por %p209, %p210
      %p213 = scmp.ne.s32.totalorder %s196, %s212
      %p214 = scmp.eq.s32.totalorder %s22, 0
      %p215 = por %p213, %p214
      %p216 = scmp.le.s32.totalorder 1, %s16
      %p217 = scmp.lt.s32.totalorder %s16, 5
      %p218 = pnand %p216, %p217
      %p219 = pneg %p218
      // Predicated region
      $region9: #{tpu_custom_call.1} parent=5 // pred_check
        _
      $region10: #{tpu_custom_call.1} parent=5 // pred_check_branch
        %221 = sbr.rel (%p218) target = $region12
      $region11: #{tpu_custom_call.1} parent=5 // pred_region
        %s222 = ssub.s32 %s16, 1
        // Predicated region
        $region13: #{tpu_custom_call.1} parent=11 // pred_check
          %p223 = pneg %p75
        $region14: #{tpu_custom_call.1} parent=11 // pred_check_branch
          %225 = sbr.rel (%p223) target = $region16
        $region15: #{tpu_custom_call.1} parent=11 // pred_region
          _
        $region16: #{tpu_custom_call.1} parent=11 // pred_fallthru
          _
        // Predicated region
        $region17: #{tpu_custom_call.1} parent=11 // pred_check
          %p226 = pneg %p96
        $region18: #{tpu_custom_call.1} parent=11 // pred_check_branch
          %228 = sbr.rel (%p226) target = $region20
        $region19: #{tpu_custom_call.1} parent=11 // pred_region
          _
        $region20: #{tpu_custom_call.1} parent=11 // pred_fallthru
          _
        // Predicated region
        $region21: #{tpu_custom_call.1} parent=11 // pred_check
          %p229 = pneg %p117
        $region22: #{tpu_custom_call.1} parent=11 // pred_check_branch
          %231 = sbr.rel (%p229) target = $region24
        $region23: #{tpu_custom_call.1} parent=11 // pred_region
          _
        $region24: #{tpu_custom_call.1} parent=11 // pred_fallthru
          _
        // Predicated region
        $region25: #{tpu_custom_call.1} parent=11 // pred_check
          %p232 = pneg %p138
        $region26: #{tpu_custom_call.1} parent=11 // pred_check_branch
          %234 = sbr.rel (%p232) target = $region28
        $region27: #{tpu_custom_call.1} parent=11 // pred_region
          _
        $region28: #{tpu_custom_call.1} parent=11 // pred_fallthru
          _
        // Predicated region
        $region29: #{tpu_custom_call.1} parent=11 // pred_check
          %p235 = pneg %p159
        $region30: #{tpu_custom_call.1} parent=11 // pred_check_branch
          %237 = sbr.rel (%p235) target = $region32
        $region31: #{tpu_custom_call.1} parent=11 // pred_region
          _
        $region32: #{tpu_custom_call.1} parent=11 // pred_fallthru
          _
        // Predicated region
        $region33: #{tpu_custom_call.1} parent=11 // pred_check
          %p238 = pneg %p180
        $region34: #{tpu_custom_call.1} parent=11 // pred_check_branch
          %240 = sbr.rel (%p238) target = $region36
        $region35: #{tpu_custom_call.1} parent=11 // pred_region
          _
        $region36: #{tpu_custom_call.1} parent=11 // pred_fallthru
          _
      $region12: #{tpu_custom_call.1} parent=5 // pred_fallthru
        _
      %p241 = scmp.lt.s32.totalorder %s16, 4
      // Predicated region
      $region37: #{tpu_custom_call.1} parent=5 // pred_check
        %p242 = pneg %p241
      $region38: #{tpu_custom_call.1} parent=5 // pred_check_branch
        %244 = sbr.rel (%p242) target = $region40
      $region39: #{tpu_custom_call.1} parent=5 // pred_region
        // Predicated region
        $region41: #{tpu_custom_call.1} parent=39 // pred_check
          %p245 = pneg %p48
        $region42: #{tpu_custom_call.1} parent=39 // pred_check_branch
          %247 = sbr.rel (%p245) target = $region44
        $region43: #{tpu_custom_call.1} parent=39 // pred_region
          %p248 = scmp.lt.s32.totalorder %s23, 1
          %s249 = scalar_select %p248, %s23, 1
          %s250 = smul.addr %s249, 66
          %s251 = smul.addr %s250, 8
          %s252 = scalar_lea.vmem %s0, %s251
        $region44: #{tpu_custom_call.1} parent=39 // pred_fallthru
          _
      $region40: #{tpu_custom_call.1} parent=5 // pred_fallthru
        _
      %p253 = scmp.le.s32.totalorder 1, %s16
      %p254 = scmp.lt.s32.totalorder %s16, 5
      %p255 = pnand %p253, %p254
      %p256 = pneg %p255
      // Predicated region
      $region45: #{tpu_custom_call.1} parent=5 // pred_check
        _
      $region46: #{tpu_custom_call.1} parent=5 // pred_check_branch
        %258 = sbr.rel (%p255) target = $region48
      $region47: #{tpu_custom_call.1} parent=5 // pred_region
        %s259 = ssub.s32 %s16, 1
        %p260 = scmp.lt.s32.totalorder %s25, 1
        %s261 = scalar_select %p260, %s25, 1
        %s262 = smul.addr %s261, 66
        %s263 = smul.addr %s262, 8
        %s264 = scalar_lea.vmem %s0, %s263
        %p265 = pneg %p54
        %p266 = pneg %p51
        %p267 = pneg %p75
        %p268 = pneg %p72
        %p269 = pneg %p96
        %p270 = pneg %p93
        %p271 = pneg %p117
        %p272 = pneg %p114
        %p273 = pneg %p138
        %p274 = pneg %p135
        %p275 = pneg %p159
        %p276 = pneg %p156
        %p277 = pneg %p180
        %p278 = pneg %p177
        %p279 = pneg %p208
        %p280 = pneg %p205
        %s281 = sand.u32 %s195, 1
        %s282 = scalar_lea.sflag [#allocation3], %s281
        %s283 = sand.u32 %s195, 1
        %s284 = smul.addr %s283, 128
        %s285 = scalar_lea.vmem [#allocation2], %s284
        %p286 = scmp.lt.s32.totalorder %s25, 1
        %s287 = scalar_select %p286, %s25, 1
        %s288 = smul.addr %s287, 66
        %s289 = smul.addr %s288, 8
        %s290 = scalar_lea.vmem %s0, %s289
        %s291 = smul.u32 8, %s26
        %s292 = smul.u32 %s26, 8
        %s293 = smul.u32 %s292, 24
        %s294 = scalar_lea.vmem %s290, %s293
        %v295 = vld [vmem:[%s294] sm:$0xff]
        %v296 = vld [vmem:[%s294 + $0x8] sm:$0xff]
        %v297 = vld [vmem:[%s294 + $0x10] sm:$0x3f]
        %v298 = vld [vmem:[%s294 + $0x18] sm:$0xff]
        %v299 = vld [vmem:[%s294 + $0x20] sm:$0xff]
        %v300 = vld [vmem:[%s294 + $0x28] sm:$0x3f]
        %v301 = vld [vmem:[%s294 + $0x30] sm:$0xff]
        %v302 = vld [vmem:[%s294 + $0x38] sm:$0xff]
        %v303 = vld [vmem:[%s294 + $0x40] sm:$0x3f]
        %v304 = vld [vmem:[%s294 + $0x48] sm:$0xff]
        %v305 = vld [vmem:[%s294 + $0x50] sm:$0xff]
        %v306 = vld [vmem:[%s294 + $0x58] sm:$0x3f]
        %v307 = vld [vmem:[%s294 + $0x60] sm:$0xff]
        %v308 = vld [vmem:[%s294 + $0x68] sm:$0xff]
        %v309 = vld [vmem:[%s294 + $0x70] sm:$0x3f]
        %v310 = vld [vmem:[%s294 + $0x78] sm:$0xff]
        %v311 = vld [vmem:[%s294 + $0x80] sm:$0xff]
        %v312 = vld [vmem:[%s294 + $0x88] sm:$0x3f]
        %v313 = vld [vmem:[%s294 + $0x90] sm:$0xff]
        %v314 = vld [vmem:[%s294 + $0x98] sm:$0xff]
        %v315 = vld [vmem:[%s294 + $0xa0] sm:$0x3f]
        %v316 = vld [vmem:[%s294 + $0xa8] sm:$0xff]
        %v317 = vld [vmem:[%s294 + $0xb0] sm:$0xff]
        %v318 = vld [vmem:[%s294 + $0xb8] sm:$0x3f]
        %v319 = vld [vmem:[%s294 + $0xc0] sm:$0xff]
        %v320 = vld [vmem:[%s294 + $0xc8] sm:$0xff]
        %v321 = vld [vmem:[%s294 + $0xd0] sm:$0x3f]
        %v322 = vld [vmem:[%s294 + $0xd8] sm:$0xff]
        %v323 = vld [vmem:[%s294 + $0xe0] sm:$0xff]
        %v324 = vld [vmem:[%s294 + $0xe8] sm:$0x3f]
        %v325 = vld [vmem:[%s294 + $0xf0] sm:$0xff]
        %v326 = vld [vmem:[%s294 + $0xf8] sm:$0xff]
        %v327 = vld [vmem:[%s294 + $0x100] sm:$0x3f]
        %v328 = vld [vmem:[%s294 + $0x108] sm:$0xff]
        %v329 = vld [vmem:[%s294 + $0x110] sm:$0xff]
        %v330 = vld [vmem:[%s294 + $0x118] sm:$0x3f]
        %v331 = vld [vmem:[%s294 + $0x120] sm:$0xff]
        %v332 = vld [vmem:[%s294 + $0x128] sm:$0xff]
        %v333 = vld [vmem:[%s294 + $0x130] sm:$0x3f]
        %v334 = vld [vmem:[%s294 + $0x138] sm:$0xff]
        %v335 = vld [vmem:[%s294 + $0x140] sm:$0xff]
        %v336 = vld [vmem:[%s294 + $0x148] sm:$0x3f]
        %v337 = vld [vmem:[%s1] sm:$0x7f]
        %v338 = vld [vmem:[%s1 + $0x8] sm:$0x7f]
        %v339 = vld [vmem:[%s1 + $0x10] sm:$0x7f]
        %v340 = vld [vmem:[%s1 + $0x18] sm:$0x7f]
        %v341 = vld [vmem:[%s1 + $0x20] sm:$0x7f]
        %v342 = vld [vmem:[%s1 + $0x28] sm:$0x7f]
        %v343 = vld [vmem:[%s1 + $0x30] sm:$0x7f]
        %v344 = vlaneseq
        %v345 = vshrl.u32 %v344, 7
        %v346 = vsub.s32 0, %v345
        %v347 = vrot.slane %v337, %v346
        %v348 = vmul.f32 %v295, %v347
        %v349 = vmul.f32 %v296, %v347
        %v350 = vmul.f32 %v298, %v347
        %v351 = vmul.f32 %v299, %v347
        %v352 = vmul.f32 %v301, %v347
        %v353 = vmul.f32 %v302, %v347
        %v354 = vmul.f32 %v304, %v347
        %v355 = vmul.f32 %v305, %v347
        %v356 = vmul.f32 %v307, %v347
        %v357 = vmul.f32 %v308, %v347
        %v358 = vmul.f32 %v310, %v347
        %v359 = vmul.f32 %v311, %v347
        %v360 = vmul.f32 %v313, %v347
        %v361 = vmul.f32 %v314, %v347
        %v362 = vmul.f32 %v316, %v347
        %v363 = vmul.f32 %v317, %v347
        %v364 = vadd.f32 %v348, 0.0
        %v365 = vadd.f32 %v349, 0.0
        %v366 = vadd.f32 %v350, 0.0
        %v367 = vadd.f32 %v351, 0.0
        %v368 = vadd.f32 %v352, 0.0
        %v369 = vadd.f32 %v353, 0.0
        %v370 = vadd.f32 %v354, 0.0
        %v371 = vadd.f32 %v355, 0.0
        %v372 = vadd.f32 %v356, 0.0
        %v373 = vadd.f32 %v357, 0.0
        %v374 = vadd.f32 %v358, 0.0
        %v375 = vadd.f32 %v359, 0.0
        %v376 = vadd.f32 %v360, 0.0
        %v377 = vadd.f32 %v361, 0.0
        %v378 = vadd.f32 %v362, 0.0
        %v379 = vadd.f32 %v363, 0.0
        %v380 = vlaneseq
        %v381 = vshrl.u32 %v380, 7
        %v382 = vsub.s32 0, %v381
        %v383 = vrot.slane %v338, %v382
        %v384 = vmul.f32 %v298, %v383
        %v385 = vmul.f32 %v299, %v383
        %v386 = vmul.f32 %v301, %v383
        %v387 = vmul.f32 %v302, %v383
        %v388 = vmul.f32 %v304, %v383
        %v389 = vmul.f32 %v305, %v383
        %v390 = vmul.f32 %v307, %v383
        %v391 = vmul.f32 %v308, %v383
        %v392 = vmul.f32 %v310, %v383
        %v393 = vmul.f32 %v311, %v383
        %v394 = vmul.f32 %v313, %v383
        %v395 = vmul.f32 %v314, %v383
        %v396 = vmul.f32 %v316, %v383
        %v397 = vmul.f32 %v317, %v383
        %v398 = vmul.f32 %v319, %v383
        %v399 = vmul.f32 %v320, %v383
        %v400 = vadd.f32 %v364, %v384
        %v401 = vadd.f32 %v365, %v385
        %v402 = vadd.f32 %v366, %v386
        %v403 = vadd.f32 %v367, %v387
        %v404 = vadd.f32 %v368, %v388
        %v405 = vadd.f32 %v369, %v389
        %v406 = vadd.f32 %v370, %v390
        %v407 = vadd.f32 %v371, %v391
        %v408 = vadd.f32 %v372, %v392
        %v409 = vadd.f32 %v373, %v393
        %v410 = vadd.f32 %v374, %v394
        %v411 = vadd.f32 %v375, %v395
        %v412 = vadd.f32 %v376, %v396
        %v413 = vadd.f32 %v377, %v397
        %v414 = vadd.f32 %v378, %v398
        %v415 = vadd.f32 %v379, %v399
        %v416 = vlaneseq
        %v417 = vshrl.u32 %v416, 7
        %v418 = vsub.s32 0, %v417
        %v419 = vrot.slane %v339, %v418
        %v420 = vmul.f32 %v301, %v419
        %v421 = vmul.f32 %v302, %v419
        %v422 = vmul.f32 %v304, %v419
        %v423 = vmul.f32 %v305, %v419
        %v424 = vmul.f32 %v307, %v419
        %v425 = vmul.f32 %v308, %v419
        %v426 = vmul.f32 %v310, %v419
        %v427 = vmul.f32 %v311, %v419
        %v428 = vmul.f32 %v313, %v419
        %v429 = vmul.f32 %v314, %v419
        %v430 = vmul.f32 %v316, %v419
        %v431 = vmul.f32 %v317, %v419
        %v432 = vmul.f32 %v319, %v419
        %v433 = vmul.f32 %v320, %v419
        %v434 = vmul.f32 %v322, %v419
        %v435 = vmul.f32 %v323, %v419
        %v436 = vadd.f32 %v400, %v420
        %v437 = vadd.f32 %v401, %v421
        %v438 = vadd.f32 %v402, %v422
        %v439 = vadd.f32 %v403, %v423
        %v440 = vadd.f32 %v404, %v424
        %v441 = vadd.f32 %v405, %v425
        %v442 = vadd.f32 %v406, %v426
        %v443 = vadd.f32 %v407, %v427
        %v444 = vadd.f32 %v408, %v428
        %v445 = vadd.f32 %v409, %v429
        %v446 = vadd.f32 %v410, %v430
        %v447 = vadd.f32 %v411, %v431
        %v448 = vadd.f32 %v412, %v432
        %v449 = vadd.f32 %v413, %v433
        %v450 = vadd.f32 %v414, %v434
        %v451 = vadd.f32 %v415, %v435
        %v452 = vlaneseq
        %v453 = vshrl.u32 %v452, 7
        %v454 = vsub.s32 0, %v453
        %v455 = vrot.slane %v340, %v454
        %v456 = vmul.f32 %v304, %v455
        %v457 = vmul.f32 %v305, %v455
        %v458 = vmul.f32 %v307, %v455
        %v459 = vmul.f32 %v308, %v455
        %v460 = vmul.f32 %v310, %v455
        %v461 = vmul.f32 %v311, %v455
        %v462 = vmul.f32 %v313, %v455
        %v463 = vmul.f32 %v314, %v455
        %v464 = vmul.f32 %v316, %v455
        %v465 = vmul.f32 %v317, %v455
        %v466 = vmul.f32 %v319, %v455
        %v467 = vmul.f32 %v320, %v455
        %v468 = vmul.f32 %v322, %v455
        %v469 = vmul.f32 %v323, %v455
        %v470 = vmul.f32 %v325, %v455
        %v471 = vmul.f32 %v326, %v455
        %v472 = vadd.f32 %v436, %v456
        %v473 = vadd.f32 %v437, %v457
        %v474 = vadd.f32 %v438, %v458
        %v475 = vadd.f32 %v439, %v459
        %v476 = vadd.f32 %v440, %v460
        %v477 = vadd.f32 %v441, %v461
        %v478 = vadd.f32 %v442, %v462
        %v479 = vadd.f32 %v443, %v463
        %v480 = vadd.f32 %v444, %v464
        %v481 = vadd.f32 %v445, %v465
        %v482 = vadd.f32 %v446, %v466
        %v483 = vadd.f32 %v447, %v467
        %v484 = vadd.f32 %v448, %v468
        %v485 = vadd.f32 %v449, %v469
        %v486 = vadd.f32 %v450, %v470
        %v487 = vadd.f32 %v451, %v471
        %v488 = vlaneseq
        %v489 = vshrl.u32 %v488, 7
        %v490 = vsub.s32 0, %v489
        %v491 = vrot.slane %v341, %v490
        %v492 = vmul.f32 %v307, %v491
        %v493 = vmul.f32 %v308, %v491
        %v494 = vmul.f32 %v310, %v491
        %v495 = vmul.f32 %v311, %v491
        %v496 = vmul.f32 %v313, %v491
        %v497 = vmul.f32 %v314, %v491
        %v498 = vmul.f32 %v316, %v491
        %v499 = vmul.f32 %v317, %v491
        %v500 = vmul.f32 %v319, %v491
        %v501 = vmul.f32 %v320, %v491
        %v502 = vmul.f32 %v322, %v491
        %v503 = vmul.f32 %v323, %v491
        %v504 = vmul.f32 %v325, %v491
        %v505 = vmul.f32 %v326, %v491
        %v506 = vmul.f32 %v328, %v491
        %v507 = vmul.f32 %v329, %v491
        %v508 = vadd.f32 %v472, %v492
        %v509 = vadd.f32 %v473, %v493
        %v510 = vadd.f32 %v474, %v494
        %v511 = vadd.f32 %v475, %v495
        %v512 = vadd.f32 %v476, %v496
        %v513 = vadd.f32 %v477, %v497
        %v514 = vadd.f32 %v478, %v498
        %v515 = vadd.f32 %v479, %v499
        %v516 = vadd.f32 %v480, %v500
        %v517 = vadd.f32 %v481, %v501
        %v518 = vadd.f32 %v482, %v502
        %v519 = vadd.f32 %v483, %v503
        %v520 = vadd.f32 %v484, %v504
        %v521 = vadd.f32 %v485, %v505
        %v522 = vadd.f32 %v486, %v506
        %v523 = vadd.f32 %v487, %v507
        %v524 = vlaneseq
        %v525 = vshrl.u32 %v524, 7
        %v526 = vsub.s32 0, %v525
        %v527 = vrot.slane %v342, %v526
        %v528 = vmul.f32 %v310, %v527
        %v529 = vmul.f32 %v311, %v527
        %v530 = vmul.f32 %v313, %v527
        %v531 = vmul.f32 %v314, %v527
        %v532 = vmul.f32 %v316, %v527
        %v533 = vmul.f32 %v317, %v527
        %v534 = vmul.f32 %v319, %v527
        %v535 = vmul.f32 %v320, %v527
        %v536 = vmul.f32 %v322, %v527
        %v537 = vmul.f32 %v323, %v527
        %v538 = vmul.f32 %v325, %v527
        %v539 = vmul.f32 %v326, %v527
        %v540 = vmul.f32 %v328, %v527
        %v541 = vmul.f32 %v329, %v527
        %v542 = vmul.f32 %v331, %v527
        %v543 = vmul.f32 %v332, %v527
        %v544 = vadd.f32 %v508, %v528
        %v545 = vadd.f32 %v509, %v529
        %v546 = vadd.f32 %v510, %v530
        %v547 = vadd.f32 %v511, %v531
        %v548 = vadd.f32 %v512, %v532
        %v549 = vadd.f32 %v513, %v533
        %v550 = vadd.f32 %v514, %v534
        %v551 = vadd.f32 %v515, %v535
        %v552 = vadd.f32 %v516, %v536
        %v553 = vadd.f32 %v517, %v537
        %v554 = vadd.f32 %v518, %v538
        %v555 = vadd.f32 %v519, %v539
        %v556 = vadd.f32 %v520, %v540
        %v557 = vadd.f32 %v521, %v541
        %v558 = vadd.f32 %v522, %v542
        %v559 = vadd.f32 %v523, %v543
        %v560 = vlaneseq
        %v561 = vshrl.u32 %v560, 7
        %v562 = vsub.s32 0, %v561
        %v563 = vrot.slane %v343, %v562
        %v564 = vmul.f32 %v313, %v563
        %v565 = vmul.f32 %v314, %v563
        %v566 = vmul.f32 %v316, %v563
        %v567 = vmul.f32 %v317, %v563
        %v568 = vmul.f32 %v319, %v563
        %v569 = vmul.f32 %v320, %v563
        %v570 = vmul.f32 %v322, %v563
        %v571 = vmul.f32 %v323, %v563
        %v572 = vmul.f32 %v325, %v563
        %v573 = vmul.f32 %v326, %v563
        %v574 = vmul.f32 %v328, %v563
        %v575 = vmul.f32 %v329, %v563
        %v576 = vmul.f32 %v331, %v563
        %v577 = vmul.f32 %v332, %v563
        %v578 = vmul.f32 %v334, %v563
        %v579 = vmul.f32 %v335, %v563
        %v580 = vadd.f32 %v544, %v564
        %v581 = vadd.f32 %v545, %v565
        %v582 = vadd.f32 %v546, %v566
        %v583 = vadd.f32 %v547, %v567
        %v584 = vadd.f32 %v548, %v568
        %v585 = vadd.f32 %v549, %v569
        %v586 = vadd.f32 %v550, %v570
        %v587 = vadd.f32 %v551, %v571
        %v588 = vadd.f32 %v552, %v572
        %v589 = vadd.f32 %v553, %v573
        %v590 = vadd.f32 %v554, %v574
        %v591 = vadd.f32 %v555, %v575
        %v592 = vadd.f32 %v556, %v576
        %v593 = vadd.f32 %v557, %v577
        %v594 = vadd.f32 %v558, %v578
        %v595 = vadd.f32 %v559, %v579
        %v596 = vlaneseq
        %v597 = vshrl.u32 %v596, 7
        %v598 = vsub.s32 1, %v597
        %v599 = vrot.slane %v337, %v598
        %v600 = vmul.f32 %v295, %v599
        %v601 = vmul.f32 %v296, %v599
        %v602 = vmul.f32 %v297, %v599
        %v603 = vmul.f32 %v298, %v599
        %v604 = vmul.f32 %v299, %v599
        %v605 = vmul.f32 %v300, %v599
        %v606 = vmul.f32 %v301, %v599
        %v607 = vmul.f32 %v302, %v599
        %v608 = vmul.f32 %v303, %v599
        %v609 = vmul.f32 %v304, %v599
        %v610 = vmul.f32 %v305, %v599
        %v611 = vmul.f32 %v306, %v599
        %v612 = vmul.f32 %v307, %v599
        %v613 = vmul.f32 %v308, %v599
        %v614 = vmul.f32 %v309, %v599
        %v615 = vmul.f32 %v310, %v599
        %v616 = vmul.f32 %v311, %v599
        %v617 = vmul.f32 %v312, %v599
        %v618 = vmul.f32 %v313, %v599
        %v619 = vmul.f32 %v314, %v599
        %v620 = vmul.f32 %v315, %v599
        %v621 = vmul.f32 %v316, %v599
        %v622 = vmul.f32 %v317, %v599
        %v623 = vmul.f32 %v318, %v599
        %vm648 = vcmask 1046528
        %v649 = vrot.slane %v600, 1
        %v650 = vrot.slane %v601, 1
        %v651 = vsel %vm648, %v649, %v650
        %v652 = vrot.slane %v602, 1
        %v653 = vsel %vm648, %v650, %v652
        %v654 = vrot.slane %v603, 1
        %v655 = vrot.slane %v604, 1
        %v656 = vsel %vm648, %v654, %v655
        %v657 = vrot.slane %v605, 1
        %v658 = vsel %vm648, %v655, %v657
        %v659 = vrot.slane %v606, 1
        %v660 = vrot.slane %v607, 1
        %v661 = vsel %vm648, %v659, %v660
        %v662 = vrot.slane %v608, 1
        %v663 = vsel %vm648, %v660, %v662
        %v664 = vrot.slane %v609, 1
        %v665 = vrot.slane %v610, 1
        %v666 = vsel %vm648, %v664, %v665
        %v667 = vrot.slane %v611, 1
        %v668 = vsel %vm648, %v665, %v667
        %v669 = vrot.slane %v612, 1
        %v670 = vrot.slane %v613, 1
        %v671 = vsel %vm648, %v669, %v670
        %v672 = vrot.slane %v614, 1
        %v673 = vsel %vm648, %v670, %v672
        %v674 = vrot.slane %v615, 1
        %v675 = vrot.slane %v616, 1
        %v676 = vsel %vm648, %v674, %v675
        %v677 = vrot.slane %v617, 1
        %v678 = vsel %vm648, %v675, %v677
        %v679 = vrot.slane %v618, 1
        %v680 = vrot.slane %v619, 1
        %v681 = vsel %vm648, %v679, %v680
        %v682 = vrot.slane %v620, 1
        %v683 = vsel %vm648, %v680, %v682
        %v684 = vrot.slane %v621, 1
        %v685 = vrot.slane %v622, 1
        %v686 = vsel %vm648, %v684, %v685
        %v687 = vrot.slane %v623, 1
        %v688 = vsel %vm648, %v685, %v687
        %v705 = vadd.f32 %v580, %v651
        %v706 = vadd.f32 %v581, %v653
        %v707 = vadd.f32 %v582, %v656
        %v708 = vadd.f32 %v583, %v658
        %v709 = vadd.f32 %v584, %v661
        %v710 = vadd.f32 %v585, %v663
        %v711 = vadd.f32 %v586, %v666
        %v712 = vadd.f32 %v587, %v668
        %v713 = vadd.f32 %v588, %v671
        %v714 = vadd.f32 %v589, %v673
        %v715 = vadd.f32 %v590, %v676
        %v716 = vadd.f32 %v591, %v678
        %v717 = vadd.f32 %v592, %v681
        %v718 = vadd.f32 %v593, %v683
        %v719 = vadd.f32 %v594, %v686
        %v720 = vadd.f32 %v595, %v688
        %v721 = vlaneseq
        %v722 = vshrl.u32 %v721, 7
        %v723 = vsub.s32 1, %v722
        %v724 = vrot.slane %v338, %v723
        %v725 = vmul.f32 %v298, %v724
        %v726 = vmul.f32 %v299, %v724
        %v727 = vmul.f32 %v300, %v724
        %v728 = vmul.f32 %v301, %v724
        %v729 = vmul.f32 %v302, %v724
        %v730 = vmul.f32 %v303, %v724
        %v731 = vmul.f32 %v304, %v724
        %v732 = vmul.f32 %v305, %v724
        %v733 = vmul.f32 %v306, %v724
        %v734 = vmul.f32 %v307, %v724
        %v735 = vmul.f32 %v308, %v724
        %v736 = vmul.f32 %v309, %v724
        %v737 = vmul.f32 %v310, %v724
        %v738 = vmul.f32 %v311, %v724
        %v739 = vmul.f32 %v312, %v724
        %v740 = vmul.f32 %v313, %v724
        %v741 = vmul.f32 %v314, %v724
        %v742 = vmul.f32 %v315, %v724
        %v743 = vmul.f32 %v316, %v724
        %v744 = vmul.f32 %v317, %v724
        %v745 = vmul.f32 %v318, %v724
        %v746 = vmul.f32 %v319, %v724
        %v747 = vmul.f32 %v320, %v724
        %v748 = vmul.f32 %v321, %v724
        %v773 = vrot.slane %v725, 1
        %v774 = vrot.slane %v726, 1
        %v775 = vsel %vm648, %v773, %v774
        %v776 = vrot.slane %v727, 1
        %v777 = vsel %vm648, %v774, %v776
        %v778 = vrot.slane %v728, 1
        %v779 = vrot.slane %v729, 1
        %v780 = vsel %vm648, %v778, %v779
        %v781 = vrot.slane %v730, 1
        %v782 = vsel %vm648, %v779, %v781
        %v783 = vrot.slane %v731, 1
        %v784 = vrot.slane %v732, 1
        %v785 = vsel %vm648, %v783, %v784
        %v786 = vrot.slane %v733, 1
        %v787 = vsel %vm648, %v784, %v786
        %v788 = vrot.slane %v734, 1
        %v789 = vrot.slane %v735, 1
        %v790 = vsel %vm648, %v788, %v789
        %v791 = vrot.slane %v736, 1
        %v792 = vsel %vm648, %v789, %v791
        %v793 = vrot.slane %v737, 1
        %v794 = vrot.slane %v738, 1
        %v795 = vsel %vm648, %v793, %v794
        %v796 = vrot.slane %v739, 1
        %v797 = vsel %vm648, %v794, %v796
        %v798 = vrot.slane %v740, 1
        %v799 = vrot.slane %v741, 1
        %v800 = vsel %vm648, %v798, %v799
        %v801 = vrot.slane %v742, 1
        %v802 = vsel %vm648, %v799, %v801
        %v803 = vrot.slane %v743, 1
        %v804 = vrot.slane %v744, 1
        %v805 = vsel %vm648, %v803, %v804
        %v806 = vrot.slane %v745, 1
        %v807 = vsel %vm648, %v804, %v806
        %v808 = vrot.slane %v746, 1
        %v809 = vrot.slane %v747, 1
        %v810 = vsel %vm648, %v808, %v809
        %v811 = vrot.slane %v748, 1
        %v812 = vsel %vm648, %v809, %v811
        %v829 = vadd.f32 %v705, %v775
        %v830 = vadd.f32 %v706, %v777
        %v831 = vadd.f32 %v707, %v780
        %v832 = vadd.f32 %v708, %v782
        %v833 = vadd.f32 %v709, %v785
        %v834 = vadd.f32 %v710, %v787
        %v835 = vadd.f32 %v711, %v790
        %v836 = vadd.f32 %v712, %v792
        %v837 = vadd.f32 %v713, %v795
        %v838 = vadd.f32 %v714, %v797
        %v839 = vadd.f32 %v715, %v800
        %v840 = vadd.f32 %v716, %v802
        %v841 = vadd.f32 %v717, %v805
        %v842 = vadd.f32 %v718, %v807
        %v843 = vadd.f32 %v719, %v810
        %v844 = vadd.f32 %v720, %v812
        %v845 = vlaneseq
        %v846 = vshrl.u32 %v845, 7
        %v847 = vsub.s32 1, %v846
        %v848 = vrot.slane %v339, %v847
        %v849 = vmul.f32 %v301, %v848
        %v850 = vmul.f32 %v302, %v848
        %v851 = vmul.f32 %v303, %v848
        %v852 = vmul.f32 %v304, %v848
        %v853 = vmul.f32 %v305, %v848
        %v854 = vmul.f32 %v306, %v848
        %v855 = vmul.f32 %v307, %v848
        %v856 = vmul.f32 %v308, %v848
        %v857 = vmul.f32 %v309, %v848
        %v858 = vmul.f32 %v310, %v848
        %v859 = vmul.f32 %v311, %v848
        %v860 = vmul.f32 %v312, %v848
        %v861 = vmul.f32 %v313, %v848
        %v862 = vmul.f32 %v314, %v848
        %v863 = vmul.f32 %v315, %v848
        %v864 = vmul.f32 %v316, %v848
        %v865 = vmul.f32 %v317, %v848
        %v866 = vmul.f32 %v318, %v848
        %v867 = vmul.f32 %v319, %v848
        %v868 = vmul.f32 %v320, %v848
        %v869 = vmul.f32 %v321, %v848
        %v870 = vmul.f32 %v322, %v848
        %v871 = vmul.f32 %v323, %v848
        %v872 = vmul.f32 %v324, %v848
        %v897 = vrot.slane %v849, 1
        %v898 = vrot.slane %v850, 1
        %v899 = vsel %vm648, %v897, %v898
        %v900 = vrot.slane %v851, 1
        %v901 = vsel %vm648, %v898, %v900
        %v902 = vrot.slane %v852, 1
        %v903 = vrot.slane %v853, 1
        %v904 = vsel %vm648, %v902, %v903
        %v905 = vrot.slane %v854, 1
        %v906 = vsel %vm648, %v903, %v905
        %v907 = vrot.slane %v855, 1
        %v908 = vrot.slane %v856, 1
        %v909 = vsel %vm648, %v907, %v908
        %v910 = vrot.slane %v857, 1
        %v911 = vsel %vm648, %v908, %v910
        %v912 = vrot.slane %v858, 1
        %v913 = vrot.slane %v859, 1
        %v914 = vsel %vm648, %v912, %v913
        %v915 = vrot.slane %v860, 1
        %v916 = vsel %vm648, %v913, %v915
        %v917 = vrot.slane %v861, 1
        %v918 = vrot.slane %v862, 1
        %v919 = vsel %vm648, %v917, %v918
        %v920 = vrot.slane %v863, 1
        %v921 = vsel %vm648, %v918, %v920
        %v922 = vrot.slane %v864, 1
        %v923 = vrot.slane %v865, 1
        %v924 = vsel %vm648, %v922, %v923
        %v925 = vrot.slane %v866, 1
        %v926 = vsel %vm648, %v923, %v925
        %v927 = vrot.slane %v867, 1
        %v928 = vrot.slane %v868, 1
        %v929 = vsel %vm648, %v927, %v928
        %v930 = vrot.slane %v869, 1
        %v931 = vsel %vm648, %v928, %v930
        %v932 = vrot.slane %v870, 1
        %v933 = vrot.slane %v871, 1
        %v934 = vsel %vm648, %v932, %v933
        %v935 = vrot.slane %v872, 1
        %v936 = vsel %vm648, %v933, %v935
        %v953 = vadd.f32 %v829, %v899
        %v954 = vadd.f32 %v830, %v901
        %v955 = vadd.f32 %v831, %v904
        %v956 = vadd.f32 %v832, %v906
        %v957 = vadd.f32 %v833, %v909
        %v958 = vadd.f32 %v834, %v911
        %v959 = vadd.f32 %v835, %v914
        %v960 = vadd.f32 %v836, %v916
        %v961 = vadd.f32 %v837, %v919
        %v962 = vadd.f32 %v838, %v921
        %v963 = vadd.f32 %v839, %v924
        %v964 = vadd.f32 %v840, %v926
        %v965 = vadd.f32 %v841, %v929
        %v966 = vadd.f32 %v842, %v931
        %v967 = vadd.f32 %v843, %v934
        %v968 = vadd.f32 %v844, %v936
        %v969 = vlaneseq
        %v970 = vshrl.u32 %v969, 7
        %v971 = vsub.s32 1, %v970
        %v972 = vrot.slane %v340, %v971
        %v973 = vmul.f32 %v304, %v972
        %v974 = vmul.f32 %v305, %v972
        %v975 = vmul.f32 %v306, %v972
        %v976 = vmul.f32 %v307, %v972
        %v977 = vmul.f32 %v308, %v972
        %v978 = vmul.f32 %v309, %v972
        %v979 = vmul.f32 %v310, %v972
        %v980 = vmul.f32 %v311, %v972
        %v981 = vmul.f32 %v312, %v972
        %v982 = vmul.f32 %v313, %v972
        %v983 = vmul.f32 %v314, %v972
        %v984 = vmul.f32 %v315, %v972
        %v985 = vmul.f32 %v316, %v972
        %v986 = vmul.f32 %v317, %v972
        %v987 = vmul.f32 %v318, %v972
        %v988 = vmul.f32 %v319, %v972
        %v989 = vmul.f32 %v320, %v972
        %v990 = vmul.f32 %v321, %v972
        %v991 = vmul.f32 %v322, %v972
        %v992 = vmul.f32 %v323, %v972
        %v993 = vmul.f32 %v324, %v972
        %v994 = vmul.f32 %v325, %v972
        %v995 = vmul.f32 %v326, %v972
        %v996 = vmul.f32 %v327, %v972
        %v1021 = vrot.slane %v973, 1
        %v1022 = vrot.slane %v974, 1
        %v1023 = vsel %vm648, %v1021, %v1022
        %v1024 = vrot.slane %v975, 1
        %v1025 = vsel %vm648, %v1022, %v1024
        %v1026 = vrot.slane %v976, 1
        %v1027 = vrot.slane %v977, 1
        %v1028 = vsel %vm648, %v1026, %v1027
        %v1029 = vrot.slane %v978, 1
        %v1030 = vsel %vm648, %v1027, %v1029
        %v1031 = vrot.slane %v979, 1
        %v1032 = vrot.slane %v980, 1
        %v1033 = vsel %vm648, %v1031, %v1032
        %v1034 = vrot.slane %v981, 1
        %v1035 = vsel %vm648, %v1032, %v1034
        %v1036 = vrot.slane %v982, 1
        %v1037 = vrot.slane %v983, 1
        %v1038 = vsel %vm648, %v1036, %v1037
        %v1039 = vrot.slane %v984, 1
        %v1040 = vsel %vm648, %v1037, %v1039
        %v1041 = vrot.slane %v985, 1
        %v1042 = vrot.slane %v986, 1
        %v1043 = vsel %vm648, %v1041, %v1042
        %v1044 = vrot.slane %v987, 1
        %v1045 = vsel %vm648, %v1042, %v1044
        %v1046 = vrot.slane %v988, 1
        %v1047 = vrot.slane %v989, 1
        %v1048 = vsel %vm648, %v1046, %v1047
        %v1049 = vrot.slane %v990, 1
        %v1050 = vsel %vm648, %v1047, %v1049
        %v1051 = vrot.slane %v991, 1
        %v1052 = vrot.slane %v992, 1
        %v1053 = vsel %vm648, %v1051, %v1052
        %v1054 = vrot.slane %v993, 1
        %v1055 = vsel %vm648, %v1052, %v1054
        %v1056 = vrot.slane %v994, 1
        %v1057 = vrot.slane %v995, 1
        %v1058 = vsel %vm648, %v1056, %v1057
        %v1059 = vrot.slane %v996, 1
        %v1060 = vsel %vm648, %v1057, %v1059
        %v1077 = vadd.f32 %v953, %v1023
        %v1078 = vadd.f32 %v954, %v1025
        %v1079 = vadd.f32 %v955, %v1028
        %v1080 = vadd.f32 %v956, %v1030
        %v1081 = vadd.f32 %v957, %v1033
        %v1082 = vadd.f32 %v958, %v1035
        %v1083 = vadd.f32 %v959, %v1038
        %v1084 = vadd.f32 %v960, %v1040
        %v1085 = vadd.f32 %v961, %v1043
        %v1086 = vadd.f32 %v962, %v1045
        %v1087 = vadd.f32 %v963, %v1048
        %v1088 = vadd.f32 %v964, %v1050
        %v1089 = vadd.f32 %v965, %v1053
        %v1090 = vadd.f32 %v966, %v1055
        %v1091 = vadd.f32 %v967, %v1058
        %v1092 = vadd.f32 %v968, %v1060
        %v1093 = vlaneseq
        %v1094 = vshrl.u32 %v1093, 7
        %v1095 = vsub.s32 1, %v1094
        %v1096 = vrot.slane %v341, %v1095
        %v1097 = vmul.f32 %v307, %v1096
        %v1098 = vmul.f32 %v308, %v1096
        %v1099 = vmul.f32 %v309, %v1096
        %v1100 = vmul.f32 %v310, %v1096
        %v1101 = vmul.f32 %v311, %v1096
        %v1102 = vmul.f32 %v312, %v1096
        %v1103 = vmul.f32 %v313, %v1096
        %v1104 = vmul.f32 %v314, %v1096
        %v1105 = vmul.f32 %v315, %v1096
        %v1106 = vmul.f32 %v316, %v1096
        %v1107 = vmul.f32 %v317, %v1096
        %v1108 = vmul.f32 %v318, %v1096
        %v1109 = vmul.f32 %v319, %v1096
        %v1110 = vmul.f32 %v320, %v1096
        %v1111 = vmul.f32 %v321, %v1096
        %v1112 = vmul.f32 %v322, %v1096
        %v1113 = vmul.f32 %v323, %v1096
        %v1114 = vmul.f32 %v324, %v1096
        %v1115 = vmul.f32 %v325, %v1096
        %v1116 = vmul.f32 %v326, %v1096
        %v1117 = vmul.f32 %v327, %v1096
        %v1118 = vmul.f32 %v328, %v1096
        %v1119 = vmul.f32 %v329, %v1096
        %v1120 = vmul.f32 %v330, %v1096
        %v1145 = vrot.slane %v1097, 1
        %v1146 = vrot.slane %v1098, 1
        %v1147 = vsel %vm648, %v1145, %v1146
        %v1148 = vrot.slane %v1099, 1
        %v1149 = vsel %vm648, %v1146, %v1148
        %v1150 = vrot.slane %v1100, 1
        %v1151 = vrot.slane %v1101, 1
        %v1152 = vsel %vm648, %v1150, %v1151
        %v1153 = vrot.slane %v1102, 1
        %v1154 = vsel %vm648, %v1151, %v1153
        %v1155 = vrot.slane %v1103, 1
        %v1156 = vrot.slane %v1104, 1
        %v1157 = vsel %vm648, %v1155, %v1156
        %v1158 = vrot.slane %v1105, 1
        %v1159 = vsel %vm648, %v1156, %v1158
        %v1160 = vrot.slane %v1106, 1
        %v1161 = vrot.slane %v1107, 1
        %v1162 = vsel %vm648, %v1160, %v1161
        %v1163 = vrot.slane %v1108, 1
        %v1164 = vsel %vm648, %v1161, %v1163
        %v1165 = vrot.slane %v1109, 1
        %v1166 = vrot.slane %v1110, 1
        %v1167 = vsel %vm648, %v1165, %v1166
        %v1168 = vrot.slane %v1111, 1
        %v1169 = vsel %vm648, %v1166, %v1168
        %v1170 = vrot.slane %v1112, 1
        %v1171 = vrot.slane %v1113, 1
        %v1172 = vsel %vm648, %v1170, %v1171
        %v1173 = vrot.slane %v1114, 1
        %v1174 = vsel %vm648, %v1171, %v1173
        %v1175 = vrot.slane %v1115, 1
        %v1176 = vrot.slane %v1116, 1
        %v1177 = vsel %vm648, %v1175, %v1176
        %v1178 = vrot.slane %v1117, 1
        %v1179 = vsel %vm648, %v1176, %v1178
        %v1180 = vrot.slane %v1118, 1
        %v1181 = vrot.slane %v1119, 1
        %v1182 = vsel %vm648, %v1180, %v1181
        %v1183 = vrot.slane %v1120, 1
        %v1184 = vsel %vm648, %v1181, %v1183
        %v1201 = vadd.f32 %v1077, %v1147
        %v1202 = vadd.f32 %v1078, %v1149
        %v1203 = vadd.f32 %v1079, %v1152
        %v1204 = vadd.f32 %v1080, %v1154
        %v1205 = vadd.f32 %v1081, %v1157
        %v1206 = vadd.f32 %v1082, %v1159
        %v1207 = vadd.f32 %v1083, %v1162
        %v1208 = vadd.f32 %v1084, %v1164
        %v1209 = vadd.f32 %v1085, %v1167
        %v1210 = vadd.f32 %v1086, %v1169
        %v1211 = vadd.f32 %v1087, %v1172
        %v1212 = vadd.f32 %v1088, %v1174
        %v1213 = vadd.f32 %v1089, %v1177
        %v1214 = vadd.f32 %v1090, %v1179
        %v1215 = vadd.f32 %v1091, %v1182
        %v1216 = vadd.f32 %v1092, %v1184
        %v1217 = vlaneseq
        %v1218 = vshrl.u32 %v1217, 7
        %v1219 = vsub.s32 1, %v1218
        %v1220 = vrot.slane %v342, %v1219
        %v1221 = vmul.f32 %v310, %v1220
        %v1222 = vmul.f32 %v311, %v1220
        %v1223 = vmul.f32 %v312, %v1220
        %v1224 = vmul.f32 %v313, %v1220
        %v1225 = vmul.f32 %v314, %v1220
        %v1226 = vmul.f32 %v315, %v1220
        %v1227 = vmul.f32 %v316, %v1220
        %v1228 = vmul.f32 %v317, %v1220
        %v1229 = vmul.f32 %v318, %v1220
        %v1230 = vmul.f32 %v319, %v1220
        %v1231 = vmul.f32 %v320, %v1220
        %v1232 = vmul.f32 %v321, %v1220
        %v1233 = vmul.f32 %v322, %v1220
        %v1234 = vmul.f32 %v323, %v1220
        %v1235 = vmul.f32 %v324, %v1220
        %v1236 = vmul.f32 %v325, %v1220
        %v1237 = vmul.f32 %v326, %v1220
        %v1238 = vmul.f32 %v327, %v1220
        %v1239 = vmul.f32 %v328, %v1220
        %v1240 = vmul.f32 %v329, %v1220
        %v1241 = vmul.f32 %v330, %v1220
        %v1242 = vmul.f32 %v331, %v1220
        %v1243 = vmul.f32 %v332, %v1220
        %v1244 = vmul.f32 %v333, %v1220
        %v1269 = vrot.slane %v1221, 1
        %v1270 = vrot.slane %v1222, 1
        %v1271 = vsel %vm648, %v1269, %v1270
        %v1272 = vrot.slane %v1223, 1
        %v1273 = vsel %vm648, %v1270, %v1272
        %v1274 = vrot.slane %v1224, 1
        %v1275 = vrot.slane %v1225, 1
        %v1276 = vsel %vm648, %v1274, %v1275
        %v1277 = vrot.slane %v1226, 1
        %v1278 = vsel %vm648, %v1275, %v1277
        %v1279 = vrot.slane %v1227, 1
        %v1280 = vrot.slane %v1228, 1
        %v1281 = vsel %vm648, %v1279, %v1280
        %v1282 = vrot.slane %v1229, 1
        %v1283 = vsel %vm648, %v1280, %v1282
        %v1284 = vrot.slane %v1230, 1
        %v1285 = vrot.slane %v1231, 1
        %v1286 = vsel %vm648, %v1284, %v1285
        %v1287 = vrot.slane %v1232, 1
        %v1288 = vsel %vm648, %v1285, %v1287
        %v1289 = vrot.slane %v1233, 1
        %v1290 = vrot.slane %v1234, 1
        %v1291 = vsel %vm648, %v1289, %v1290
        %v1292 = vrot.slane %v1235, 1
        %v1293 = vsel %vm648, %v1290, %v1292
        %v1294 = vrot.slane %v1236, 1
        %v1295 = vrot.slane %v1237, 1
        %v1296 = vsel %vm648, %v1294, %v1295
        %v1297 = vrot.slane %v1238, 1
        %v1298 = vsel %vm648, %v1295, %v1297
        %v1299 = vrot.slane %v1239, 1
        %v1300 = vrot.slane %v1240, 1
        %v1301 = vsel %vm648, %v1299, %v1300
        %v1302 = vrot.slane %v1241, 1
        %v1303 = vsel %vm648, %v1300, %v1302
        %v1304 = vrot.slane %v1242, 1
        %v1305 = vrot.slane %v1243, 1
        %v1306 = vsel %vm648, %v1304, %v1305
        %v1307 = vrot.slane %v1244, 1
        %v1308 = vsel %vm648, %v1305, %v1307
        %v1325 = vadd.f32 %v1201, %v1271
        %v1326 = vadd.f32 %v1202, %v1273
        %v1327 = vadd.f32 %v1203, %v1276
        %v1328 = vadd.f32 %v1204, %v1278
        %v1329 = vadd.f32 %v1205, %v1281
        %v1330 = vadd.f32 %v1206, %v1283
        %v1331 = vadd.f32 %v1207, %v1286
        %v1332 = vadd.f32 %v1208, %v1288
        %v1333 = vadd.f32 %v1209, %v1291
        %v1334 = vadd.f32 %v1210, %v1293
        %v1335 = vadd.f32 %v1211, %v1296
        %v1336 = vadd.f32 %v1212, %v1298
        %v1337 = vadd.f32 %v1213, %v1301
        %v1338 = vadd.f32 %v1214, %v1303
        %v1339 = vadd.f32 %v1215, %v1306
        %v1340 = vadd.f32 %v1216, %v1308
        %v1341 = vlaneseq
        %v1342 = vshrl.u32 %v1341, 7
        %v1343 = vsub.s32 1, %v1342
        %v1344 = vrot.slane %v343, %v1343
        %v1345 = vmul.f32 %v313, %v1344
        %v1346 = vmul.f32 %v314, %v1344
        %v1347 = vmul.f32 %v315, %v1344
        %v1348 = vmul.f32 %v316, %v1344
        %v1349 = vmul.f32 %v317, %v1344
        %v1350 = vmul.f32 %v318, %v1344
        %v1351 = vmul.f32 %v319, %v1344
        %v1352 = vmul.f32 %v320, %v1344
        %v1353 = vmul.f32 %v321, %v1344
        %v1354 = vmul.f32 %v322, %v1344
        %v1355 = vmul.f32 %v323, %v1344
        %v1356 = vmul.f32 %v324, %v1344
        %v1357 = vmul.f32 %v325, %v1344
        %v1358 = vmul.f32 %v326, %v1344
        %v1359 = vmul.f32 %v327, %v1344
        %v1360 = vmul.f32 %v328, %v1344
        %v1361 = vmul.f32 %v329, %v1344
        %v1362 = vmul.f32 %v330, %v1344
        %v1363 = vmul.f32 %v331, %v1344
        %v1364 = vmul.f32 %v332, %v1344
        %v1365 = vmul.f32 %v333, %v1344
        %v1366 = vmul.f32 %v334, %v1344
        %v1367 = vmul.f32 %v335, %v1344
        %v1368 = vmul.f32 %v336, %v1344
        %v1393 = vrot.slane %v1345, 1
        %v1394 = vrot.slane %v1346, 1
        %v1395 = vsel %vm648, %v1393, %v1394
        %v1396 = vrot.slane %v1347, 1
        %v1397 = vsel %vm648, %v1394, %v1396
        %v1398 = vrot.slane %v1348, 1
        %v1399 = vrot.slane %v1349, 1
        %v1400 = vsel %vm648, %v1398, %v1399
        %v1401 = vrot.slane %v1350, 1
        %v1402 = vsel %vm648, %v1399, %v1401
        %v1403 = vrot.slane %v1351, 1
        %v1404 = vrot.slane %v1352, 1
        %v1405 = vsel %vm648, %v1403, %v1404
        %v1406 = vrot.slane %v1353, 1
        %v1407 = vsel %vm648, %v1404, %v1406
        %v1408 = vrot.slane %v1354, 1
        %v1409 = vrot.slane %v1355, 1
        %v1410 = vsel %vm648, %v1408, %v1409
        %v1411 = vrot.slane %v1356, 1
        %v1412 = vsel %vm648, %v1409, %v1411
        %v1413 = vrot.slane %v1357, 1
        %v1414 = vrot.slane %v1358, 1
        %v1415 = vsel %vm648, %v1413, %v1414
        %v1416 = vrot.slane %v1359, 1
        %v1417 = vsel %vm648, %v1414, %v1416
        %v1418 = vrot.slane %v1360, 1
        %v1419 = vrot.slane %v1361, 1
        %v1420 = vsel %vm648, %v1418, %v1419
        %v1421 = vrot.slane %v1362, 1
        %v1422 = vsel %vm648, %v1419, %v1421
        %v1423 = vrot.slane %v1363, 1
        %v1424 = vrot.slane %v1364, 1
        %v1425 = vsel %vm648, %v1423, %v1424
        %v1426 = vrot.slane %v1365, 1
        %v1427 = vsel %vm648, %v1424, %v1426
        %v1428 = vrot.slane %v1366, 1
        %v1429 = vrot.slane %v1367, 1
        %v1430 = vsel %vm648, %v1428, %v1429
        %v1431 = vrot.slane %v1368, 1
        %v1432 = vsel %vm648, %v1429, %v1431
        %v1449 = vadd.f32 %v1325, %v1395
        %v1450 = vadd.f32 %v1326, %v1397
        %v1451 = vadd.f32 %v1327, %v1400
        %v1452 = vadd.f32 %v1328, %v1402
        %v1453 = vadd.f32 %v1329, %v1405
        %v1454 = vadd.f32 %v1330, %v1407
        %v1455 = vadd.f32 %v1331, %v1410
        %v1456 = vadd.f32 %v1332, %v1412
        %v1457 = vadd.f32 %v1333, %v1415
        %v1458 = vadd.f32 %v1334, %v1417
        %v1459 = vadd.f32 %v1335, %v1420
        %v1460 = vadd.f32 %v1336, %v1422
        %v1461 = vadd.f32 %v1337, %v1425
        %v1462 = vadd.f32 %v1338, %v1427
        %v1463 = vadd.f32 %v1339, %v1430
        %v1464 = vadd.f32 %v1340, %v1432
        %v1465 = vlaneseq
        %v1466 = vshrl.u32 %v1465, 7
        %v1467 = vsub.s32 2, %v1466
        %v1468 = vrot.slane %v337, %v1467
        %v1469 = vmul.f32 %v295, %v1468
        %v1470 = vmul.f32 %v296, %v1468
        %v1471 = vmul.f32 %v297, %v1468
        %v1472 = vmul.f32 %v298, %v1468
        %v1473 = vmul.f32 %v299, %v1468
        %v1474 = vmul.f32 %v300, %v1468
        %v1475 = vmul.f32 %v301, %v1468
        %v1476 = vmul.f32 %v302, %v1468
        %v1477 = vmul.f32 %v303, %v1468
        %v1478 = vmul.f32 %v304, %v1468
        %v1479 = vmul.f32 %v305, %v1468
        %v1480 = vmul.f32 %v306, %v1468
        %v1481 = vmul.f32 %v307, %v1468
        %v1482 = vmul.f32 %v308, %v1468
        %v1483 = vmul.f32 %v309, %v1468
        %v1484 = vmul.f32 %v310, %v1468
        %v1485 = vmul.f32 %v311, %v1468
        %v1486 = vmul.f32 %v312, %v1468
        %v1487 = vmul.f32 %v313, %v1468
        %v1488 = vmul.f32 %v314, %v1468
        %v1489 = vmul.f32 %v315, %v1468
        %v1490 = vmul.f32 %v316, %v1468
        %v1491 = vmul.f32 %v317, %v1468
        %v1492 = vmul.f32 %v318, %v1468
        %vm1517 = vcmask 1045504
        %v1518 = vrot.slane %v1469, 2
        %v1519 = vrot.slane %v1470, 2
        %v1520 = vsel %vm1517, %v1518, %v1519
        %v1521 = vrot.slane %v1471, 2
        %v1522 = vsel %vm1517, %v1519, %v1521
        %v1523 = vrot.slane %v1472, 2
        %v1524 = vrot.slane %v1473, 2
        %v1525 = vsel %vm1517, %v1523, %v1524
        %v1526 = vrot.slane %v1474, 2
        %v1527 = vsel %vm1517, %v1524, %v1526
        %v1528 = vrot.slane %v1475, 2
        %v1529 = vrot.slane %v1476, 2
        %v1530 = vsel %vm1517, %v1528, %v1529
        %v1531 = vrot.slane %v1477, 2
        %v1532 = vsel %vm1517, %v1529, %v1531
        %v1533 = vrot.slane %v1478, 2
        %v1534 = vrot.slane %v1479, 2
        %v1535 = vsel %vm1517, %v1533, %v1534
        %v1536 = vrot.slane %v1480, 2
        %v1537 = vsel %vm1517, %v1534, %v1536
        %v1538 = vrot.slane %v1481, 2
        %v1539 = vrot.slane %v1482, 2
        %v1540 = vsel %vm1517, %v1538, %v1539
        %v1541 = vrot.slane %v1483, 2
        %v1542 = vsel %vm1517, %v1539, %v1541
        %v1543 = vrot.slane %v1484, 2
        %v1544 = vrot.slane %v1485, 2
        %v1545 = vsel %vm1517, %v1543, %v1544
        %v1546 = vrot.slane %v1486, 2
        %v1547 = vsel %vm1517, %v1544, %v1546
        %v1548 = vrot.slane %v1487, 2
        %v1549 = vrot.slane %v1488, 2
        %v1550 = vsel %vm1517, %v1548, %v1549
        %v1551 = vrot.slane %v1489, 2
        %v1552 = vsel %vm1517, %v1549, %v1551
        %v1553 = vrot.slane %v1490, 2
        %v1554 = vrot.slane %v1491, 2
        %v1555 = vsel %vm1517, %v1553, %v1554
        %v1556 = vrot.slane %v1492, 2
        %v1557 = vsel %vm1517, %v1554, %v1556
        %v1574 = vadd.f32 %v1449, %v1520
        %v1575 = vadd.f32 %v1450, %v1522
        %v1576 = vadd.f32 %v1451, %v1525
        %v1577 = vadd.f32 %v1452, %v1527
        %v1578 = vadd.f32 %v1453, %v1530
        %v1579 = vadd.f32 %v1454, %v1532
        %v1580 = vadd.f32 %v1455, %v1535
        %v1581 = vadd.f32 %v1456, %v1537
        %v1582 = vadd.f32 %v1457, %v1540
        %v1583 = vadd.f32 %v1458, %v1542
        %v1584 = vadd.f32 %v1459, %v1545
        %v1585 = vadd.f32 %v1460, %v1547
        %v1586 = vadd.f32 %v1461, %v1550
        %v1587 = vadd.f32 %v1462, %v1552
        %v1588 = vadd.f32 %v1463, %v1555
        %v1589 = vadd.f32 %v1464, %v1557
        %v1590 = vlaneseq
        %v1591 = vshrl.u32 %v1590, 7
        %v1592 = vsub.s32 2, %v1591
        %v1593 = vrot.slane %v338, %v1592
        %v1594 = vmul.f32 %v298, %v1593
        %v1595 = vmul.f32 %v299, %v1593
        %v1596 = vmul.f32 %v300, %v1593
        %v1597 = vmul.f32 %v301, %v1593
        %v1598 = vmul.f32 %v302, %v1593
        %v1599 = vmul.f32 %v303, %v1593
        %v1600 = vmul.f32 %v304, %v1593
        %v1601 = vmul.f32 %v305, %v1593
        %v1602 = vmul.f32 %v306, %v1593
        %v1603 = vmul.f32 %v307, %v1593
        %v1604 = vmul.f32 %v308, %v1593
        %v1605 = vmul.f32 %v309, %v1593
        %v1606 = vmul.f32 %v310, %v1593
        %v1607 = vmul.f32 %v311, %v1593
        %v1608 = vmul.f32 %v312, %v1593
        %v1609 = vmul.f32 %v313, %v1593
        %v1610 = vmul.f32 %v314, %v1593
        %v1611 = vmul.f32 %v315, %v1593
        %v1612 = vmul.f32 %v316, %v1593
        %v1613 = vmul.f32 %v317, %v1593
        %v1614 = vmul.f32 %v318, %v1593
        %v1615 = vmul.f32 %v319, %v1593
        %v1616 = vmul.f32 %v320, %v1593
        %v1617 = vmul.f32 %v321, %v1593
        %v1642 = vrot.slane %v1594, 2
        %v1643 = vrot.slane %v1595, 2
        %v1644 = vsel %vm1517, %v1642, %v1643
        %v1645 = vrot.slane %v1596, 2
        %v1646 = vsel %vm1517, %v1643, %v1645
        %v1647 = vrot.slane %v1597, 2
        %v1648 = vrot.slane %v1598, 2
        %v1649 = vsel %vm1517, %v1647, %v1648
        %v1650 = vrot.slane %v1599, 2
        %v1651 = vsel %vm1517, %v1648, %v1650
        %v1652 = vrot.slane %v1600, 2
        %v1653 = vrot.slane %v1601, 2
        %v1654 = vsel %vm1517, %v1652, %v1653
        %v1655 = vrot.slane %v1602, 2
        %v1656 = vsel %vm1517, %v1653, %v1655
        %v1657 = vrot.slane %v1603, 2
        %v1658 = vrot.slane %v1604, 2
        %v1659 = vsel %vm1517, %v1657, %v1658
        %v1660 = vrot.slane %v1605, 2
        %v1661 = vsel %vm1517, %v1658, %v1660
        %v1662 = vrot.slane %v1606, 2
        %v1663 = vrot.slane %v1607, 2
        %v1664 = vsel %vm1517, %v1662, %v1663
        %v1665 = vrot.slane %v1608, 2
        %v1666 = vsel %vm1517, %v1663, %v1665
        %v1667 = vrot.slane %v1609, 2
        %v1668 = vrot.slane %v1610, 2
        %v1669 = vsel %vm1517, %v1667, %v1668
        %v1670 = vrot.slane %v1611, 2
        %v1671 = vsel %vm1517, %v1668, %v1670
        %v1672 = vrot.slane %v1612, 2
        %v1673 = vrot.slane %v1613, 2
        %v1674 = vsel %vm1517, %v1672, %v1673
        %v1675 = vrot.slane %v1614, 2
        %v1676 = vsel %vm1517, %v1673, %v1675
        %v1677 = vrot.slane %v1615, 2
        %v1678 = vrot.slane %v1616, 2
        %v1679 = vsel %vm1517, %v1677, %v1678
        %v1680 = vrot.slane %v1617, 2
        %v1681 = vsel %vm1517, %v1678, %v1680
        %v1698 = vadd.f32 %v1574, %v1644
        %v1699 = vadd.f32 %v1575, %v1646
        %v1700 = vadd.f32 %v1576, %v1649
        %v1701 = vadd.f32 %v1577, %v1651
        %v1702 = vadd.f32 %v1578, %v1654
        %v1703 = vadd.f32 %v1579, %v1656
        %v1704 = vadd.f32 %v1580, %v1659
        %v1705 = vadd.f32 %v1581, %v1661
        %v1706 = vadd.f32 %v1582, %v1664
        %v1707 = vadd.f32 %v1583, %v1666
        %v1708 = vadd.f32 %v1584, %v1669
        %v1709 = vadd.f32 %v1585, %v1671
        %v1710 = vadd.f32 %v1586, %v1674
        %v1711 = vadd.f32 %v1587, %v1676
        %v1712 = vadd.f32 %v1588, %v1679
        %v1713 = vadd.f32 %v1589, %v1681
        %v1714 = vlaneseq
        %v1715 = vshrl.u32 %v1714, 7
        %v1716 = vsub.s32 2, %v1715
        %v1717 = vrot.slane %v339, %v1716
        %v1718 = vmul.f32 %v301, %v1717
        %v1719 = vmul.f32 %v302, %v1717
        %v1720 = vmul.f32 %v303, %v1717
        %v1721 = vmul.f32 %v304, %v1717
        %v1722 = vmul.f32 %v305, %v1717
        %v1723 = vmul.f32 %v306, %v1717
        %v1724 = vmul.f32 %v307, %v1717
        %v1725 = vmul.f32 %v308, %v1717
        %v1726 = vmul.f32 %v309, %v1717
        %v1727 = vmul.f32 %v310, %v1717
        %v1728 = vmul.f32 %v311, %v1717
        %v1729 = vmul.f32 %v312, %v1717
        %v1730 = vmul.f32 %v313, %v1717
        %v1731 = vmul.f32 %v314, %v1717
        %v1732 = vmul.f32 %v315, %v1717
        %v1733 = vmul.f32 %v316, %v1717
        %v1734 = vmul.f32 %v317, %v1717
        %v1735 = vmul.f32 %v318, %v1717
        %v1736 = vmul.f32 %v319, %v1717
        %v1737 = vmul.f32 %v320, %v1717
        %v1738 = vmul.f32 %v321, %v1717
        %v1739 = vmul.f32 %v322, %v1717
        %v1740 = vmul.f32 %v323, %v1717
        %v1741 = vmul.f32 %v324, %v1717
        %v1766 = vrot.slane %v1718, 2
        %v1767 = vrot.slane %v1719, 2
        %v1768 = vsel %vm1517, %v1766, %v1767
        %v1769 = vrot.slane %v1720, 2
        %v1770 = vsel %vm1517, %v1767, %v1769
        %v1771 = vrot.slane %v1721, 2
        %v1772 = vrot.slane %v1722, 2
        %v1773 = vsel %vm1517, %v1771, %v1772
        %v1774 = vrot.slane %v1723, 2
        %v1775 = vsel %vm1517, %v1772, %v1774
        %v1776 = vrot.slane %v1724, 2
        %v1777 = vrot.slane %v1725, 2
        %v1778 = vsel %vm1517, %v1776, %v1777
        %v1779 = vrot.slane %v1726, 2
        %v1780 = vsel %vm1517, %v1777, %v1779
        %v1781 = vrot.slane %v1727, 2
        %v1782 = vrot.slane %v1728, 2
        %v1783 = vsel %vm1517, %v1781, %v1782
        %v1784 = vrot.slane %v1729, 2
        %v1785 = vsel %vm1517, %v1782, %v1784
        %v1786 = vrot.slane %v1730, 2
        %v1787 = vrot.slane %v1731, 2
        %v1788 = vsel %vm1517, %v1786, %v1787
        %v1789 = vrot.slane %v1732, 2
        %v1790 = vsel %vm1517, %v1787, %v1789
        %v1791 = vrot.slane %v1733, 2
        %v1792 = vrot.slane %v1734, 2
        %v1793 = vsel %vm1517, %v1791, %v1792
        %v1794 = vrot.slane %v1735, 2
        %v1795 = vsel %vm1517, %v1792, %v1794
        %v1796 = vrot.slane %v1736, 2
        %v1797 = vrot.slane %v1737, 2
        %v1798 = vsel %vm1517, %v1796, %v1797
        %v1799 = vrot.slane %v1738, 2
        %v1800 = vsel %vm1517, %v1797, %v1799
        %v1801 = vrot.slane %v1739, 2
        %v1802 = vrot.slane %v1740, 2
        %v1803 = vsel %vm1517, %v1801, %v1802
        %v1804 = vrot.slane %v1741, 2
        %v1805 = vsel %vm1517, %v1802, %v1804
        %v1822 = vadd.f32 %v1698, %v1768
        %v1823 = vadd.f32 %v1699, %v1770
        %v1824 = vadd.f32 %v1700, %v1773
        %v1825 = vadd.f32 %v1701, %v1775
        %v1826 = vadd.f32 %v1702, %v1778
        %v1827 = vadd.f32 %v1703, %v1780
        %v1828 = vadd.f32 %v1704, %v1783
        %v1829 = vadd.f32 %v1705, %v1785
        %v1830 = vadd.f32 %v1706, %v1788
        %v1831 = vadd.f32 %v1707, %v1790
        %v1832 = vadd.f32 %v1708, %v1793
        %v1833 = vadd.f32 %v1709, %v1795
        %v1834 = vadd.f32 %v1710, %v1798
        %v1835 = vadd.f32 %v1711, %v1800
        %v1836 = vadd.f32 %v1712, %v1803
        %v1837 = vadd.f32 %v1713, %v1805
        %v1838 = vlaneseq
        %v1839 = vshrl.u32 %v1838, 7
        %v1840 = vsub.s32 2, %v1839
        %v1841 = vrot.slane %v340, %v1840
        %v1842 = vmul.f32 %v304, %v1841
        %v1843 = vmul.f32 %v305, %v1841
        %v1844 = vmul.f32 %v306, %v1841
        %v1845 = vmul.f32 %v307, %v1841
        %v1846 = vmul.f32 %v308, %v1841
        %v1847 = vmul.f32 %v309, %v1841
        %v1848 = vmul.f32 %v310, %v1841
        %v1849 = vmul.f32 %v311, %v1841
        %v1850 = vmul.f32 %v312, %v1841
        %v1851 = vmul.f32 %v313, %v1841
        %v1852 = vmul.f32 %v314, %v1841
        %v1853 = vmul.f32 %v315, %v1841
        %v1854 = vmul.f32 %v316, %v1841
        %v1855 = vmul.f32 %v317, %v1841
        %v1856 = vmul.f32 %v318, %v1841
        %v1857 = vmul.f32 %v319, %v1841
        %v1858 = vmul.f32 %v320, %v1841
        %v1859 = vmul.f32 %v321, %v1841
        %v1860 = vmul.f32 %v322, %v1841
        %v1861 = vmul.f32 %v323, %v1841
        %v1862 = vmul.f32 %v324, %v1841
        %v1863 = vmul.f32 %v325, %v1841
        %v1864 = vmul.f32 %v326, %v1841
        %v1865 = vmul.f32 %v327, %v1841
        %v1890 = vrot.slane %v1842, 2
        %v1891 = vrot.slane %v1843, 2
        %v1892 = vsel %vm1517, %v1890, %v1891
        %v1893 = vrot.slane %v1844, 2
        %v1894 = vsel %vm1517, %v1891, %v1893
        %v1895 = vrot.slane %v1845, 2
        %v1896 = vrot.slane %v1846, 2
        %v1897 = vsel %vm1517, %v1895, %v1896
        %v1898 = vrot.slane %v1847, 2
        %v1899 = vsel %vm1517, %v1896, %v1898
        %v1900 = vrot.slane %v1848, 2
        %v1901 = vrot.slane %v1849, 2
        %v1902 = vsel %vm1517, %v1900, %v1901
        %v1903 = vrot.slane %v1850, 2
        %v1904 = vsel %vm1517, %v1901, %v1903
        %v1905 = vrot.slane %v1851, 2
        %v1906 = vrot.slane %v1852, 2
        %v1907 = vsel %vm1517, %v1905, %v1906
        %v1908 = vrot.slane %v1853, 2
        %v1909 = vsel %vm1517, %v1906, %v1908
        %v1910 = vrot.slane %v1854, 2
        %v1911 = vrot.slane %v1855, 2
        %v1912 = vsel %vm1517, %v1910, %v1911
        %v1913 = vrot.slane %v1856, 2
        %v1914 = vsel %vm1517, %v1911, %v1913
        %v1915 = vrot.slane %v1857, 2
        %v1916 = vrot.slane %v1858, 2
        %v1917 = vsel %vm1517, %v1915, %v1916
        %v1918 = vrot.slane %v1859, 2
        %v1919 = vsel %vm1517, %v1916, %v1918
        %v1920 = vrot.slane %v1860, 2
        %v1921 = vrot.slane %v1861, 2
        %v1922 = vsel %vm1517, %v1920, %v1921
        %v1923 = vrot.slane %v1862, 2
        %v1924 = vsel %vm1517, %v1921, %v1923
        %v1925 = vrot.slane %v1863, 2
        %v1926 = vrot.slane %v1864, 2
        %v1927 = vsel %vm1517, %v1925, %v1926
        %v1928 = vrot.slane %v1865, 2
        %v1929 = vsel %vm1517, %v1926, %v1928
        %v1946 = vadd.f32 %v1822, %v1892
        %v1947 = vadd.f32 %v1823, %v1894
        %v1948 = vadd.f32 %v1824, %v1897
        %v1949 = vadd.f32 %v1825, %v1899
        %v1950 = vadd.f32 %v1826, %v1902
        %v1951 = vadd.f32 %v1827, %v1904
        %v1952 = vadd.f32 %v1828, %v1907
        %v1953 = vadd.f32 %v1829, %v1909
        %v1954 = vadd.f32 %v1830, %v1912
        %v1955 = vadd.f32 %v1831, %v1914
        %v1956 = vadd.f32 %v1832, %v1917
        %v1957 = vadd.f32 %v1833, %v1919
        %v1958 = vadd.f32 %v1834, %v1922
        %v1959 = vadd.f32 %v1835, %v1924
        %v1960 = vadd.f32 %v1836, %v1927
        %v1961 = vadd.f32 %v1837, %v1929
        %v1962 = vlaneseq
        %v1963 = vshrl.u32 %v1962, 7
        %v1964 = vsub.s32 2, %v1963
        %v1965 = vrot.slane %v341, %v1964
        %v1966 = vmul.f32 %v307, %v1965
        %v1967 = vmul.f32 %v308, %v1965
        %v1968 = vmul.f32 %v309, %v1965
        %v1969 = vmul.f32 %v310, %v1965
        %v1970 = vmul.f32 %v311, %v1965
        %v1971 = vmul.f32 %v312, %v1965
        %v1972 = vmul.f32 %v313, %v1965
        %v1973 = vmul.f32 %v314, %v1965
        %v1974 = vmul.f32 %v315, %v1965
        %v1975 = vmul.f32 %v316, %v1965
        %v1976 = vmul.f32 %v317, %v1965
        %v1977 = vmul.f32 %v318, %v1965
        %v1978 = vmul.f32 %v319, %v1965
        %v1979 = vmul.f32 %v320, %v1965
        %v1980 = vmul.f32 %v321, %v1965
        %v1981 = vmul.f32 %v322, %v1965
        %v1982 = vmul.f32 %v323, %v1965
        %v1983 = vmul.f32 %v324, %v1965
        %v1984 = vmul.f32 %v325, %v1965
        %v1985 = vmul.f32 %v326, %v1965
        %v1986 = vmul.f32 %v327, %v1965
        %v1987 = vmul.f32 %v328, %v1965
        %v1988 = vmul.f32 %v329, %v1965
        %v1989 = vmul.f32 %v330, %v1965
        %v2014 = vrot.slane %v1966, 2
        %v2015 = vrot.slane %v1967, 2
        %v2016 = vsel %vm1517, %v2014, %v2015
        %v2017 = vrot.slane %v1968, 2
        %v2018 = vsel %vm1517, %v2015, %v2017
        %v2019 = vrot.slane %v1969, 2
        %v2020 = vrot.slane %v1970, 2
        %v2021 = vsel %vm1517, %v2019, %v2020
        %v2022 = vrot.slane %v1971, 2
        %v2023 = vsel %vm1517, %v2020, %v2022
        %v2024 = vrot.slane %v1972, 2
        %v2025 = vrot.slane %v1973, 2
        %v2026 = vsel %vm1517, %v2024, %v2025
        %v2027 = vrot.slane %v1974, 2
        %v2028 = vsel %vm1517, %v2025, %v2027
        %v2029 = vrot.slane %v1975, 2
        %v2030 = vrot.slane %v1976, 2
        %v2031 = vsel %vm1517, %v2029, %v2030
        %v2032 = vrot.slane %v1977, 2
        %v2033 = vsel %vm1517, %v2030, %v2032
        %v2034 = vrot.slane %v1978, 2
        %v2035 = vrot.slane %v1979, 2
        %v2036 = vsel %vm1517, %v2034, %v2035
        %v2037 = vrot.slane %v1980, 2
        %v2038 = vsel %vm1517, %v2035, %v2037
        %v2039 = vrot.slane %v1981, 2
        %v2040 = vrot.slane %v1982, 2
        %v2041 = vsel %vm1517, %v2039, %v2040
        %v2042 = vrot.slane %v1983, 2
        %v2043 = vsel %vm1517, %v2040, %v2042
        %v2044 = vrot.slane %v1984, 2
        %v2045 = vrot.slane %v1985, 2
        %v2046 = vsel %vm1517, %v2044, %v2045
        %v2047 = vrot.slane %v1986, 2
        %v2048 = vsel %vm1517, %v2045, %v2047
        %v2049 = vrot.slane %v1987, 2
        %v2050 = vrot.slane %v1988, 2
        %v2051 = vsel %vm1517, %v2049, %v2050
        %v2052 = vrot.slane %v1989, 2
        %v2053 = vsel %vm1517, %v2050, %v2052
        %v2070 = vadd.f32 %v1946, %v2016
        %v2071 = vadd.f32 %v1947, %v2018
        %v2072 = vadd.f32 %v1948, %v2021
        %v2073 = vadd.f32 %v1949, %v2023
        %v2074 = vadd.f32 %v1950, %v2026
        %v2075 = vadd.f32 %v1951, %v2028
        %v2076 = vadd.f32 %v1952, %v2031
        %v2077 = vadd.f32 %v1953, %v2033
        %v2078 = vadd.f32 %v1954, %v2036
        %v2079 = vadd.f32 %v1955, %v2038
        %v2080 = vadd.f32 %v1956, %v2041
        %v2081 = vadd.f32 %v1957, %v2043
        %v2082 = vadd.f32 %v1958, %v2046
        %v2083 = vadd.f32 %v1959, %v2048
        %v2084 = vadd.f32 %v1960, %v2051
        %v2085 = vadd.f32 %v1961, %v2053
        %v2086 = vlaneseq
        %v2087 = vshrl.u32 %v2086, 7
        %v2088 = vsub.s32 2, %v2087
        %v2089 = vrot.slane %v342, %v2088
        %v2090 = vmul.f32 %v310, %v2089
        %v2091 = vmul.f32 %v311, %v2089
        %v2092 = vmul.f32 %v312, %v2089
        %v2093 = vmul.f32 %v313, %v2089
        %v2094 = vmul.f32 %v314, %v2089
        %v2095 = vmul.f32 %v315, %v2089
        %v2096 = vmul.f32 %v316, %v2089
        %v2097 = vmul.f32 %v317, %v2089
        %v2098 = vmul.f32 %v318, %v2089
        %v2099 = vmul.f32 %v319, %v2089
        %v2100 = vmul.f32 %v320, %v2089
        %v2101 = vmul.f32 %v321, %v2089
        %v2102 = vmul.f32 %v322, %v2089
        %v2103 = vmul.f32 %v323, %v2089
        %v2104 = vmul.f32 %v324, %v2089
        %v2105 = vmul.f32 %v325, %v2089
        %v2106 = vmul.f32 %v326, %v2089
        %v2107 = vmul.f32 %v327, %v2089
        %v2108 = vmul.f32 %v328, %v2089
        %v2109 = vmul.f32 %v329, %v2089
        %v2110 = vmul.f32 %v330, %v2089
        %v2111 = vmul.f32 %v331, %v2089
        %v2112 = vmul.f32 %v332, %v2089
        %v2113 = vmul.f32 %v333, %v2089
        %v2138 = vrot.slane %v2090, 2
        %v2139 = vrot.slane %v2091, 2
        %v2140 = vsel %vm1517, %v2138, %v2139
        %v2141 = vrot.slane %v2092, 2
        %v2142 = vsel %vm1517, %v2139, %v2141
        %v2143 = vrot.slane %v2093, 2
        %v2144 = vrot.slane %v2094, 2
        %v2145 = vsel %vm1517, %v2143, %v2144
        %v2146 = vrot.slane %v2095, 2
        %v2147 = vsel %vm1517, %v2144, %v2146
        %v2148 = vrot.slane %v2096, 2
        %v2149 = vrot.slane %v2097, 2
        %v2150 = vsel %vm1517, %v2148, %v2149
        %v2151 = vrot.slane %v2098, 2
        %v2152 = vsel %vm1517, %v2149, %v2151
        %v2153 = vrot.slane %v2099, 2
        %v2154 = vrot.slane %v2100, 2
        %v2155 = vsel %vm1517, %v2153, %v2154
        %v2156 = vrot.slane %v2101, 2
        %v2157 = vsel %vm1517, %v2154, %v2156
        %v2158 = vrot.slane %v2102, 2
        %v2159 = vrot.slane %v2103, 2
        %v2160 = vsel %vm1517, %v2158, %v2159
        %v2161 = vrot.slane %v2104, 2
        %v2162 = vsel %vm1517, %v2159, %v2161
        %v2163 = vrot.slane %v2105, 2
        %v2164 = vrot.slane %v2106, 2
        %v2165 = vsel %vm1517, %v2163, %v2164
        %v2166 = vrot.slane %v2107, 2
        %v2167 = vsel %vm1517, %v2164, %v2166
        %v2168 = vrot.slane %v2108, 2
        %v2169 = vrot.slane %v2109, 2
        %v2170 = vsel %vm1517, %v2168, %v2169
        %v2171 = vrot.slane %v2110, 2
        %v2172 = vsel %vm1517, %v2169, %v2171
        %v2173 = vrot.slane %v2111, 2
        %v2174 = vrot.slane %v2112, 2
        %v2175 = vsel %vm1517, %v2173, %v2174
        %v2176 = vrot.slane %v2113, 2
        %v2177 = vsel %vm1517, %v2174, %v2176
        %v2194 = vadd.f32 %v2070, %v2140
        %v2195 = vadd.f32 %v2071, %v2142
        %v2196 = vadd.f32 %v2072, %v2145
        %v2197 = vadd.f32 %v2073, %v2147
        %v2198 = vadd.f32 %v2074, %v2150
        %v2199 = vadd.f32 %v2075, %v2152
        %v2200 = vadd.f32 %v2076, %v2155
        %v2201 = vadd.f32 %v2077, %v2157
        %v2202 = vadd.f32 %v2078, %v2160
        %v2203 = vadd.f32 %v2079, %v2162
        %v2204 = vadd.f32 %v2080, %v2165
        %v2205 = vadd.f32 %v2081, %v2167
        %v2206 = vadd.f32 %v2082, %v2170
        %v2207 = vadd.f32 %v2083, %v2172
        %v2208 = vadd.f32 %v2084, %v2175
        %v2209 = vadd.f32 %v2085, %v2177
        %v2210 = vlaneseq
        %v2211 = vshrl.u32 %v2210, 7
        %v2212 = vsub.s32 2, %v2211
        %v2213 = vrot.slane %v343, %v2212
        %v2214 = vmul.f32 %v313, %v2213
        %v2215 = vmul.f32 %v314, %v2213
        %v2216 = vmul.f32 %v315, %v2213
        %v2217 = vmul.f32 %v316, %v2213
        %v2218 = vmul.f32 %v317, %v2213
        %v2219 = vmul.f32 %v318, %v2213
        %v2220 = vmul.f32 %v319, %v2213
        %v2221 = vmul.f32 %v320, %v2213
        %v2222 = vmul.f32 %v321, %v2213
        %v2223 = vmul.f32 %v322, %v2213
        %v2224 = vmul.f32 %v323, %v2213
        %v2225 = vmul.f32 %v324, %v2213
        %v2226 = vmul.f32 %v325, %v2213
        %v2227 = vmul.f32 %v326, %v2213
        %v2228 = vmul.f32 %v327, %v2213
        %v2229 = vmul.f32 %v328, %v2213
        %v2230 = vmul.f32 %v329, %v2213
        %v2231 = vmul.f32 %v330, %v2213
        %v2232 = vmul.f32 %v331, %v2213
        %v2233 = vmul.f32 %v332, %v2213
        %v2234 = vmul.f32 %v333, %v2213
        %v2235 = vmul.f32 %v334, %v2213
        %v2236 = vmul.f32 %v335, %v2213
        %v2237 = vmul.f32 %v336, %v2213
        %v2262 = vrot.slane %v2214, 2
        %v2263 = vrot.slane %v2215, 2
        %v2264 = vsel %vm1517, %v2262, %v2263
        %v2265 = vrot.slane %v2216, 2
        %v2266 = vsel %vm1517, %v2263, %v2265
        %v2267 = vrot.slane %v2217, 2
        %v2268 = vrot.slane %v2218, 2
        %v2269 = vsel %vm1517, %v2267, %v2268
        %v2270 = vrot.slane %v2219, 2
        %v2271 = vsel %vm1517, %v2268, %v2270
        %v2272 = vrot.slane %v2220, 2
        %v2273 = vrot.slane %v2221, 2
        %v2274 = vsel %vm1517, %v2272, %v2273
        %v2275 = vrot.slane %v2222, 2
        %v2276 = vsel %vm1517, %v2273, %v2275
        %v2277 = vrot.slane %v2223, 2
        %v2278 = vrot.slane %v2224, 2
        %v2279 = vsel %vm1517, %v2277, %v2278
        %v2280 = vrot.slane %v2225, 2
        %v2281 = vsel %vm1517, %v2278, %v2280
        %v2282 = vrot.slane %v2226, 2
        %v2283 = vrot.slane %v2227, 2
        %v2284 = vsel %vm1517, %v2282, %v2283
        %v2285 = vrot.slane %v2228, 2
        %v2286 = vsel %vm1517, %v2283, %v2285
        %v2287 = vrot.slane %v2229, 2
        %v2288 = vrot.slane %v2230, 2
        %v2289 = vsel %vm1517, %v2287, %v2288
        %v2290 = vrot.slane %v2231, 2
        %v2291 = vsel %vm1517, %v2288, %v2290
        %v2292 = vrot.slane %v2232, 2
        %v2293 = vrot.slane %v2233, 2
        %v2294 = vsel %vm1517, %v2292, %v2293
        %v2295 = vrot.slane %v2234, 2
        %v2296 = vsel %vm1517, %v2293, %v2295
        %v2297 = vrot.slane %v2235, 2
        %v2298 = vrot.slane %v2236, 2
        %v2299 = vsel %vm1517, %v2297, %v2298
        %v2300 = vrot.slane %v2237, 2
        %v2301 = vsel %vm1517, %v2298, %v2300
        %v2318 = vadd.f32 %v2194, %v2264
        %v2319 = vadd.f32 %v2195, %v2266
        %v2320 = vadd.f32 %v2196, %v2269
        %v2321 = vadd.f32 %v2197, %v2271
        %v2322 = vadd.f32 %v2198, %v2274
        %v2323 = vadd.f32 %v2199, %v2276
        %v2324 = vadd.f32 %v2200, %v2279
        %v2325 = vadd.f32 %v2201, %v2281
        %v2326 = vadd.f32 %v2202, %v2284
        %v2327 = vadd.f32 %v2203, %v2286
        %v2328 = vadd.f32 %v2204, %v2289
        %v2329 = vadd.f32 %v2205, %v2291
        %v2330 = vadd.f32 %v2206, %v2294
        %v2331 = vadd.f32 %v2207, %v2296
        %v2332 = vadd.f32 %v2208, %v2299
        %v2333 = vadd.f32 %v2209, %v2301
        %v2334 = vlaneseq
        %v2335 = vshrl.u32 %v2334, 7
        %v2336 = vsub.s32 3, %v2335
        %v2337 = vrot.slane %v337, %v2336
        %v2338 = vmul.f32 %v295, %v2337
        %v2339 = vmul.f32 %v296, %v2337
        %v2340 = vmul.f32 %v297, %v2337
        %v2341 = vmul.f32 %v298, %v2337
        %v2342 = vmul.f32 %v299, %v2337
        %v2343 = vmul.f32 %v300, %v2337
        %v2344 = vmul.f32 %v301, %v2337
        %v2345 = vmul.f32 %v302, %v2337
        %v2346 = vmul.f32 %v303, %v2337
        %v2347 = vmul.f32 %v304, %v2337
        %v2348 = vmul.f32 %v305, %v2337
        %v2349 = vmul.f32 %v306, %v2337
        %v2350 = vmul.f32 %v307, %v2337
        %v2351 = vmul.f32 %v308, %v2337
        %v2352 = vmul.f32 %v309, %v2337
        %v2353 = vmul.f32 %v310, %v2337
        %v2354 = vmul.f32 %v311, %v2337
        %v2355 = vmul.f32 %v312, %v2337
        %v2356 = vmul.f32 %v313, %v2337
        %v2357 = vmul.f32 %v314, %v2337
        %v2358 = vmul.f32 %v315, %v2337
        %v2359 = vmul.f32 %v316, %v2337
        %v2360 = vmul.f32 %v317, %v2337
        %v2361 = vmul.f32 %v318, %v2337
        %vm2386 = vcmask 1044480
        %v2387 = vrot.slane %v2338, 3
        %v2388 = vrot.slane %v2339, 3
        %v2389 = vsel %vm2386, %v2387, %v2388
        %v2390 = vrot.slane %v2340, 3
        %v2391 = vsel %vm2386, %v2388, %v2390
        %v2392 = vrot.slane %v2341, 3
        %v2393 = vrot.slane %v2342, 3
        %v2394 = vsel %vm2386, %v2392, %v2393
        %v2395 = vrot.slane %v2343, 3
        %v2396 = vsel %vm2386, %v2393, %v2395
        %v2397 = vrot.slane %v2344, 3
        %v2398 = vrot.slane %v2345, 3
        %v2399 = vsel %vm2386, %v2397, %v2398
        %v2400 = vrot.slane %v2346, 3
        %v2401 = vsel %vm2386, %v2398, %v2400
        %v2402 = vrot.slane %v2347, 3
        %v2403 = vrot.slane %v2348, 3
        %v2404 = vsel %vm2386, %v2402, %v2403
        %v2405 = vrot.slane %v2349, 3
        %v2406 = vsel %vm2386, %v2403, %v2405
        %v2407 = vrot.slane %v2350, 3
        %v2408 = vrot.slane %v2351, 3
        %v2409 = vsel %vm2386, %v2407, %v2408
        %v2410 = vrot.slane %v2352, 3
        %v2411 = vsel %vm2386, %v2408, %v2410
        %v2412 = vrot.slane %v2353, 3
        %v2413 = vrot.slane %v2354, 3
        %v2414 = vsel %vm2386, %v2412, %v2413
        %v2415 = vrot.slane %v2355, 3
        %v2416 = vsel %vm2386, %v2413, %v2415
        %v2417 = vrot.slane %v2356, 3
        %v2418 = vrot.slane %v2357, 3
        %v2419 = vsel %vm2386, %v2417, %v2418
        %v2420 = vrot.slane %v2358, 3
        %v2421 = vsel %vm2386, %v2418, %v2420
        %v2422 = vrot.slane %v2359, 3
        %v2423 = vrot.slane %v2360, 3
        %v2424 = vsel %vm2386, %v2422, %v2423
        %v2425 = vrot.slane %v2361, 3
        %v2426 = vsel %vm2386, %v2423, %v2425
        %v2443 = vadd.f32 %v2318, %v2389
        %v2444 = vadd.f32 %v2319, %v2391
        %v2445 = vadd.f32 %v2320, %v2394
        %v2446 = vadd.f32 %v2321, %v2396
        %v2447 = vadd.f32 %v2322, %v2399
        %v2448 = vadd.f32 %v2323, %v2401
        %v2449 = vadd.f32 %v2324, %v2404
        %v2450 = vadd.f32 %v2325, %v2406
        %v2451 = vadd.f32 %v2326, %v2409
        %v2452 = vadd.f32 %v2327, %v2411
        %v2453 = vadd.f32 %v2328, %v2414
        %v2454 = vadd.f32 %v2329, %v2416
        %v2455 = vadd.f32 %v2330, %v2419
        %v2456 = vadd.f32 %v2331, %v2421
        %v2457 = vadd.f32 %v2332, %v2424
        %v2458 = vadd.f32 %v2333, %v2426
        %v2459 = vlaneseq
        %v2460 = vshrl.u32 %v2459, 7
        %v2461 = vsub.s32 3, %v2460
        %v2462 = vrot.slane %v338, %v2461
        %v2463 = vmul.f32 %v298, %v2462
        %v2464 = vmul.f32 %v299, %v2462
        %v2465 = vmul.f32 %v300, %v2462
        %v2466 = vmul.f32 %v301, %v2462
        %v2467 = vmul.f32 %v302, %v2462
        %v2468 = vmul.f32 %v303, %v2462
        %v2469 = vmul.f32 %v304, %v2462
        %v2470 = vmul.f32 %v305, %v2462
        %v2471 = vmul.f32 %v306, %v2462
        %v2472 = vmul.f32 %v307, %v2462
        %v2473 = vmul.f32 %v308, %v2462
        %v2474 = vmul.f32 %v309, %v2462
        %v2475 = vmul.f32 %v310, %v2462
        %v2476 = vmul.f32 %v311, %v2462
        %v2477 = vmul.f32 %v312, %v2462
        %v2478 = vmul.f32 %v313, %v2462
        %v2479 = vmul.f32 %v314, %v2462
        %v2480 = vmul.f32 %v315, %v2462
        %v2481 = vmul.f32 %v316, %v2462
        %v2482 = vmul.f32 %v317, %v2462
        %v2483 = vmul.f32 %v318, %v2462
        %v2484 = vmul.f32 %v319, %v2462
        %v2485 = vmul.f32 %v320, %v2462
        %v2486 = vmul.f32 %v321, %v2462
        %v2511 = vrot.slane %v2463, 3
        %v2512 = vrot.slane %v2464, 3
        %v2513 = vsel %vm2386, %v2511, %v2512
        %v2514 = vrot.slane %v2465, 3
        %v2515 = vsel %vm2386, %v2512, %v2514
        %v2516 = vrot.slane %v2466, 3
        %v2517 = vrot.slane %v2467, 3
        %v2518 = vsel %vm2386, %v2516, %v2517
        %v2519 = vrot.slane %v2468, 3
        %v2520 = vsel %vm2386, %v2517, %v2519
        %v2521 = vrot.slane %v2469, 3
        %v2522 = vrot.slane %v2470, 3
        %v2523 = vsel %vm2386, %v2521, %v2522
        %v2524 = vrot.slane %v2471, 3
        %v2525 = vsel %vm2386, %v2522, %v2524
        %v2526 = vrot.slane %v2472, 3
        %v2527 = vrot.slane %v2473, 3
        %v2528 = vsel %vm2386, %v2526, %v2527
        %v2529 = vrot.slane %v2474, 3
        %v2530 = vsel %vm2386, %v2527, %v2529
        %v2531 = vrot.slane %v2475, 3
        %v2532 = vrot.slane %v2476, 3
        %v2533 = vsel %vm2386, %v2531, %v2532
        %v2534 = vrot.slane %v2477, 3
        %v2535 = vsel %vm2386, %v2532, %v2534
        %v2536 = vrot.slane %v2478, 3
        %v2537 = vrot.slane %v2479, 3
        %v2538 = vsel %vm2386, %v2536, %v2537
        %v2539 = vrot.slane %v2480, 3
        %v2540 = vsel %vm2386, %v2537, %v2539
        %v2541 = vrot.slane %v2481, 3
        %v2542 = vrot.slane %v2482, 3
        %v2543 = vsel %vm2386, %v2541, %v2542
        %v2544 = vrot.slane %v2483, 3
        %v2545 = vsel %vm2386, %v2542, %v2544
        %v2546 = vrot.slane %v2484, 3
        %v2547 = vrot.slane %v2485, 3
        %v2548 = vsel %vm2386, %v2546, %v2547
        %v2549 = vrot.slane %v2486, 3
        %v2550 = vsel %vm2386, %v2547, %v2549
        %v2567 = vadd.f32 %v2443, %v2513
        %v2568 = vadd.f32 %v2444, %v2515
        %v2569 = vadd.f32 %v2445, %v2518
        %v2570 = vadd.f32 %v2446, %v2520
        %v2571 = vadd.f32 %v2447, %v2523
        %v2572 = vadd.f32 %v2448, %v2525
        %v2573 = vadd.f32 %v2449, %v2528
        %v2574 = vadd.f32 %v2450, %v2530
        %v2575 = vadd.f32 %v2451, %v2533
        %v2576 = vadd.f32 %v2452, %v2535
        %v2577 = vadd.f32 %v2453, %v2538
        %v2578 = vadd.f32 %v2454, %v2540
        %v2579 = vadd.f32 %v2455, %v2543
        %v2580 = vadd.f32 %v2456, %v2545
        %v2581 = vadd.f32 %v2457, %v2548
        %v2582 = vadd.f32 %v2458, %v2550
        %v2583 = vlaneseq
        %v2584 = vshrl.u32 %v2583, 7
        %v2585 = vsub.s32 3, %v2584
        %v2586 = vrot.slane %v339, %v2585
        %v2587 = vmul.f32 %v301, %v2586
        %v2588 = vmul.f32 %v302, %v2586
        %v2589 = vmul.f32 %v303, %v2586
        %v2590 = vmul.f32 %v304, %v2586
        %v2591 = vmul.f32 %v305, %v2586
        %v2592 = vmul.f32 %v306, %v2586
        %v2593 = vmul.f32 %v307, %v2586
        %v2594 = vmul.f32 %v308, %v2586
        %v2595 = vmul.f32 %v309, %v2586
        %v2596 = vmul.f32 %v310, %v2586
        %v2597 = vmul.f32 %v311, %v2586
        %v2598 = vmul.f32 %v312, %v2586
        %v2599 = vmul.f32 %v313, %v2586
        %v2600 = vmul.f32 %v314, %v2586
        %v2601 = vmul.f32 %v315, %v2586
        %v2602 = vmul.f32 %v316, %v2586
        %v2603 = vmul.f32 %v317, %v2586
        %v2604 = vmul.f32 %v318, %v2586
        %v2605 = vmul.f32 %v319, %v2586
        %v2606 = vmul.f32 %v320, %v2586
        %v2607 = vmul.f32 %v321, %v2586
        %v2608 = vmul.f32 %v322, %v2586
        %v2609 = vmul.f32 %v323, %v2586
        %v2610 = vmul.f32 %v324, %v2586
        %v2635 = vrot.slane %v2587, 3
        %v2636 = vrot.slane %v2588, 3
        %v2637 = vsel %vm2386, %v2635, %v2636
        %v2638 = vrot.slane %v2589, 3
        %v2639 = vsel %vm2386, %v2636, %v2638
        %v2640 = vrot.slane %v2590, 3
        %v2641 = vrot.slane %v2591, 3
        %v2642 = vsel %vm2386, %v2640, %v2641
        %v2643 = vrot.slane %v2592, 3
        %v2644 = vsel %vm2386, %v2641, %v2643
        %v2645 = vrot.slane %v2593, 3
        %v2646 = vrot.slane %v2594, 3
        %v2647 = vsel %vm2386, %v2645, %v2646
        %v2648 = vrot.slane %v2595, 3
        %v2649 = vsel %vm2386, %v2646, %v2648
        %v2650 = vrot.slane %v2596, 3
        %v2651 = vrot.slane %v2597, 3
        %v2652 = vsel %vm2386, %v2650, %v2651
        %v2653 = vrot.slane %v2598, 3
        %v2654 = vsel %vm2386, %v2651, %v2653
        %v2655 = vrot.slane %v2599, 3
        %v2656 = vrot.slane %v2600, 3
        %v2657 = vsel %vm2386, %v2655, %v2656
        %v2658 = vrot.slane %v2601, 3
        %v2659 = vsel %vm2386, %v2656, %v2658
        %v2660 = vrot.slane %v2602, 3
        %v2661 = vrot.slane %v2603, 3
        %v2662 = vsel %vm2386, %v2660, %v2661
        %v2663 = vrot.slane %v2604, 3
        %v2664 = vsel %vm2386, %v2661, %v2663
        %v2665 = vrot.slane %v2605, 3
        %v2666 = vrot.slane %v2606, 3
        %v2667 = vsel %vm2386, %v2665, %v2666
        %v2668 = vrot.slane %v2607, 3
        %v2669 = vsel %vm2386, %v2666, %v2668
        %v2670 = vrot.slane %v2608, 3
        %v2671 = vrot.slane %v2609, 3
        %v2672 = vsel %vm2386, %v2670, %v2671
        %v2673 = vrot.slane %v2610, 3
        %v2674 = vsel %vm2386, %v2671, %v2673
        %v2691 = vadd.f32 %v2567, %v2637
        %v2692 = vadd.f32 %v2568, %v2639
        %v2693 = vadd.f32 %v2569, %v2642
        %v2694 = vadd.f32 %v2570, %v2644
        %v2695 = vadd.f32 %v2571, %v2647
        %v2696 = vadd.f32 %v2572, %v2649
        %v2697 = vadd.f32 %v2573, %v2652
        %v2698 = vadd.f32 %v2574, %v2654
        %v2699 = vadd.f32 %v2575, %v2657
        %v2700 = vadd.f32 %v2576, %v2659
        %v2701 = vadd.f32 %v2577, %v2662
        %v2702 = vadd.f32 %v2578, %v2664
        %v2703 = vadd.f32 %v2579, %v2667
        %v2704 = vadd.f32 %v2580, %v2669
        %v2705 = vadd.f32 %v2581, %v2672
        %v2706 = vadd.f32 %v2582, %v2674
        %v2707 = vlaneseq
        %v2708 = vshrl.u32 %v2707, 7
        %v2709 = vsub.s32 3, %v2708
        %v2710 = vrot.slane %v340, %v2709
        %v2711 = vmul.f32 %v304, %v2710
        %v2712 = vmul.f32 %v305, %v2710
        %v2713 = vmul.f32 %v306, %v2710
        %v2714 = vmul.f32 %v307, %v2710
        %v2715 = vmul.f32 %v308, %v2710
        %v2716 = vmul.f32 %v309, %v2710
        %v2717 = vmul.f32 %v310, %v2710
        %v2718 = vmul.f32 %v311, %v2710
        %v2719 = vmul.f32 %v312, %v2710
        %v2720 = vmul.f32 %v313, %v2710
        %v2721 = vmul.f32 %v314, %v2710
        %v2722 = vmul.f32 %v315, %v2710
        %v2723 = vmul.f32 %v316, %v2710
        %v2724 = vmul.f32 %v317, %v2710
        %v2725 = vmul.f32 %v318, %v2710
        %v2726 = vmul.f32 %v319, %v2710
        %v2727 = vmul.f32 %v320, %v2710
        %v2728 = vmul.f32 %v321, %v2710
        %v2729 = vmul.f32 %v322, %v2710
        %v2730 = vmul.f32 %v323, %v2710
        %v2731 = vmul.f32 %v324, %v2710
        %v2732 = vmul.f32 %v325, %v2710
        %v2733 = vmul.f32 %v326, %v2710
        %v2734 = vmul.f32 %v327, %v2710
        %v2759 = vrot.slane %v2711, 3
        %v2760 = vrot.slane %v2712, 3
        %v2761 = vsel %vm2386, %v2759, %v2760
        %v2762 = vrot.slane %v2713, 3
        %v2763 = vsel %vm2386, %v2760, %v2762
        %v2764 = vrot.slane %v2714, 3
        %v2765 = vrot.slane %v2715, 3
        %v2766 = vsel %vm2386, %v2764, %v2765
        %v2767 = vrot.slane %v2716, 3
        %v2768 = vsel %vm2386, %v2765, %v2767
        %v2769 = vrot.slane %v2717, 3
        %v2770 = vrot.slane %v2718, 3
        %v2771 = vsel %vm2386, %v2769, %v2770
        %v2772 = vrot.slane %v2719, 3
        %v2773 = vsel %vm2386, %v2770, %v2772
        %v2774 = vrot.slane %v2720, 3
        %v2775 = vrot.slane %v2721, 3
        %v2776 = vsel %vm2386, %v2774, %v2775
        %v2777 = vrot.slane %v2722, 3
        %v2778 = vsel %vm2386, %v2775, %v2777
        %v2779 = vrot.slane %v2723, 3
        %v2780 = vrot.slane %v2724, 3
        %v2781 = vsel %vm2386, %v2779, %v2780
        %v2782 = vrot.slane %v2725, 3
        %v2783 = vsel %vm2386, %v2780, %v2782
        %v2784 = vrot.slane %v2726, 3
        %v2785 = vrot.slane %v2727, 3
        %v2786 = vsel %vm2386, %v2784, %v2785
        %v2787 = vrot.slane %v2728, 3
        %v2788 = vsel %vm2386, %v2785, %v2787
        %v2789 = vrot.slane %v2729, 3
        %v2790 = vrot.slane %v2730, 3
        %v2791 = vsel %vm2386, %v2789, %v2790
        %v2792 = vrot.slane %v2731, 3
        %v2793 = vsel %vm2386, %v2790, %v2792
        %v2794 = vrot.slane %v2732, 3
        %v2795 = vrot.slane %v2733, 3
        %v2796 = vsel %vm2386, %v2794, %v2795
        %v2797 = vrot.slane %v2734, 3
        %v2798 = vsel %vm2386, %v2795, %v2797
        %v2815 = vadd.f32 %v2691, %v2761
        %v2816 = vadd.f32 %v2692, %v2763
        %v2817 = vadd.f32 %v2693, %v2766
        %v2818 = vadd.f32 %v2694, %v2768
        %v2819 = vadd.f32 %v2695, %v2771
        %v2820 = vadd.f32 %v2696, %v2773
        %v2821 = vadd.f32 %v2697, %v2776
        %v2822 = vadd.f32 %v2698, %v2778
        %v2823 = vadd.f32 %v2699, %v2781
        %v2824 = vadd.f32 %v2700, %v2783
        %v2825 = vadd.f32 %v2701, %v2786
        %v2826 = vadd.f32 %v2702, %v2788
        %v2827 = vadd.f32 %v2703, %v2791
        %v2828 = vadd.f32 %v2704, %v2793
        %v2829 = vadd.f32 %v2705, %v2796
        %v2830 = vadd.f32 %v2706, %v2798
        %v2831 = vlaneseq
        %v2832 = vshrl.u32 %v2831, 7
        %v2833 = vsub.s32 3, %v2832
        %v2834 = vrot.slane %v341, %v2833
        %v2835 = vmul.f32 %v307, %v2834
        %v2836 = vmul.f32 %v308, %v2834
        %v2837 = vmul.f32 %v309, %v2834
        %v2838 = vmul.f32 %v310, %v2834
        %v2839 = vmul.f32 %v311, %v2834
        %v2840 = vmul.f32 %v312, %v2834
        %v2841 = vmul.f32 %v313, %v2834
        %v2842 = vmul.f32 %v314, %v2834
        %v2843 = vmul.f32 %v315, %v2834
        %v2844 = vmul.f32 %v316, %v2834
        %v2845 = vmul.f32 %v317, %v2834
        %v2846 = vmul.f32 %v318, %v2834
        %v2847 = vmul.f32 %v319, %v2834
        %v2848 = vmul.f32 %v320, %v2834
        %v2849 = vmul.f32 %v321, %v2834
        %v2850 = vmul.f32 %v322, %v2834
        %v2851 = vmul.f32 %v323, %v2834
        %v2852 = vmul.f32 %v324, %v2834
        %v2853 = vmul.f32 %v325, %v2834
        %v2854 = vmul.f32 %v326, %v2834
        %v2855 = vmul.f32 %v327, %v2834
        %v2856 = vmul.f32 %v328, %v2834
        %v2857 = vmul.f32 %v329, %v2834
        %v2858 = vmul.f32 %v330, %v2834
        %v2883 = vrot.slane %v2835, 3
        %v2884 = vrot.slane %v2836, 3
        %v2885 = vsel %vm2386, %v2883, %v2884
        %v2886 = vrot.slane %v2837, 3
        %v2887 = vsel %vm2386, %v2884, %v2886
        %v2888 = vrot.slane %v2838, 3
        %v2889 = vrot.slane %v2839, 3
        %v2890 = vsel %vm2386, %v2888, %v2889
        %v2891 = vrot.slane %v2840, 3
        %v2892 = vsel %vm2386, %v2889, %v2891
        %v2893 = vrot.slane %v2841, 3
        %v2894 = vrot.slane %v2842, 3
        %v2895 = vsel %vm2386, %v2893, %v2894
        %v2896 = vrot.slane %v2843, 3
        %v2897 = vsel %vm2386, %v2894, %v2896
        %v2898 = vrot.slane %v2844, 3
        %v2899 = vrot.slane %v2845, 3
        %v2900 = vsel %vm2386, %v2898, %v2899
        %v2901 = vrot.slane %v2846, 3
        %v2902 = vsel %vm2386, %v2899, %v2901
        %v2903 = vrot.slane %v2847, 3
        %v2904 = vrot.slane %v2848, 3
        %v2905 = vsel %vm2386, %v2903, %v2904
        %v2906 = vrot.slane %v2849, 3
        %v2907 = vsel %vm2386, %v2904, %v2906
        %v2908 = vrot.slane %v2850, 3
        %v2909 = vrot.slane %v2851, 3
        %v2910 = vsel %vm2386, %v2908, %v2909
        %v2911 = vrot.slane %v2852, 3
        %v2912 = vsel %vm2386, %v2909, %v2911
        %v2913 = vrot.slane %v2853, 3
        %v2914 = vrot.slane %v2854, 3
        %v2915 = vsel %vm2386, %v2913, %v2914
        %v2916 = vrot.slane %v2855, 3
        %v2917 = vsel %vm2386, %v2914, %v2916
        %v2918 = vrot.slane %v2856, 3
        %v2919 = vrot.slane %v2857, 3
        %v2920 = vsel %vm2386, %v2918, %v2919
        %v2921 = vrot.slane %v2858, 3
        %v2922 = vsel %vm2386, %v2919, %v2921
        %v2939 = vadd.f32 %v2815, %v2885
        %v2940 = vadd.f32 %v2816, %v2887
        %v2941 = vadd.f32 %v2817, %v2890
        %v2942 = vadd.f32 %v2818, %v2892
        %v2943 = vadd.f32 %v2819, %v2895
        %v2944 = vadd.f32 %v2820, %v2897
        %v2945 = vadd.f32 %v2821, %v2900
        %v2946 = vadd.f32 %v2822, %v2902
        %v2947 = vadd.f32 %v2823, %v2905
        %v2948 = vadd.f32 %v2824, %v2907
        %v2949 = vadd.f32 %v2825, %v2910
        %v2950 = vadd.f32 %v2826, %v2912
        %v2951 = vadd.f32 %v2827, %v2915
        %v2952 = vadd.f32 %v2828, %v2917
        %v2953 = vadd.f32 %v2829, %v2920
        %v2954 = vadd.f32 %v2830, %v2922
        %v2955 = vlaneseq
        %v2956 = vshrl.u32 %v2955, 7
        %v2957 = vsub.s32 3, %v2956
        %v2958 = vrot.slane %v342, %v2957
        %v2959 = vmul.f32 %v310, %v2958
        %v2960 = vmul.f32 %v311, %v2958
        %v2961 = vmul.f32 %v312, %v2958
        %v2962 = vmul.f32 %v313, %v2958
        %v2963 = vmul.f32 %v314, %v2958
        %v2964 = vmul.f32 %v315, %v2958
        %v2965 = vmul.f32 %v316, %v2958
        %v2966 = vmul.f32 %v317, %v2958
        %v2967 = vmul.f32 %v318, %v2958
        %v2968 = vmul.f32 %v319, %v2958
        %v2969 = vmul.f32 %v320, %v2958
        %v2970 = vmul.f32 %v321, %v2958
        %v2971 = vmul.f32 %v322, %v2958
        %v2972 = vmul.f32 %v323, %v2958
        %v2973 = vmul.f32 %v324, %v2958
        %v2974 = vmul.f32 %v325, %v2958
        %v2975 = vmul.f32 %v326, %v2958
        %v2976 = vmul.f32 %v327, %v2958
        %v2977 = vmul.f32 %v328, %v2958
        %v2978 = vmul.f32 %v329, %v2958
        %v2979 = vmul.f32 %v330, %v2958
        %v2980 = vmul.f32 %v331, %v2958
        %v2981 = vmul.f32 %v332, %v2958
        %v2982 = vmul.f32 %v333, %v2958
        %v3007 = vrot.slane %v2959, 3
        %v3008 = vrot.slane %v2960, 3
        %v3009 = vsel %vm2386, %v3007, %v3008
        %v3010 = vrot.slane %v2961, 3
        %v3011 = vsel %vm2386, %v3008, %v3010
        %v3012 = vrot.slane %v2962, 3
        %v3013 = vrot.slane %v2963, 3
        %v3014 = vsel %vm2386, %v3012, %v3013
        %v3015 = vrot.slane %v2964, 3
        %v3016 = vsel %vm2386, %v3013, %v3015
        %v3017 = vrot.slane %v2965, 3
        %v3018 = vrot.slane %v2966, 3
        %v3019 = vsel %vm2386, %v3017, %v3018
        %v3020 = vrot.slane %v2967, 3
        %v3021 = vsel %vm2386, %v3018, %v3020
        %v3022 = vrot.slane %v2968, 3
        %v3023 = vrot.slane %v2969, 3
        %v3024 = vsel %vm2386, %v3022, %v3023
        %v3025 = vrot.slane %v2970, 3
        %v3026 = vsel %vm2386, %v3023, %v3025
        %v3027 = vrot.slane %v2971, 3
        %v3028 = vrot.slane %v2972, 3
        %v3029 = vsel %vm2386, %v3027, %v3028
        %v3030 = vrot.slane %v2973, 3
        %v3031 = vsel %vm2386, %v3028, %v3030
        %v3032 = vrot.slane %v2974, 3
        %v3033 = vrot.slane %v2975, 3
        %v3034 = vsel %vm2386, %v3032, %v3033
        %v3035 = vrot.slane %v2976, 3
        %v3036 = vsel %vm2386, %v3033, %v3035
        %v3037 = vrot.slane %v2977, 3
        %v3038 = vrot.slane %v2978, 3
        %v3039 = vsel %vm2386, %v3037, %v3038
        %v3040 = vrot.slane %v2979, 3
        %v3041 = vsel %vm2386, %v3038, %v3040
        %v3042 = vrot.slane %v2980, 3
        %v3043 = vrot.slane %v2981, 3
        %v3044 = vsel %vm2386, %v3042, %v3043
        %v3045 = vrot.slane %v2982, 3
        %v3046 = vsel %vm2386, %v3043, %v3045
        %v3063 = vadd.f32 %v2939, %v3009
        %v3064 = vadd.f32 %v2940, %v3011
        %v3065 = vadd.f32 %v2941, %v3014
        %v3066 = vadd.f32 %v2942, %v3016
        %v3067 = vadd.f32 %v2943, %v3019
        %v3068 = vadd.f32 %v2944, %v3021
        %v3069 = vadd.f32 %v2945, %v3024
        %v3070 = vadd.f32 %v2946, %v3026
        %v3071 = vadd.f32 %v2947, %v3029
        %v3072 = vadd.f32 %v2948, %v3031
        %v3073 = vadd.f32 %v2949, %v3034
        %v3074 = vadd.f32 %v2950, %v3036
        %v3075 = vadd.f32 %v2951, %v3039
        %v3076 = vadd.f32 %v2952, %v3041
        %v3077 = vadd.f32 %v2953, %v3044
        %v3078 = vadd.f32 %v2954, %v3046
        %v3079 = vlaneseq
        %v3080 = vshrl.u32 %v3079, 7
        %v3081 = vsub.s32 3, %v3080
        %v3082 = vrot.slane %v343, %v3081
        %v3083 = vmul.f32 %v313, %v3082
        %v3084 = vmul.f32 %v314, %v3082
        %v3085 = vmul.f32 %v315, %v3082
        %v3086 = vmul.f32 %v316, %v3082
        %v3087 = vmul.f32 %v317, %v3082
        %v3088 = vmul.f32 %v318, %v3082
        %v3089 = vmul.f32 %v319, %v3082
        %v3090 = vmul.f32 %v320, %v3082
        %v3091 = vmul.f32 %v321, %v3082
        %v3092 = vmul.f32 %v322, %v3082
        %v3093 = vmul.f32 %v323, %v3082
        %v3094 = vmul.f32 %v324, %v3082
        %v3095 = vmul.f32 %v325, %v3082
        %v3096 = vmul.f32 %v326, %v3082
        %v3097 = vmul.f32 %v327, %v3082
        %v3098 = vmul.f32 %v328, %v3082
        %v3099 = vmul.f32 %v329, %v3082
        %v3100 = vmul.f32 %v330, %v3082
        %v3101 = vmul.f32 %v331, %v3082
        %v3102 = vmul.f32 %v332, %v3082
        %v3103 = vmul.f32 %v333, %v3082
        %v3104 = vmul.f32 %v334, %v3082
        %v3105 = vmul.f32 %v335, %v3082
        %v3106 = vmul.f32 %v336, %v3082
        %v3131 = vrot.slane %v3083, 3
        %v3132 = vrot.slane %v3084, 3
        %v3133 = vsel %vm2386, %v3131, %v3132
        %v3134 = vrot.slane %v3085, 3
        %v3135 = vsel %vm2386, %v3132, %v3134
        %v3136 = vrot.slane %v3086, 3
        %v3137 = vrot.slane %v3087, 3
        %v3138 = vsel %vm2386, %v3136, %v3137
        %v3139 = vrot.slane %v3088, 3
        %v3140 = vsel %vm2386, %v3137, %v3139
        %v3141 = vrot.slane %v3089, 3
        %v3142 = vrot.slane %v3090, 3
        %v3143 = vsel %vm2386, %v3141, %v3142
        %v3144 = vrot.slane %v3091, 3
        %v3145 = vsel %vm2386, %v3142, %v3144
        %v3146 = vrot.slane %v3092, 3
        %v3147 = vrot.slane %v3093, 3
        %v3148 = vsel %vm2386, %v3146, %v3147
        %v3149 = vrot.slane %v3094, 3
        %v3150 = vsel %vm2386, %v3147, %v3149
        %v3151 = vrot.slane %v3095, 3
        %v3152 = vrot.slane %v3096, 3
        %v3153 = vsel %vm2386, %v3151, %v3152
        %v3154 = vrot.slane %v3097, 3
        %v3155 = vsel %vm2386, %v3152, %v3154
        %v3156 = vrot.slane %v3098, 3
        %v3157 = vrot.slane %v3099, 3
        %v3158 = vsel %vm2386, %v3156, %v3157
        %v3159 = vrot.slane %v3100, 3
        %v3160 = vsel %vm2386, %v3157, %v3159
        %v3161 = vrot.slane %v3101, 3
        %v3162 = vrot.slane %v3102, 3
        %v3163 = vsel %vm2386, %v3161, %v3162
        %v3164 = vrot.slane %v3103, 3
        %v3165 = vsel %vm2386, %v3162, %v3164
        %v3166 = vrot.slane %v3104, 3
        %v3167 = vrot.slane %v3105, 3
        %v3168 = vsel %vm2386, %v3166, %v3167
        %v3169 = vrot.slane %v3106, 3
        %v3170 = vsel %vm2386, %v3167, %v3169
        %v3187 = vadd.f32 %v3063, %v3133
        %v3188 = vadd.f32 %v3064, %v3135
        %v3189 = vadd.f32 %v3065, %v3138
        %v3190 = vadd.f32 %v3066, %v3140
        %v3191 = vadd.f32 %v3067, %v3143
        %v3192 = vadd.f32 %v3068, %v3145
        %v3193 = vadd.f32 %v3069, %v3148
        %v3194 = vadd.f32 %v3070, %v3150
        %v3195 = vadd.f32 %v3071, %v3153
        %v3196 = vadd.f32 %v3072, %v3155
        %v3197 = vadd.f32 %v3073, %v3158
        %v3198 = vadd.f32 %v3074, %v3160
        %v3199 = vadd.f32 %v3075, %v3163
        %v3200 = vadd.f32 %v3076, %v3165
        %v3201 = vadd.f32 %v3077, %v3168
        %v3202 = vadd.f32 %v3078, %v3170
        %v3203 = vlaneseq
        %v3204 = vshrl.u32 %v3203, 7
        %v3205 = vsub.s32 4, %v3204
        %v3206 = vrot.slane %v337, %v3205
        %v3207 = vmul.f32 %v295, %v3206
        %v3208 = vmul.f32 %v296, %v3206
        %v3209 = vmul.f32 %v297, %v3206
        %v3210 = vmul.f32 %v298, %v3206
        %v3211 = vmul.f32 %v299, %v3206
        %v3212 = vmul.f32 %v300, %v3206
        %v3213 = vmul.f32 %v301, %v3206
        %v3214 = vmul.f32 %v302, %v3206
        %v3215 = vmul.f32 %v303, %v3206
        %v3216 = vmul.f32 %v304, %v3206
        %v3217 = vmul.f32 %v305, %v3206
        %v3218 = vmul.f32 %v306, %v3206
        %v3219 = vmul.f32 %v307, %v3206
        %v3220 = vmul.f32 %v308, %v3206
        %v3221 = vmul.f32 %v309, %v3206
        %v3222 = vmul.f32 %v310, %v3206
        %v3223 = vmul.f32 %v311, %v3206
        %v3224 = vmul.f32 %v312, %v3206
        %v3225 = vmul.f32 %v313, %v3206
        %v3226 = vmul.f32 %v314, %v3206
        %v3227 = vmul.f32 %v315, %v3206
        %v3228 = vmul.f32 %v316, %v3206
        %v3229 = vmul.f32 %v317, %v3206
        %v3230 = vmul.f32 %v318, %v3206
        %vm3255 = vcmask 1043456
        %v3256 = vrot.slane %v3207, 4
        %v3257 = vrot.slane %v3208, 4
        %v3258 = vsel %vm3255, %v3256, %v3257
        %v3259 = vrot.slane %v3209, 4
        %v3260 = vsel %vm3255, %v3257, %v3259
        %v3261 = vrot.slane %v3210, 4
        %v3262 = vrot.slane %v3211, 4
        %v3263 = vsel %vm3255, %v3261, %v3262
        %v3264 = vrot.slane %v3212, 4
        %v3265 = vsel %vm3255, %v3262, %v3264
        %v3266 = vrot.slane %v3213, 4
        %v3267 = vrot.slane %v3214, 4
        %v3268 = vsel %vm3255, %v3266, %v3267
        %v3269 = vrot.slane %v3215, 4
        %v3270 = vsel %vm3255, %v3267, %v3269
        %v3271 = vrot.slane %v3216, 4
        %v3272 = vrot.slane %v3217, 4
        %v3273 = vsel %vm3255, %v3271, %v3272
        %v3274 = vrot.slane %v3218, 4
        %v3275 = vsel %vm3255, %v3272, %v3274
        %v3276 = vrot.slane %v3219, 4
        %v3277 = vrot.slane %v3220, 4
        %v3278 = vsel %vm3255, %v3276, %v3277
        %v3279 = vrot.slane %v3221, 4
        %v3280 = vsel %vm3255, %v3277, %v3279
        %v3281 = vrot.slane %v3222, 4
        %v3282 = vrot.slane %v3223, 4
        %v3283 = vsel %vm3255, %v3281, %v3282
        %v3284 = vrot.slane %v3224, 4
        %v3285 = vsel %vm3255, %v3282, %v3284
        %v3286 = vrot.slane %v3225, 4
        %v3287 = vrot.slane %v3226, 4
        %v3288 = vsel %vm3255, %v3286, %v3287
        %v3289 = vrot.slane %v3227, 4
        %v3290 = vsel %vm3255, %v3287, %v3289
        %v3291 = vrot.slane %v3228, 4
        %v3292 = vrot.slane %v3229, 4
        %v3293 = vsel %vm3255, %v3291, %v3292
        %v3294 = vrot.slane %v3230, 4
        %v3295 = vsel %vm3255, %v3292, %v3294
        %v3312 = vadd.f32 %v3187, %v3258
        %v3313 = vadd.f32 %v3188, %v3260
        %v3314 = vadd.f32 %v3189, %v3263
        %v3315 = vadd.f32 %v3190, %v3265
        %v3316 = vadd.f32 %v3191, %v3268
        %v3317 = vadd.f32 %v3192, %v3270
        %v3318 = vadd.f32 %v3193, %v3273
        %v3319 = vadd.f32 %v3194, %v3275
        %v3320 = vadd.f32 %v3195, %v3278
        %v3321 = vadd.f32 %v3196, %v3280
        %v3322 = vadd.f32 %v3197, %v3283
        %v3323 = vadd.f32 %v3198, %v3285
        %v3324 = vadd.f32 %v3199, %v3288
        %v3325 = vadd.f32 %v3200, %v3290
        %v3326 = vadd.f32 %v3201, %v3293
        %v3327 = vadd.f32 %v3202, %v3295
        %v3328 = vlaneseq
        %v3329 = vshrl.u32 %v3328, 7
        %v3330 = vsub.s32 4, %v3329
        %v3331 = vrot.slane %v338, %v3330
        %v3332 = vmul.f32 %v298, %v3331
        %v3333 = vmul.f32 %v299, %v3331
        %v3334 = vmul.f32 %v300, %v3331
        %v3335 = vmul.f32 %v301, %v3331
        %v3336 = vmul.f32 %v302, %v3331
        %v3337 = vmul.f32 %v303, %v3331
        %v3338 = vmul.f32 %v304, %v3331
        %v3339 = vmul.f32 %v305, %v3331
        %v3340 = vmul.f32 %v306, %v3331
        %v3341 = vmul.f32 %v307, %v3331
        %v3342 = vmul.f32 %v308, %v3331
        %v3343 = vmul.f32 %v309, %v3331
        %v3344 = vmul.f32 %v310, %v3331
        %v3345 = vmul.f32 %v311, %v3331
        %v3346 = vmul.f32 %v312, %v3331
        %v3347 = vmul.f32 %v313, %v3331
        %v3348 = vmul.f32 %v314, %v3331
        %v3349 = vmul.f32 %v315, %v3331
        %v3350 = vmul.f32 %v316, %v3331
        %v3351 = vmul.f32 %v317, %v3331
        %v3352 = vmul.f32 %v318, %v3331
        %v3353 = vmul.f32 %v319, %v3331
        %v3354 = vmul.f32 %v320, %v3331
        %v3355 = vmul.f32 %v321, %v3331
        %v3380 = vrot.slane %v3332, 4
        %v3381 = vrot.slane %v3333, 4
        %v3382 = vsel %vm3255, %v3380, %v3381
        %v3383 = vrot.slane %v3334, 4
        %v3384 = vsel %vm3255, %v3381, %v3383
        %v3385 = vrot.slane %v3335, 4
        %v3386 = vrot.slane %v3336, 4
        %v3387 = vsel %vm3255, %v3385, %v3386
        %v3388 = vrot.slane %v3337, 4
        %v3389 = vsel %vm3255, %v3386, %v3388
        %v3390 = vrot.slane %v3338, 4
        %v3391 = vrot.slane %v3339, 4
        %v3392 = vsel %vm3255, %v3390, %v3391
        %v3393 = vrot.slane %v3340, 4
        %v3394 = vsel %vm3255, %v3391, %v3393
        %v3395 = vrot.slane %v3341, 4
        %v3396 = vrot.slane %v3342, 4
        %v3397 = vsel %vm3255, %v3395, %v3396
        %v3398 = vrot.slane %v3343, 4
        %v3399 = vsel %vm3255, %v3396, %v3398
        %v3400 = vrot.slane %v3344, 4
        %v3401 = vrot.slane %v3345, 4
        %v3402 = vsel %vm3255, %v3400, %v3401
        %v3403 = vrot.slane %v3346, 4
        %v3404 = vsel %vm3255, %v3401, %v3403
        %v3405 = vrot.slane %v3347, 4
        %v3406 = vrot.slane %v3348, 4
        %v3407 = vsel %vm3255, %v3405, %v3406
        %v3408 = vrot.slane %v3349, 4
        %v3409 = vsel %vm3255, %v3406, %v3408
        %v3410 = vrot.slane %v3350, 4
        %v3411 = vrot.slane %v3351, 4
        %v3412 = vsel %vm3255, %v3410, %v3411
        %v3413 = vrot.slane %v3352, 4
        %v3414 = vsel %vm3255, %v3411, %v3413
        %v3415 = vrot.slane %v3353, 4
        %v3416 = vrot.slane %v3354, 4
        %v3417 = vsel %vm3255, %v3415, %v3416
        %v3418 = vrot.slane %v3355, 4
        %v3419 = vsel %vm3255, %v3416, %v3418
        %v3436 = vadd.f32 %v3312, %v3382
        %v3437 = vadd.f32 %v3313, %v3384
        %v3438 = vadd.f32 %v3314, %v3387
        %v3439 = vadd.f32 %v3315, %v3389
        %v3440 = vadd.f32 %v3316, %v3392
        %v3441 = vadd.f32 %v3317, %v3394
        %v3442 = vadd.f32 %v3318, %v3397
        %v3443 = vadd.f32 %v3319, %v3399
        %v3444 = vadd.f32 %v3320, %v3402
        %v3445 = vadd.f32 %v3321, %v3404
        %v3446 = vadd.f32 %v3322, %v3407
        %v3447 = vadd.f32 %v3323, %v3409
        %v3448 = vadd.f32 %v3324, %v3412
        %v3449 = vadd.f32 %v3325, %v3414
        %v3450 = vadd.f32 %v3326, %v3417
        %v3451 = vadd.f32 %v3327, %v3419
        %v3452 = vlaneseq
        %v3453 = vshrl.u32 %v3452, 7
        %v3454 = vsub.s32 4, %v3453
        %v3455 = vrot.slane %v339, %v3454
        %v3456 = vmul.f32 %v301, %v3455
        %v3457 = vmul.f32 %v302, %v3455
        %v3458 = vmul.f32 %v303, %v3455
        %v3459 = vmul.f32 %v304, %v3455
        %v3460 = vmul.f32 %v305, %v3455
        %v3461 = vmul.f32 %v306, %v3455
        %v3462 = vmul.f32 %v307, %v3455
        %v3463 = vmul.f32 %v308, %v3455
        %v3464 = vmul.f32 %v309, %v3455
        %v3465 = vmul.f32 %v310, %v3455
        %v3466 = vmul.f32 %v311, %v3455
        %v3467 = vmul.f32 %v312, %v3455
        %v3468 = vmul.f32 %v313, %v3455
        %v3469 = vmul.f32 %v314, %v3455
        %v3470 = vmul.f32 %v315, %v3455
        %v3471 = vmul.f32 %v316, %v3455
        %v3472 = vmul.f32 %v317, %v3455
        %v3473 = vmul.f32 %v318, %v3455
        %v3474 = vmul.f32 %v319, %v3455
        %v3475 = vmul.f32 %v320, %v3455
        %v3476 = vmul.f32 %v321, %v3455
        %v3477 = vmul.f32 %v322, %v3455
        %v3478 = vmul.f32 %v323, %v3455
        %v3479 = vmul.f32 %v324, %v3455
        %v3504 = vrot.slane %v3456, 4
        %v3505 = vrot.slane %v3457, 4
        %v3506 = vsel %vm3255, %v3504, %v3505
        %v3507 = vrot.slane %v3458, 4
        %v3508 = vsel %vm3255, %v3505, %v3507
        %v3509 = vrot.slane %v3459, 4
        %v3510 = vrot.slane %v3460, 4
        %v3511 = vsel %vm3255, %v3509, %v3510
        %v3512 = vrot.slane %v3461, 4
        %v3513 = vsel %vm3255, %v3510, %v3512
        %v3514 = vrot.slane %v3462, 4
        %v3515 = vrot.slane %v3463, 4
        %v3516 = vsel %vm3255, %v3514, %v3515
        %v3517 = vrot.slane %v3464, 4
        %v3518 = vsel %vm3255, %v3515, %v3517
        %v3519 = vrot.slane %v3465, 4
        %v3520 = vrot.slane %v3466, 4
        %v3521 = vsel %vm3255, %v3519, %v3520
        %v3522 = vrot.slane %v3467, 4
        %v3523 = vsel %vm3255, %v3520, %v3522
        %v3524 = vrot.slane %v3468, 4
        %v3525 = vrot.slane %v3469, 4
        %v3526 = vsel %vm3255, %v3524, %v3525
        %v3527 = vrot.slane %v3470, 4
        %v3528 = vsel %vm3255, %v3525, %v3527
        %v3529 = vrot.slane %v3471, 4
        %v3530 = vrot.slane %v3472, 4
        %v3531 = vsel %vm3255, %v3529, %v3530
        %v3532 = vrot.slane %v3473, 4
        %v3533 = vsel %vm3255, %v3530, %v3532
        %v3534 = vrot.slane %v3474, 4
        %v3535 = vrot.slane %v3475, 4
        %v3536 = vsel %vm3255, %v3534, %v3535
        %v3537 = vrot.slane %v3476, 4
        %v3538 = vsel %vm3255, %v3535, %v3537
        %v3539 = vrot.slane %v3477, 4
        %v3540 = vrot.slane %v3478, 4
        %v3541 = vsel %vm3255, %v3539, %v3540
        %v3542 = vrot.slane %v3479, 4
        %v3543 = vsel %vm3255, %v3540, %v3542
        %v3560 = vadd.f32 %v3436, %v3506
        %v3561 = vadd.f32 %v3437, %v3508
        %v3562 = vadd.f32 %v3438, %v3511
        %v3563 = vadd.f32 %v3439, %v3513
        %v3564 = vadd.f32 %v3440, %v3516
        %v3565 = vadd.f32 %v3441, %v3518
        %v3566 = vadd.f32 %v3442, %v3521
        %v3567 = vadd.f32 %v3443, %v3523
        %v3568 = vadd.f32 %v3444, %v3526
        %v3569 = vadd.f32 %v3445, %v3528
        %v3570 = vadd.f32 %v3446, %v3531
        %v3571 = vadd.f32 %v3447, %v3533
        %v3572 = vadd.f32 %v3448, %v3536
        %v3573 = vadd.f32 %v3449, %v3538
        %v3574 = vadd.f32 %v3450, %v3541
        %v3575 = vadd.f32 %v3451, %v3543
        %v3576 = vlaneseq
        %v3577 = vshrl.u32 %v3576, 7
        %v3578 = vsub.s32 4, %v3577
        %v3579 = vrot.slane %v340, %v3578
        %v3580 = vmul.f32 %v304, %v3579
        %v3581 = vmul.f32 %v305, %v3579
        %v3582 = vmul.f32 %v306, %v3579
        %v3583 = vmul.f32 %v307, %v3579
        %v3584 = vmul.f32 %v308, %v3579
        %v3585 = vmul.f32 %v309, %v3579
        %v3586 = vmul.f32 %v310, %v3579
        %v3587 = vmul.f32 %v311, %v3579
        %v3588 = vmul.f32 %v312, %v3579
        %v3589 = vmul.f32 %v313, %v3579
        %v3590 = vmul.f32 %v314, %v3579
        %v3591 = vmul.f32 %v315, %v3579
        %v3592 = vmul.f32 %v316, %v3579
        %v3593 = vmul.f32 %v317, %v3579
        %v3594 = vmul.f32 %v318, %v3579
        %v3595 = vmul.f32 %v319, %v3579
        %v3596 = vmul.f32 %v320, %v3579
        %v3597 = vmul.f32 %v321, %v3579
        %v3598 = vmul.f32 %v322, %v3579
        %v3599 = vmul.f32 %v323, %v3579
        %v3600 = vmul.f32 %v324, %v3579
        %v3601 = vmul.f32 %v325, %v3579
        %v3602 = vmul.f32 %v326, %v3579
        %v3603 = vmul.f32 %v327, %v3579
        %v3628 = vrot.slane %v3580, 4
        %v3629 = vrot.slane %v3581, 4
        %v3630 = vsel %vm3255, %v3628, %v3629
        %v3631 = vrot.slane %v3582, 4
        %v3632 = vsel %vm3255, %v3629, %v3631
        %v3633 = vrot.slane %v3583, 4
        %v3634 = vrot.slane %v3584, 4
        %v3635 = vsel %vm3255, %v3633, %v3634
        %v3636 = vrot.slane %v3585, 4
        %v3637 = vsel %vm3255, %v3634, %v3636
        %v3638 = vrot.slane %v3586, 4
        %v3639 = vrot.slane %v3587, 4
        %v3640 = vsel %vm3255, %v3638, %v3639
        %v3641 = vrot.slane %v3588, 4
        %v3642 = vsel %vm3255, %v3639, %v3641
        %v3643 = vrot.slane %v3589, 4
        %v3644 = vrot.slane %v3590, 4
        %v3645 = vsel %vm3255, %v3643, %v3644
        %v3646 = vrot.slane %v3591, 4
        %v3647 = vsel %vm3255, %v3644, %v3646
        %v3648 = vrot.slane %v3592, 4
        %v3649 = vrot.slane %v3593, 4
        %v3650 = vsel %vm3255, %v3648, %v3649
        %v3651 = vrot.slane %v3594, 4
        %v3652 = vsel %vm3255, %v3649, %v3651
        %v3653 = vrot.slane %v3595, 4
        %v3654 = vrot.slane %v3596, 4
        %v3655 = vsel %vm3255, %v3653, %v3654
        %v3656 = vrot.slane %v3597, 4
        %v3657 = vsel %vm3255, %v3654, %v3656
        %v3658 = vrot.slane %v3598, 4
        %v3659 = vrot.slane %v3599, 4
        %v3660 = vsel %vm3255, %v3658, %v3659
        %v3661 = vrot.slane %v3600, 4
        %v3662 = vsel %vm3255, %v3659, %v3661
        %v3663 = vrot.slane %v3601, 4
        %v3664 = vrot.slane %v3602, 4
        %v3665 = vsel %vm3255, %v3663, %v3664
        %v3666 = vrot.slane %v3603, 4
        %v3667 = vsel %vm3255, %v3664, %v3666
        %v3684 = vadd.f32 %v3560, %v3630
        %v3685 = vadd.f32 %v3561, %v3632
        %v3686 = vadd.f32 %v3562, %v3635
        %v3687 = vadd.f32 %v3563, %v3637
        %v3688 = vadd.f32 %v3564, %v3640
        %v3689 = vadd.f32 %v3565, %v3642
        %v3690 = vadd.f32 %v3566, %v3645
        %v3691 = vadd.f32 %v3567, %v3647
        %v3692 = vadd.f32 %v3568, %v3650
        %v3693 = vadd.f32 %v3569, %v3652
        %v3694 = vadd.f32 %v3570, %v3655
        %v3695 = vadd.f32 %v3571, %v3657
        %v3696 = vadd.f32 %v3572, %v3660
        %v3697 = vadd.f32 %v3573, %v3662
        %v3698 = vadd.f32 %v3574, %v3665
        %v3699 = vadd.f32 %v3575, %v3667
        %v3700 = vlaneseq
        %v3701 = vshrl.u32 %v3700, 7
        %v3702 = vsub.s32 4, %v3701
        %v3703 = vrot.slane %v341, %v3702
        %v3704 = vmul.f32 %v307, %v3703
        %v3705 = vmul.f32 %v308, %v3703
        %v3706 = vmul.f32 %v309, %v3703
        %v3707 = vmul.f32 %v310, %v3703
        %v3708 = vmul.f32 %v311, %v3703
        %v3709 = vmul.f32 %v312, %v3703
        %v3710 = vmul.f32 %v313, %v3703
        %v3711 = vmul.f32 %v314, %v3703
        %v3712 = vmul.f32 %v315, %v3703
        %v3713 = vmul.f32 %v316, %v3703
        %v3714 = vmul.f32 %v317, %v3703
        %v3715 = vmul.f32 %v318, %v3703
        %v3716 = vmul.f32 %v319, %v3703
        %v3717 = vmul.f32 %v320, %v3703
        %v3718 = vmul.f32 %v321, %v3703
        %v3719 = vmul.f32 %v322, %v3703
        %v3720 = vmul.f32 %v323, %v3703
        %v3721 = vmul.f32 %v324, %v3703
        %v3722 = vmul.f32 %v325, %v3703
        %v3723 = vmul.f32 %v326, %v3703
        %v3724 = vmul.f32 %v327, %v3703
        %v3725 = vmul.f32 %v328, %v3703
        %v3726 = vmul.f32 %v329, %v3703
        %v3727 = vmul.f32 %v330, %v3703
        %v3752 = vrot.slane %v3704, 4
        %v3753 = vrot.slane %v3705, 4
        %v3754 = vsel %vm3255, %v3752, %v3753
        %v3755 = vrot.slane %v3706, 4
        %v3756 = vsel %vm3255, %v3753, %v3755
        %v3757 = vrot.slane %v3707, 4
        %v3758 = vrot.slane %v3708, 4
        %v3759 = vsel %vm3255, %v3757, %v3758
        %v3760 = vrot.slane %v3709, 4
        %v3761 = vsel %vm3255, %v3758, %v3760
        %v3762 = vrot.slane %v3710, 4
        %v3763 = vrot.slane %v3711, 4
        %v3764 = vsel %vm3255, %v3762, %v3763
        %v3765 = vrot.slane %v3712, 4
        %v3766 = vsel %vm3255, %v3763, %v3765
        %v3767 = vrot.slane %v3713, 4
        %v3768 = vrot.slane %v3714, 4
        %v3769 = vsel %vm3255, %v3767, %v3768
        %v3770 = vrot.slane %v3715, 4
        %v3771 = vsel %vm3255, %v3768, %v3770
        %v3772 = vrot.slane %v3716, 4
        %v3773 = vrot.slane %v3717, 4
        %v3774 = vsel %vm3255, %v3772, %v3773
        %v3775 = vrot.slane %v3718, 4
        %v3776 = vsel %vm3255, %v3773, %v3775
        %v3777 = vrot.slane %v3719, 4
        %v3778 = vrot.slane %v3720, 4
        %v3779 = vsel %vm3255, %v3777, %v3778
        %v3780 = vrot.slane %v3721, 4
        %v3781 = vsel %vm3255, %v3778, %v3780
        %v3782 = vrot.slane %v3722, 4
        %v3783 = vrot.slane %v3723, 4
        %v3784 = vsel %vm3255, %v3782, %v3783
        %v3785 = vrot.slane %v3724, 4
        %v3786 = vsel %vm3255, %v3783, %v3785
        %v3787 = vrot.slane %v3725, 4
        %v3788 = vrot.slane %v3726, 4
        %v3789 = vsel %vm3255, %v3787, %v3788
        %v3790 = vrot.slane %v3727, 4
        %v3791 = vsel %vm3255, %v3788, %v3790
        %v3808 = vadd.f32 %v3684, %v3754
        %v3809 = vadd.f32 %v3685, %v3756
        %v3810 = vadd.f32 %v3686, %v3759
        %v3811 = vadd.f32 %v3687, %v3761
        %v3812 = vadd.f32 %v3688, %v3764
        %v3813 = vadd.f32 %v3689, %v3766
        %v3814 = vadd.f32 %v3690, %v3769
        %v3815 = vadd.f32 %v3691, %v3771
        %v3816 = vadd.f32 %v3692, %v3774
        %v3817 = vadd.f32 %v3693, %v3776
        %v3818 = vadd.f32 %v3694, %v3779
        %v3819 = vadd.f32 %v3695, %v3781
        %v3820 = vadd.f32 %v3696, %v3784
        %v3821 = vadd.f32 %v3697, %v3786
        %v3822 = vadd.f32 %v3698, %v3789
        %v3823 = vadd.f32 %v3699, %v3791
        %v3824 = vlaneseq
        %v3825 = vshrl.u32 %v3824, 7
        %v3826 = vsub.s32 4, %v3825
        %v3827 = vrot.slane %v342, %v3826
        %v3828 = vmul.f32 %v310, %v3827
        %v3829 = vmul.f32 %v311, %v3827
        %v3830 = vmul.f32 %v312, %v3827
        %v3831 = vmul.f32 %v313, %v3827
        %v3832 = vmul.f32 %v314, %v3827
        %v3833 = vmul.f32 %v315, %v3827
        %v3834 = vmul.f32 %v316, %v3827
        %v3835 = vmul.f32 %v317, %v3827
        %v3836 = vmul.f32 %v318, %v3827
        %v3837 = vmul.f32 %v319, %v3827
        %v3838 = vmul.f32 %v320, %v3827
        %v3839 = vmul.f32 %v321, %v3827
        %v3840 = vmul.f32 %v322, %v3827
        %v3841 = vmul.f32 %v323, %v3827
        %v3842 = vmul.f32 %v324, %v3827
        %v3843 = vmul.f32 %v325, %v3827
        %v3844 = vmul.f32 %v326, %v3827
        %v3845 = vmul.f32 %v327, %v3827
        %v3846 = vmul.f32 %v328, %v3827
        %v3847 = vmul.f32 %v329, %v3827
        %v3848 = vmul.f32 %v330, %v3827
        %v3849 = vmul.f32 %v331, %v3827
        %v3850 = vmul.f32 %v332, %v3827
        %v3851 = vmul.f32 %v333, %v3827
        %v3876 = vrot.slane %v3828, 4
        %v3877 = vrot.slane %v3829, 4
        %v3878 = vsel %vm3255, %v3876, %v3877
        %v3879 = vrot.slane %v3830, 4
        %v3880 = vsel %vm3255, %v3877, %v3879
        %v3881 = vrot.slane %v3831, 4
        %v3882 = vrot.slane %v3832, 4
        %v3883 = vsel %vm3255, %v3881, %v3882
        %v3884 = vrot.slane %v3833, 4
        %v3885 = vsel %vm3255, %v3882, %v3884
        %v3886 = vrot.slane %v3834, 4
        %v3887 = vrot.slane %v3835, 4
        %v3888 = vsel %vm3255, %v3886, %v3887
        %v3889 = vrot.slane %v3836, 4
        %v3890 = vsel %vm3255, %v3887, %v3889
        %v3891 = vrot.slane %v3837, 4
        %v3892 = vrot.slane %v3838, 4
        %v3893 = vsel %vm3255, %v3891, %v3892
        %v3894 = vrot.slane %v3839, 4
        %v3895 = vsel %vm3255, %v3892, %v3894
        %v3896 = vrot.slane %v3840, 4
        %v3897 = vrot.slane %v3841, 4
        %v3898 = vsel %vm3255, %v3896, %v3897
        %v3899 = vrot.slane %v3842, 4
        %v3900 = vsel %vm3255, %v3897, %v3899
        %v3901 = vrot.slane %v3843, 4
        %v3902 = vrot.slane %v3844, 4
        %v3903 = vsel %vm3255, %v3901, %v3902
        %v3904 = vrot.slane %v3845, 4
        %v3905 = vsel %vm3255, %v3902, %v3904
        %v3906 = vrot.slane %v3846, 4
        %v3907 = vrot.slane %v3847, 4
        %v3908 = vsel %vm3255, %v3906, %v3907
        %v3909 = vrot.slane %v3848, 4
        %v3910 = vsel %vm3255, %v3907, %v3909
        %v3911 = vrot.slane %v3849, 4
        %v3912 = vrot.slane %v3850, 4
        %v3913 = vsel %vm3255, %v3911, %v3912
        %v3914 = vrot.slane %v3851, 4
        %v3915 = vsel %vm3255, %v3912, %v3914
        %v3932 = vadd.f32 %v3808, %v3878
        %v3933 = vadd.f32 %v3809, %v3880
        %v3934 = vadd.f32 %v3810, %v3883
        %v3935 = vadd.f32 %v3811, %v3885
        %v3936 = vadd.f32 %v3812, %v3888
        %v3937 = vadd.f32 %v3813, %v3890
        %v3938 = vadd.f32 %v3814, %v3893
        %v3939 = vadd.f32 %v3815, %v3895
        %v3940 = vadd.f32 %v3816, %v3898
        %v3941 = vadd.f32 %v3817, %v3900
        %v3942 = vadd.f32 %v3818, %v3903
        %v3943 = vadd.f32 %v3819, %v3905
        %v3944 = vadd.f32 %v3820, %v3908
        %v3945 = vadd.f32 %v3821, %v3910
        %v3946 = vadd.f32 %v3822, %v3913
        %v3947 = vadd.f32 %v3823, %v3915
        %v3948 = vlaneseq
        %v3949 = vshrl.u32 %v3948, 7
        %v3950 = vsub.s32 4, %v3949
        %v3951 = vrot.slane %v343, %v3950
        %v3952 = vmul.f32 %v313, %v3951
        %v3953 = vmul.f32 %v314, %v3951
        %v3954 = vmul.f32 %v315, %v3951
        %v3955 = vmul.f32 %v316, %v3951
        %v3956 = vmul.f32 %v317, %v3951
        %v3957 = vmul.f32 %v318, %v3951
        %v3958 = vmul.f32 %v319, %v3951
        %v3959 = vmul.f32 %v320, %v3951
        %v3960 = vmul.f32 %v321, %v3951
        %v3961 = vmul.f32 %v322, %v3951
        %v3962 = vmul.f32 %v323, %v3951
        %v3963 = vmul.f32 %v324, %v3951
        %v3964 = vmul.f32 %v325, %v3951
        %v3965 = vmul.f32 %v326, %v3951
        %v3966 = vmul.f32 %v327, %v3951
        %v3967 = vmul.f32 %v328, %v3951
        %v3968 = vmul.f32 %v329, %v3951
        %v3969 = vmul.f32 %v330, %v3951
        %v3970 = vmul.f32 %v331, %v3951
        %v3971 = vmul.f32 %v332, %v3951
        %v3972 = vmul.f32 %v333, %v3951
        %v3973 = vmul.f32 %v334, %v3951
        %v3974 = vmul.f32 %v335, %v3951
        %v3975 = vmul.f32 %v336, %v3951
        %v4000 = vrot.slane %v3952, 4
        %v4001 = vrot.slane %v3953, 4
        %v4002 = vsel %vm3255, %v4000, %v4001
        %v4003 = vrot.slane %v3954, 4
        %v4004 = vsel %vm3255, %v4001, %v4003
        %v4005 = vrot.slane %v3955, 4
        %v4006 = vrot.slane %v3956, 4
        %v4007 = vsel %vm3255, %v4005, %v4006
        %v4008 = vrot.slane %v3957, 4
        %v4009 = vsel %vm3255, %v4006, %v4008
        %v4010 = vrot.slane %v3958, 4
        %v4011 = vrot.slane %v3959, 4
        %v4012 = vsel %vm3255, %v4010, %v4011
        %v4013 = vrot.slane %v3960, 4
        %v4014 = vsel %vm3255, %v4011, %v4013
        %v4015 = vrot.slane %v3961, 4
        %v4016 = vrot.slane %v3962, 4
        %v4017 = vsel %vm3255, %v4015, %v4016
        %v4018 = vrot.slane %v3963, 4
        %v4019 = vsel %vm3255, %v4016, %v4018
        %v4020 = vrot.slane %v3964, 4
        %v4021 = vrot.slane %v3965, 4
        %v4022 = vsel %vm3255, %v4020, %v4021
        %v4023 = vrot.slane %v3966, 4
        %v4024 = vsel %vm3255, %v4021, %v4023
        %v4025 = vrot.slane %v3967, 4
        %v4026 = vrot.slane %v3968, 4
        %v4027 = vsel %vm3255, %v4025, %v4026
        %v4028 = vrot.slane %v3969, 4
        %v4029 = vsel %vm3255, %v4026, %v4028
        %v4030 = vrot.slane %v3970, 4
        %v4031 = vrot.slane %v3971, 4
        %v4032 = vsel %vm3255, %v4030, %v4031
        %v4033 = vrot.slane %v3972, 4
        %v4034 = vsel %vm3255, %v4031, %v4033
        %v4035 = vrot.slane %v3973, 4
        %v4036 = vrot.slane %v3974, 4
        %v4037 = vsel %vm3255, %v4035, %v4036
        %v4038 = vrot.slane %v3975, 4
        %v4039 = vsel %vm3255, %v4036, %v4038
        %v4056 = vadd.f32 %v3932, %v4002
        %v4057 = vadd.f32 %v3933, %v4004
        %v4058 = vadd.f32 %v3934, %v4007
        %v4059 = vadd.f32 %v3935, %v4009
        %v4060 = vadd.f32 %v3936, %v4012
        %v4061 = vadd.f32 %v3937, %v4014
        %v4062 = vadd.f32 %v3938, %v4017
        %v4063 = vadd.f32 %v3939, %v4019
        %v4064 = vadd.f32 %v3940, %v4022
        %v4065 = vadd.f32 %v3941, %v4024
        %v4066 = vadd.f32 %v3942, %v4027
        %v4067 = vadd.f32 %v3943, %v4029
        %v4068 = vadd.f32 %v3944, %v4032
        %v4069 = vadd.f32 %v3945, %v4034
        %v4070 = vadd.f32 %v3946, %v4037
        %v4071 = vadd.f32 %v3947, %v4039
        %v4072 = vlaneseq
        %v4073 = vshrl.u32 %v4072, 7
        %v4074 = vsub.s32 5, %v4073
        %v4075 = vrot.slane %v337, %v4074
        %v4076 = vmul.f32 %v295, %v4075
        %v4077 = vmul.f32 %v296, %v4075
        %v4078 = vmul.f32 %v297, %v4075
        %v4079 = vmul.f32 %v298, %v4075
        %v4080 = vmul.f32 %v299, %v4075
        %v4081 = vmul.f32 %v300, %v4075
        %v4082 = vmul.f32 %v301, %v4075
        %v4083 = vmul.f32 %v302, %v4075
        %v4084 = vmul.f32 %v303, %v4075
        %v4085 = vmul.f32 %v304, %v4075
        %v4086 = vmul.f32 %v305, %v4075
        %v4087 = vmul.f32 %v306, %v4075
        %v4088 = vmul.f32 %v307, %v4075
        %v4089 = vmul.f32 %v308, %v4075
        %v4090 = vmul.f32 %v309, %v4075
        %v4091 = vmul.f32 %v310, %v4075
        %v4092 = vmul.f32 %v311, %v4075
        %v4093 = vmul.f32 %v312, %v4075
        %v4094 = vmul.f32 %v313, %v4075
        %v4095 = vmul.f32 %v314, %v4075
        %v4096 = vmul.f32 %v315, %v4075
        %v4097 = vmul.f32 %v316, %v4075
        %v4098 = vmul.f32 %v317, %v4075
        %v4099 = vmul.f32 %v318, %v4075
        %vm4124 = vcmask 1042432
        %v4125 = vrot.slane %v4076, 5
        %v4126 = vrot.slane %v4077, 5
        %v4127 = vsel %vm4124, %v4125, %v4126
        %v4128 = vrot.slane %v4078, 5
        %v4129 = vsel %vm4124, %v4126, %v4128
        %v4130 = vrot.slane %v4079, 5
        %v4131 = vrot.slane %v4080, 5
        %v4132 = vsel %vm4124, %v4130, %v4131
        %v4133 = vrot.slane %v4081, 5
        %v4134 = vsel %vm4124, %v4131, %v4133
        %v4135 = vrot.slane %v4082, 5
        %v4136 = vrot.slane %v4083, 5
        %v4137 = vsel %vm4124, %v4135, %v4136
        %v4138 = vrot.slane %v4084, 5
        %v4139 = vsel %vm4124, %v4136, %v4138
        %v4140 = vrot.slane %v4085, 5
        %v4141 = vrot.slane %v4086, 5
        %v4142 = vsel %vm4124, %v4140, %v4141
        %v4143 = vrot.slane %v4087, 5
        %v4144 = vsel %vm4124, %v4141, %v4143
        %v4145 = vrot.slane %v4088, 5
        %v4146 = vrot.slane %v4089, 5
        %v4147 = vsel %vm4124, %v4145, %v4146
        %v4148 = vrot.slane %v4090, 5
        %v4149 = vsel %vm4124, %v4146, %v4148
        %v4150 = vrot.slane %v4091, 5
        %v4151 = vrot.slane %v4092, 5
        %v4152 = vsel %vm4124, %v4150, %v4151
        %v4153 = vrot.slane %v4093, 5
        %v4154 = vsel %vm4124, %v4151, %v4153
        %v4155 = vrot.slane %v4094, 5
        %v4156 = vrot.slane %v4095, 5
        %v4157 = vsel %vm4124, %v4155, %v4156
        %v4158 = vrot.slane %v4096, 5
        %v4159 = vsel %vm4124, %v4156, %v4158
        %v4160 = vrot.slane %v4097, 5
        %v4161 = vrot.slane %v4098, 5
        %v4162 = vsel %vm4124, %v4160, %v4161
        %v4163 = vrot.slane %v4099, 5
        %v4164 = vsel %vm4124, %v4161, %v4163
        %v4181 = vadd.f32 %v4056, %v4127
        %v4182 = vadd.f32 %v4057, %v4129
        %v4183 = vadd.f32 %v4058, %v4132
        %v4184 = vadd.f32 %v4059, %v4134
        %v4185 = vadd.f32 %v4060, %v4137
        %v4186 = vadd.f32 %v4061, %v4139
        %v4187 = vadd.f32 %v4062, %v4142
        %v4188 = vadd.f32 %v4063, %v4144
        %v4189 = vadd.f32 %v4064, %v4147
        %v4190 = vadd.f32 %v4065, %v4149
        %v4191 = vadd.f32 %v4066, %v4152
        %v4192 = vadd.f32 %v4067, %v4154
        %v4193 = vadd.f32 %v4068, %v4157
        %v4194 = vadd.f32 %v4069, %v4159
        %v4195 = vadd.f32 %v4070, %v4162
        %v4196 = vadd.f32 %v4071, %v4164
        %v4197 = vlaneseq
        %v4198 = vshrl.u32 %v4197, 7
        %v4199 = vsub.s32 5, %v4198
        %v4200 = vrot.slane %v338, %v4199
        %v4201 = vmul.f32 %v298, %v4200
        %v4202 = vmul.f32 %v299, %v4200
        %v4203 = vmul.f32 %v300, %v4200
        %v4204 = vmul.f32 %v301, %v4200
        %v4205 = vmul.f32 %v302, %v4200
        %v4206 = vmul.f32 %v303, %v4200
        %v4207 = vmul.f32 %v304, %v4200
        %v4208 = vmul.f32 %v305, %v4200
        %v4209 = vmul.f32 %v306, %v4200
        %v4210 = vmul.f32 %v307, %v4200
        %v4211 = vmul.f32 %v308, %v4200
        %v4212 = vmul.f32 %v309, %v4200
        %v4213 = vmul.f32 %v310, %v4200
        %v4214 = vmul.f32 %v311, %v4200
        %v4215 = vmul.f32 %v312, %v4200
        %v4216 = vmul.f32 %v313, %v4200
        %v4217 = vmul.f32 %v314, %v4200
        %v4218 = vmul.f32 %v315, %v4200
        %v4219 = vmul.f32 %v316, %v4200
        %v4220 = vmul.f32 %v317, %v4200
        %v4221 = vmul.f32 %v318, %v4200
        %v4222 = vmul.f32 %v319, %v4200
        %v4223 = vmul.f32 %v320, %v4200
        %v4224 = vmul.f32 %v321, %v4200
        %v4249 = vrot.slane %v4201, 5
        %v4250 = vrot.slane %v4202, 5
        %v4251 = vsel %vm4124, %v4249, %v4250
        %v4252 = vrot.slane %v4203, 5
        %v4253 = vsel %vm4124, %v4250, %v4252
        %v4254 = vrot.slane %v4204, 5
        %v4255 = vrot.slane %v4205, 5
        %v4256 = vsel %vm4124, %v4254, %v4255
        %v4257 = vrot.slane %v4206, 5
        %v4258 = vsel %vm4124, %v4255, %v4257
        %v4259 = vrot.slane %v4207, 5
        %v4260 = vrot.slane %v4208, 5
        %v4261 = vsel %vm4124, %v4259, %v4260
        %v4262 = vrot.slane %v4209, 5
        %v4263 = vsel %vm4124, %v4260, %v4262
        %v4264 = vrot.slane %v4210, 5
        %v4265 = vrot.slane %v4211, 5
        %v4266 = vsel %vm4124, %v4264, %v4265
        %v4267 = vrot.slane %v4212, 5
        %v4268 = vsel %vm4124, %v4265, %v4267
        %v4269 = vrot.slane %v4213, 5
        %v4270 = vrot.slane %v4214, 5
        %v4271 = vsel %vm4124, %v4269, %v4270
        %v4272 = vrot.slane %v4215, 5
        %v4273 = vsel %vm4124, %v4270, %v4272
        %v4274 = vrot.slane %v4216, 5
        %v4275 = vrot.slane %v4217, 5
        %v4276 = vsel %vm4124, %v4274, %v4275
        %v4277 = vrot.slane %v4218, 5
        %v4278 = vsel %vm4124, %v4275, %v4277
        %v4279 = vrot.slane %v4219, 5
        %v4280 = vrot.slane %v4220, 5
        %v4281 = vsel %vm4124, %v4279, %v4280
        %v4282 = vrot.slane %v4221, 5
        %v4283 = vsel %vm4124, %v4280, %v4282
        %v4284 = vrot.slane %v4222, 5
        %v4285 = vrot.slane %v4223, 5
        %v4286 = vsel %vm4124, %v4284, %v4285
        %v4287 = vrot.slane %v4224, 5
        %v4288 = vsel %vm4124, %v4285, %v4287
        %v4305 = vadd.f32 %v4181, %v4251
        %v4306 = vadd.f32 %v4182, %v4253
        %v4307 = vadd.f32 %v4183, %v4256
        %v4308 = vadd.f32 %v4184, %v4258
        %v4309 = vadd.f32 %v4185, %v4261
        %v4310 = vadd.f32 %v4186, %v4263
        %v4311 = vadd.f32 %v4187, %v4266
        %v4312 = vadd.f32 %v4188, %v4268
        %v4313 = vadd.f32 %v4189, %v4271
        %v4314 = vadd.f32 %v4190, %v4273
        %v4315 = vadd.f32 %v4191, %v4276
        %v4316 = vadd.f32 %v4192, %v4278
        %v4317 = vadd.f32 %v4193, %v4281
        %v4318 = vadd.f32 %v4194, %v4283
        %v4319 = vadd.f32 %v4195, %v4286
        %v4320 = vadd.f32 %v4196, %v4288
        %v4321 = vlaneseq
        %v4322 = vshrl.u32 %v4321, 7
        %v4323 = vsub.s32 5, %v4322
        %v4324 = vrot.slane %v339, %v4323
        %v4325 = vmul.f32 %v301, %v4324
        %v4326 = vmul.f32 %v302, %v4324
        %v4327 = vmul.f32 %v303, %v4324
        %v4328 = vmul.f32 %v304, %v4324
        %v4329 = vmul.f32 %v305, %v4324
        %v4330 = vmul.f32 %v306, %v4324
        %v4331 = vmul.f32 %v307, %v4324
        %v4332 = vmul.f32 %v308, %v4324
        %v4333 = vmul.f32 %v309, %v4324
        %v4334 = vmul.f32 %v310, %v4324
        %v4335 = vmul.f32 %v311, %v4324
        %v4336 = vmul.f32 %v312, %v4324
        %v4337 = vmul.f32 %v313, %v4324
        %v4338 = vmul.f32 %v314, %v4324
        %v4339 = vmul.f32 %v315, %v4324
        %v4340 = vmul.f32 %v316, %v4324
        %v4341 = vmul.f32 %v317, %v4324
        %v4342 = vmul.f32 %v318, %v4324
        %v4343 = vmul.f32 %v319, %v4324
        %v4344 = vmul.f32 %v320, %v4324
        %v4345 = vmul.f32 %v321, %v4324
        %v4346 = vmul.f32 %v322, %v4324
        %v4347 = vmul.f32 %v323, %v4324
        %v4348 = vmul.f32 %v324, %v4324
        %v4373 = vrot.slane %v4325, 5
        %v4374 = vrot.slane %v4326, 5
        %v4375 = vsel %vm4124, %v4373, %v4374
        %v4376 = vrot.slane %v4327, 5
        %v4377 = vsel %vm4124, %v4374, %v4376
        %v4378 = vrot.slane %v4328, 5
        %v4379 = vrot.slane %v4329, 5
        %v4380 = vsel %vm4124, %v4378, %v4379
        %v4381 = vrot.slane %v4330, 5
        %v4382 = vsel %vm4124, %v4379, %v4381
        %v4383 = vrot.slane %v4331, 5
        %v4384 = vrot.slane %v4332, 5
        %v4385 = vsel %vm4124, %v4383, %v4384
        %v4386 = vrot.slane %v4333, 5
        %v4387 = vsel %vm4124, %v4384, %v4386
        %v4388 = vrot.slane %v4334, 5
        %v4389 = vrot.slane %v4335, 5
        %v4390 = vsel %vm4124, %v4388, %v4389
        %v4391 = vrot.slane %v4336, 5
        %v4392 = vsel %vm4124, %v4389, %v4391
        %v4393 = vrot.slane %v4337, 5
        %v4394 = vrot.slane %v4338, 5
        %v4395 = vsel %vm4124, %v4393, %v4394
        %v4396 = vrot.slane %v4339, 5
        %v4397 = vsel %vm4124, %v4394, %v4396
        %v4398 = vrot.slane %v4340, 5
        %v4399 = vrot.slane %v4341, 5
        %v4400 = vsel %vm4124, %v4398, %v4399
        %v4401 = vrot.slane %v4342, 5
        %v4402 = vsel %vm4124, %v4399, %v4401
        %v4403 = vrot.slane %v4343, 5
        %v4404 = vrot.slane %v4344, 5
        %v4405 = vsel %vm4124, %v4403, %v4404
        %v4406 = vrot.slane %v4345, 5
        %v4407 = vsel %vm4124, %v4404, %v4406
        %v4408 = vrot.slane %v4346, 5
        %v4409 = vrot.slane %v4347, 5
        %v4410 = vsel %vm4124, %v4408, %v4409
        %v4411 = vrot.slane %v4348, 5
        %v4412 = vsel %vm4124, %v4409, %v4411
        %v4429 = vadd.f32 %v4305, %v4375
        %v4430 = vadd.f32 %v4306, %v4377
        %v4431 = vadd.f32 %v4307, %v4380
        %v4432 = vadd.f32 %v4308, %v4382
        %v4433 = vadd.f32 %v4309, %v4385
        %v4434 = vadd.f32 %v4310, %v4387
        %v4435 = vadd.f32 %v4311, %v4390
        %v4436 = vadd.f32 %v4312, %v4392
        %v4437 = vadd.f32 %v4313, %v4395
        %v4438 = vadd.f32 %v4314, %v4397
        %v4439 = vadd.f32 %v4315, %v4400
        %v4440 = vadd.f32 %v4316, %v4402
        %v4441 = vadd.f32 %v4317, %v4405
        %v4442 = vadd.f32 %v4318, %v4407
        %v4443 = vadd.f32 %v4319, %v4410
        %v4444 = vadd.f32 %v4320, %v4412
        %v4445 = vlaneseq
        %v4446 = vshrl.u32 %v4445, 7
        %v4447 = vsub.s32 5, %v4446
        %v4448 = vrot.slane %v340, %v4447
        %v4449 = vmul.f32 %v304, %v4448
        %v4450 = vmul.f32 %v305, %v4448
        %v4451 = vmul.f32 %v306, %v4448
        %v4452 = vmul.f32 %v307, %v4448
        %v4453 = vmul.f32 %v308, %v4448
        %v4454 = vmul.f32 %v309, %v4448
        %v4455 = vmul.f32 %v310, %v4448
        %v4456 = vmul.f32 %v311, %v4448
        %v4457 = vmul.f32 %v312, %v4448
        %v4458 = vmul.f32 %v313, %v4448
        %v4459 = vmul.f32 %v314, %v4448
        %v4460 = vmul.f32 %v315, %v4448
        %v4461 = vmul.f32 %v316, %v4448
        %v4462 = vmul.f32 %v317, %v4448
        %v4463 = vmul.f32 %v318, %v4448
        %v4464 = vmul.f32 %v319, %v4448
        %v4465 = vmul.f32 %v320, %v4448
        %v4466 = vmul.f32 %v321, %v4448
        %v4467 = vmul.f32 %v322, %v4448
        %v4468 = vmul.f32 %v323, %v4448
        %v4469 = vmul.f32 %v324, %v4448
        %v4470 = vmul.f32 %v325, %v4448
        %v4471 = vmul.f32 %v326, %v4448
        %v4472 = vmul.f32 %v327, %v4448
        %v4497 = vrot.slane %v4449, 5
        %v4498 = vrot.slane %v4450, 5
        %v4499 = vsel %vm4124, %v4497, %v4498
        %v4500 = vrot.slane %v4451, 5
        %v4501 = vsel %vm4124, %v4498, %v4500
        %v4502 = vrot.slane %v4452, 5
        %v4503 = vrot.slane %v4453, 5
        %v4504 = vsel %vm4124, %v4502, %v4503
        %v4505 = vrot.slane %v4454, 5
        %v4506 = vsel %vm4124, %v4503, %v4505
        %v4507 = vrot.slane %v4455, 5
        %v4508 = vrot.slane %v4456, 5
        %v4509 = vsel %vm4124, %v4507, %v4508
        %v4510 = vrot.slane %v4457, 5
        %v4511 = vsel %vm4124, %v4508, %v4510
        %v4512 = vrot.slane %v4458, 5
        %v4513 = vrot.slane %v4459, 5
        %v4514 = vsel %vm4124, %v4512, %v4513
        %v4515 = vrot.slane %v4460, 5
        %v4516 = vsel %vm4124, %v4513, %v4515
        %v4517 = vrot.slane %v4461, 5
        %v4518 = vrot.slane %v4462, 5
        %v4519 = vsel %vm4124, %v4517, %v4518
        %v4520 = vrot.slane %v4463, 5
        %v4521 = vsel %vm4124, %v4518, %v4520
        %v4522 = vrot.slane %v4464, 5
        %v4523 = vrot.slane %v4465, 5
        %v4524 = vsel %vm4124, %v4522, %v4523
        %v4525 = vrot.slane %v4466, 5
        %v4526 = vsel %vm4124, %v4523, %v4525
        %v4527 = vrot.slane %v4467, 5
        %v4528 = vrot.slane %v4468, 5
        %v4529 = vsel %vm4124, %v4527, %v4528
        %v4530 = vrot.slane %v4469, 5
        %v4531 = vsel %vm4124, %v4528, %v4530
        %v4532 = vrot.slane %v4470, 5
        %v4533 = vrot.slane %v4471, 5
        %v4534 = vsel %vm4124, %v4532, %v4533
        %v4535 = vrot.slane %v4472, 5
        %v4536 = vsel %vm4124, %v4533, %v4535
        %v4553 = vadd.f32 %v4429, %v4499
        %v4554 = vadd.f32 %v4430, %v4501
        %v4555 = vadd.f32 %v4431, %v4504
        %v4556 = vadd.f32 %v4432, %v4506
        %v4557 = vadd.f32 %v4433, %v4509
        %v4558 = vadd.f32 %v4434, %v4511
        %v4559 = vadd.f32 %v4435, %v4514
        %v4560 = vadd.f32 %v4436, %v4516
        %v4561 = vadd.f32 %v4437, %v4519
        %v4562 = vadd.f32 %v4438, %v4521
        %v4563 = vadd.f32 %v4439, %v4524
        %v4564 = vadd.f32 %v4440, %v4526
        %v4565 = vadd.f32 %v4441, %v4529
        %v4566 = vadd.f32 %v4442, %v4531
        %v4567 = vadd.f32 %v4443, %v4534
        %v4568 = vadd.f32 %v4444, %v4536
        %v4569 = vlaneseq
        %v4570 = vshrl.u32 %v4569, 7
        %v4571 = vsub.s32 5, %v4570
        %v4572 = vrot.slane %v341, %v4571
        %v4573 = vmul.f32 %v307, %v4572
        %v4574 = vmul.f32 %v308, %v4572
        %v4575 = vmul.f32 %v309, %v4572
        %v4576 = vmul.f32 %v310, %v4572
        %v4577 = vmul.f32 %v311, %v4572
        %v4578 = vmul.f32 %v312, %v4572
        %v4579 = vmul.f32 %v313, %v4572
        %v4580 = vmul.f32 %v314, %v4572
        %v4581 = vmul.f32 %v315, %v4572
        %v4582 = vmul.f32 %v316, %v4572
        %v4583 = vmul.f32 %v317, %v4572
        %v4584 = vmul.f32 %v318, %v4572
        %v4585 = vmul.f32 %v319, %v4572
        %v4586 = vmul.f32 %v320, %v4572
        %v4587 = vmul.f32 %v321, %v4572
        %v4588 = vmul.f32 %v322, %v4572
        %v4589 = vmul.f32 %v323, %v4572
        %v4590 = vmul.f32 %v324, %v4572
        %v4591 = vmul.f32 %v325, %v4572
        %v4592 = vmul.f32 %v326, %v4572
        %v4593 = vmul.f32 %v327, %v4572
        %v4594 = vmul.f32 %v328, %v4572
        %v4595 = vmul.f32 %v329, %v4572
        %v4596 = vmul.f32 %v330, %v4572
        %v4621 = vrot.slane %v4573, 5
        %v4622 = vrot.slane %v4574, 5
        %v4623 = vsel %vm4124, %v4621, %v4622
        %v4624 = vrot.slane %v4575, 5
        %v4625 = vsel %vm4124, %v4622, %v4624
        %v4626 = vrot.slane %v4576, 5
        %v4627 = vrot.slane %v4577, 5
        %v4628 = vsel %vm4124, %v4626, %v4627
        %v4629 = vrot.slane %v4578, 5
        %v4630 = vsel %vm4124, %v4627, %v4629
        %v4631 = vrot.slane %v4579, 5
        %v4632 = vrot.slane %v4580, 5
        %v4633 = vsel %vm4124, %v4631, %v4632
        %v4634 = vrot.slane %v4581, 5
        %v4635 = vsel %vm4124, %v4632, %v4634
        %v4636 = vrot.slane %v4582, 5
        %v4637 = vrot.slane %v4583, 5
        %v4638 = vsel %vm4124, %v4636, %v4637
        %v4639 = vrot.slane %v4584, 5
        %v4640 = vsel %vm4124, %v4637, %v4639
        %v4641 = vrot.slane %v4585, 5
        %v4642 = vrot.slane %v4586, 5
        %v4643 = vsel %vm4124, %v4641, %v4642
        %v4644 = vrot.slane %v4587, 5
        %v4645 = vsel %vm4124, %v4642, %v4644
        %v4646 = vrot.slane %v4588, 5
        %v4647 = vrot.slane %v4589, 5
        %v4648 = vsel %vm4124, %v4646, %v4647
        %v4649 = vrot.slane %v4590, 5
        %v4650 = vsel %vm4124, %v4647, %v4649
        %v4651 = vrot.slane %v4591, 5
        %v4652 = vrot.slane %v4592, 5
        %v4653 = vsel %vm4124, %v4651, %v4652
        %v4654 = vrot.slane %v4593, 5
        %v4655 = vsel %vm4124, %v4652, %v4654
        %v4656 = vrot.slane %v4594, 5
        %v4657 = vrot.slane %v4595, 5
        %v4658 = vsel %vm4124, %v4656, %v4657
        %v4659 = vrot.slane %v4596, 5
        %v4660 = vsel %vm4124, %v4657, %v4659
        %v4677 = vadd.f32 %v4553, %v4623
        %v4678 = vadd.f32 %v4554, %v4625
        %v4679 = vadd.f32 %v4555, %v4628
        %v4680 = vadd.f32 %v4556, %v4630
        %v4681 = vadd.f32 %v4557, %v4633
        %v4682 = vadd.f32 %v4558, %v4635
        %v4683 = vadd.f32 %v4559, %v4638
        %v4684 = vadd.f32 %v4560, %v4640
        %v4685 = vadd.f32 %v4561, %v4643
        %v4686 = vadd.f32 %v4562, %v4645
        %v4687 = vadd.f32 %v4563, %v4648
        %v4688 = vadd.f32 %v4564, %v4650
        %v4689 = vadd.f32 %v4565, %v4653
        %v4690 = vadd.f32 %v4566, %v4655
        %v4691 = vadd.f32 %v4567, %v4658
        %v4692 = vadd.f32 %v4568, %v4660
        %v4693 = vlaneseq
        %v4694 = vshrl.u32 %v4693, 7
        %v4695 = vsub.s32 5, %v4694
        %v4696 = vrot.slane %v342, %v4695
        %v4697 = vmul.f32 %v310, %v4696
        %v4698 = vmul.f32 %v311, %v4696
        %v4699 = vmul.f32 %v312, %v4696
        %v4700 = vmul.f32 %v313, %v4696
        %v4701 = vmul.f32 %v314, %v4696
        %v4702 = vmul.f32 %v315, %v4696
        %v4703 = vmul.f32 %v316, %v4696
        %v4704 = vmul.f32 %v317, %v4696
        %v4705 = vmul.f32 %v318, %v4696
        %v4706 = vmul.f32 %v319, %v4696
        %v4707 = vmul.f32 %v320, %v4696
        %v4708 = vmul.f32 %v321, %v4696
        %v4709 = vmul.f32 %v322, %v4696
        %v4710 = vmul.f32 %v323, %v4696
        %v4711 = vmul.f32 %v324, %v4696
        %v4712 = vmul.f32 %v325, %v4696
        %v4713 = vmul.f32 %v326, %v4696
        %v4714 = vmul.f32 %v327, %v4696
        %v4715 = vmul.f32 %v328, %v4696
        %v4716 = vmul.f32 %v329, %v4696
        %v4717 = vmul.f32 %v330, %v4696
        %v4718 = vmul.f32 %v331, %v4696
        %v4719 = vmul.f32 %v332, %v4696
        %v4720 = vmul.f32 %v333, %v4696
        %v4745 = vrot.slane %v4697, 5
        %v4746 = vrot.slane %v4698, 5
        %v4747 = vsel %vm4124, %v4745, %v4746
        %v4748 = vrot.slane %v4699, 5
        %v4749 = vsel %vm4124, %v4746, %v4748
        %v4750 = vrot.slane %v4700, 5
        %v4751 = vrot.slane %v4701, 5
        %v4752 = vsel %vm4124, %v4750, %v4751
        %v4753 = vrot.slane %v4702, 5
        %v4754 = vsel %vm4124, %v4751, %v4753
        %v4755 = vrot.slane %v4703, 5
        %v4756 = vrot.slane %v4704, 5
        %v4757 = vsel %vm4124, %v4755, %v4756
        %v4758 = vrot.slane %v4705, 5
        %v4759 = vsel %vm4124, %v4756, %v4758
        %v4760 = vrot.slane %v4706, 5
        %v4761 = vrot.slane %v4707, 5
        %v4762 = vsel %vm4124, %v4760, %v4761
        %v4763 = vrot.slane %v4708, 5
        %v4764 = vsel %vm4124, %v4761, %v4763
        %v4765 = vrot.slane %v4709, 5
        %v4766 = vrot.slane %v4710, 5
        %v4767 = vsel %vm4124, %v4765, %v4766
        %v4768 = vrot.slane %v4711, 5
        %v4769 = vsel %vm4124, %v4766, %v4768
        %v4770 = vrot.slane %v4712, 5
        %v4771 = vrot.slane %v4713, 5
        %v4772 = vsel %vm4124, %v4770, %v4771
        %v4773 = vrot.slane %v4714, 5
        %v4774 = vsel %vm4124, %v4771, %v4773
        %v4775 = vrot.slane %v4715, 5
        %v4776 = vrot.slane %v4716, 5
        %v4777 = vsel %vm4124, %v4775, %v4776
        %v4778 = vrot.slane %v4717, 5
        %v4779 = vsel %vm4124, %v4776, %v4778
        %v4780 = vrot.slane %v4718, 5
        %v4781 = vrot.slane %v4719, 5
        %v4782 = vsel %vm4124, %v4780, %v4781
        %v4783 = vrot.slane %v4720, 5
        %v4784 = vsel %vm4124, %v4781, %v4783
        %v4801 = vadd.f32 %v4677, %v4747
        %v4802 = vadd.f32 %v4678, %v4749
        %v4803 = vadd.f32 %v4679, %v4752
        %v4804 = vadd.f32 %v4680, %v4754
        %v4805 = vadd.f32 %v4681, %v4757
        %v4806 = vadd.f32 %v4682, %v4759
        %v4807 = vadd.f32 %v4683, %v4762
        %v4808 = vadd.f32 %v4684, %v4764
        %v4809 = vadd.f32 %v4685, %v4767
        %v4810 = vadd.f32 %v4686, %v4769
        %v4811 = vadd.f32 %v4687, %v4772
        %v4812 = vadd.f32 %v4688, %v4774
        %v4813 = vadd.f32 %v4689, %v4777
        %v4814 = vadd.f32 %v4690, %v4779
        %v4815 = vadd.f32 %v4691, %v4782
        %v4816 = vadd.f32 %v4692, %v4784
        %v4817 = vlaneseq
        %v4818 = vshrl.u32 %v4817, 7
        %v4819 = vsub.s32 5, %v4818
        %v4820 = vrot.slane %v343, %v4819
        %v4821 = vmul.f32 %v313, %v4820
        %v4822 = vmul.f32 %v314, %v4820
        %v4823 = vmul.f32 %v315, %v4820
        %v4824 = vmul.f32 %v316, %v4820
        %v4825 = vmul.f32 %v317, %v4820
        %v4826 = vmul.f32 %v318, %v4820
        %v4827 = vmul.f32 %v319, %v4820
        %v4828 = vmul.f32 %v320, %v4820
        %v4829 = vmul.f32 %v321, %v4820
        %v4830 = vmul.f32 %v322, %v4820
        %v4831 = vmul.f32 %v323, %v4820
        %v4832 = vmul.f32 %v324, %v4820
        %v4833 = vmul.f32 %v325, %v4820
        %v4834 = vmul.f32 %v326, %v4820
        %v4835 = vmul.f32 %v327, %v4820
        %v4836 = vmul.f32 %v328, %v4820
        %v4837 = vmul.f32 %v329, %v4820
        %v4838 = vmul.f32 %v330, %v4820
        %v4839 = vmul.f32 %v331, %v4820
        %v4840 = vmul.f32 %v332, %v4820
        %v4841 = vmul.f32 %v333, %v4820
        %v4842 = vmul.f32 %v334, %v4820
        %v4843 = vmul.f32 %v335, %v4820
        %v4844 = vmul.f32 %v336, %v4820
        %v4869 = vrot.slane %v4821, 5
        %v4870 = vrot.slane %v4822, 5
        %v4871 = vsel %vm4124, %v4869, %v4870
        %v4872 = vrot.slane %v4823, 5
        %v4873 = vsel %vm4124, %v4870, %v4872
        %v4874 = vrot.slane %v4824, 5
        %v4875 = vrot.slane %v4825, 5
        %v4876 = vsel %vm4124, %v4874, %v4875
        %v4877 = vrot.slane %v4826, 5
        %v4878 = vsel %vm4124, %v4875, %v4877
        %v4879 = vrot.slane %v4827, 5
        %v4880 = vrot.slane %v4828, 5
        %v4881 = vsel %vm4124, %v4879, %v4880
        %v4882 = vrot.slane %v4829, 5
        %v4883 = vsel %vm4124, %v4880, %v4882
        %v4884 = vrot.slane %v4830, 5
        %v4885 = vrot.slane %v4831, 5
        %v4886 = vsel %vm4124, %v4884, %v4885
        %v4887 = vrot.slane %v4832, 5
        %v4888 = vsel %vm4124, %v4885, %v4887
        %v4889 = vrot.slane %v4833, 5
        %v4890 = vrot.slane %v4834, 5
        %v4891 = vsel %vm4124, %v4889, %v4890
        %v4892 = vrot.slane %v4835, 5
        %v4893 = vsel %vm4124, %v4890, %v4892
        %v4894 = vrot.slane %v4836, 5
        %v4895 = vrot.slane %v4837, 5
        %v4896 = vsel %vm4124, %v4894, %v4895
        %v4897 = vrot.slane %v4838, 5
        %v4898 = vsel %vm4124, %v4895, %v4897
        %v4899 = vrot.slane %v4839, 5
        %v4900 = vrot.slane %v4840, 5
        %v4901 = vsel %vm4124, %v4899, %v4900
        %v4902 = vrot.slane %v4841, 5
        %v4903 = vsel %vm4124, %v4900, %v4902
        %v4904 = vrot.slane %v4842, 5
        %v4905 = vrot.slane %v4843, 5
        %v4906 = vsel %vm4124, %v4904, %v4905
        %v4907 = vrot.slane %v4844, 5
        %v4908 = vsel %vm4124, %v4905, %v4907
        %v4925 = vadd.f32 %v4801, %v4871
        %v4926 = vadd.f32 %v4802, %v4873
        %v4927 = vadd.f32 %v4803, %v4876
        %v4928 = vadd.f32 %v4804, %v4878
        %v4929 = vadd.f32 %v4805, %v4881
        %v4930 = vadd.f32 %v4806, %v4883
        %v4931 = vadd.f32 %v4807, %v4886
        %v4932 = vadd.f32 %v4808, %v4888
        %v4933 = vadd.f32 %v4809, %v4891
        %v4934 = vadd.f32 %v4810, %v4893
        %v4935 = vadd.f32 %v4811, %v4896
        %v4936 = vadd.f32 %v4812, %v4898
        %v4937 = vadd.f32 %v4813, %v4901
        %v4938 = vadd.f32 %v4814, %v4903
        %v4939 = vadd.f32 %v4815, %v4906
        %v4940 = vadd.f32 %v4816, %v4908
        %v4941 = vlaneseq
        %v4942 = vshrl.u32 %v4941, 7
        %v4943 = vsub.s32 6, %v4942
        %v4944 = vrot.slane %v337, %v4943
        %v4945 = vmul.f32 %v295, %v4944
        %v4946 = vmul.f32 %v296, %v4944
        %v4947 = vmul.f32 %v297, %v4944
        %v4948 = vmul.f32 %v298, %v4944
        %v4949 = vmul.f32 %v299, %v4944
        %v4950 = vmul.f32 %v300, %v4944
        %v4951 = vmul.f32 %v301, %v4944
        %v4952 = vmul.f32 %v302, %v4944
        %v4953 = vmul.f32 %v303, %v4944
        %v4954 = vmul.f32 %v304, %v4944
        %v4955 = vmul.f32 %v305, %v4944
        %v4956 = vmul.f32 %v306, %v4944
        %v4957 = vmul.f32 %v307, %v4944
        %v4958 = vmul.f32 %v308, %v4944
        %v4959 = vmul.f32 %v309, %v4944
        %v4960 = vmul.f32 %v310, %v4944
        %v4961 = vmul.f32 %v311, %v4944
        %v4962 = vmul.f32 %v312, %v4944
        %v4963 = vmul.f32 %v313, %v4944
        %v4964 = vmul.f32 %v314, %v4944
        %v4965 = vmul.f32 %v315, %v4944
        %v4966 = vmul.f32 %v316, %v4944
        %v4967 = vmul.f32 %v317, %v4944
        %v4968 = vmul.f32 %v318, %v4944
        %vm4993 = vcmask 1041408
        %v4994 = vrot.slane %v4945, 6
        %v4995 = vrot.slane %v4946, 6
        %v4996 = vsel %vm4993, %v4994, %v4995
        %v4997 = vrot.slane %v4947, 6
        %v4998 = vsel %vm4993, %v4995, %v4997
        %v4999 = vrot.slane %v4948, 6
        %v5000 = vrot.slane %v4949, 6
        %v5001 = vsel %vm4993, %v4999, %v5000
        %v5002 = vrot.slane %v4950, 6
        %v5003 = vsel %vm4993, %v5000, %v5002
        %v5004 = vrot.slane %v4951, 6
        %v5005 = vrot.slane %v4952, 6
        %v5006 = vsel %vm4993, %v5004, %v5005
        %v5007 = vrot.slane %v4953, 6
        %v5008 = vsel %vm4993, %v5005, %v5007
        %v5009 = vrot.slane %v4954, 6
        %v5010 = vrot.slane %v4955, 6
        %v5011 = vsel %vm4993, %v5009, %v5010
        %v5012 = vrot.slane %v4956, 6
        %v5013 = vsel %vm4993, %v5010, %v5012
        %v5014 = vrot.slane %v4957, 6
        %v5015 = vrot.slane %v4958, 6
        %v5016 = vsel %vm4993, %v5014, %v5015
        %v5017 = vrot.slane %v4959, 6
        %v5018 = vsel %vm4993, %v5015, %v5017
        %v5019 = vrot.slane %v4960, 6
        %v5020 = vrot.slane %v4961, 6
        %v5021 = vsel %vm4993, %v5019, %v5020
        %v5022 = vrot.slane %v4962, 6
        %v5023 = vsel %vm4993, %v5020, %v5022
        %v5024 = vrot.slane %v4963, 6
        %v5025 = vrot.slane %v4964, 6
        %v5026 = vsel %vm4993, %v5024, %v5025
        %v5027 = vrot.slane %v4965, 6
        %v5028 = vsel %vm4993, %v5025, %v5027
        %v5029 = vrot.slane %v4966, 6
        %v5030 = vrot.slane %v4967, 6
        %v5031 = vsel %vm4993, %v5029, %v5030
        %v5032 = vrot.slane %v4968, 6
        %v5033 = vsel %vm4993, %v5030, %v5032
        %v5050 = vadd.f32 %v4925, %v4996
        %v5051 = vadd.f32 %v4926, %v4998
        %v5052 = vadd.f32 %v4927, %v5001
        %v5053 = vadd.f32 %v4928, %v5003
        %v5054 = vadd.f32 %v4929, %v5006
        %v5055 = vadd.f32 %v4930, %v5008
        %v5056 = vadd.f32 %v4931, %v5011
        %v5057 = vadd.f32 %v4932, %v5013
        %v5058 = vadd.f32 %v4933, %v5016
        %v5059 = vadd.f32 %v4934, %v5018
        %v5060 = vadd.f32 %v4935, %v5021
        %v5061 = vadd.f32 %v4936, %v5023
        %v5062 = vadd.f32 %v4937, %v5026
        %v5063 = vadd.f32 %v4938, %v5028
        %v5064 = vadd.f32 %v4939, %v5031
        %v5065 = vadd.f32 %v4940, %v5033
        %v5066 = vlaneseq
        %v5067 = vshrl.u32 %v5066, 7
        %v5068 = vsub.s32 6, %v5067
        %v5069 = vrot.slane %v338, %v5068
        %v5070 = vmul.f32 %v298, %v5069
        %v5071 = vmul.f32 %v299, %v5069
        %v5072 = vmul.f32 %v300, %v5069
        %v5073 = vmul.f32 %v301, %v5069
        %v5074 = vmul.f32 %v302, %v5069
        %v5075 = vmul.f32 %v303, %v5069
        %v5076 = vmul.f32 %v304, %v5069
        %v5077 = vmul.f32 %v305, %v5069
        %v5078 = vmul.f32 %v306, %v5069
        %v5079 = vmul.f32 %v307, %v5069
        %v5080 = vmul.f32 %v308, %v5069
        %v5081 = vmul.f32 %v309, %v5069
        %v5082 = vmul.f32 %v310, %v5069
        %v5083 = vmul.f32 %v311, %v5069
        %v5084 = vmul.f32 %v312, %v5069
        %v5085 = vmul.f32 %v313, %v5069
        %v5086 = vmul.f32 %v314, %v5069
        %v5087 = vmul.f32 %v315, %v5069
        %v5088 = vmul.f32 %v316, %v5069
        %v5089 = vmul.f32 %v317, %v5069
        %v5090 = vmul.f32 %v318, %v5069
        %v5091 = vmul.f32 %v319, %v5069
        %v5092 = vmul.f32 %v320, %v5069
        %v5093 = vmul.f32 %v321, %v5069
        %v5118 = vrot.slane %v5070, 6
        %v5119 = vrot.slane %v5071, 6
        %v5120 = vsel %vm4993, %v5118, %v5119
        %v5121 = vrot.slane %v5072, 6
        %v5122 = vsel %vm4993, %v5119, %v5121
        %v5123 = vrot.slane %v5073, 6
        %v5124 = vrot.slane %v5074, 6
        %v5125 = vsel %vm4993, %v5123, %v5124
        %v5126 = vrot.slane %v5075, 6
        %v5127 = vsel %vm4993, %v5124, %v5126
        %v5128 = vrot.slane %v5076, 6
        %v5129 = vrot.slane %v5077, 6
        %v5130 = vsel %vm4993, %v5128, %v5129
        %v5131 = vrot.slane %v5078, 6
        %v5132 = vsel %vm4993, %v5129, %v5131
        %v5133 = vrot.slane %v5079, 6
        %v5134 = vrot.slane %v5080, 6
        %v5135 = vsel %vm4993, %v5133, %v5134
        %v5136 = vrot.slane %v5081, 6
        %v5137 = vsel %vm4993, %v5134, %v5136
        %v5138 = vrot.slane %v5082, 6
        %v5139 = vrot.slane %v5083, 6
        %v5140 = vsel %vm4993, %v5138, %v5139
        %v5141 = vrot.slane %v5084, 6
        %v5142 = vsel %vm4993, %v5139, %v5141
        %v5143 = vrot.slane %v5085, 6
        %v5144 = vrot.slane %v5086, 6
        %v5145 = vsel %vm4993, %v5143, %v5144
        %v5146 = vrot.slane %v5087, 6
        %v5147 = vsel %vm4993, %v5144, %v5146
        %v5148 = vrot.slane %v5088, 6
        %v5149 = vrot.slane %v5089, 6
        %v5150 = vsel %vm4993, %v5148, %v5149
        %v5151 = vrot.slane %v5090, 6
        %v5152 = vsel %vm4993, %v5149, %v5151
        %v5153 = vrot.slane %v5091, 6
        %v5154 = vrot.slane %v5092, 6
        %v5155 = vsel %vm4993, %v5153, %v5154
        %v5156 = vrot.slane %v5093, 6
        %v5157 = vsel %vm4993, %v5154, %v5156
        %v5174 = vadd.f32 %v5050, %v5120
        %v5175 = vadd.f32 %v5051, %v5122
        %v5176 = vadd.f32 %v5052, %v5125
        %v5177 = vadd.f32 %v5053, %v5127
        %v5178 = vadd.f32 %v5054, %v5130
        %v5179 = vadd.f32 %v5055, %v5132
        %v5180 = vadd.f32 %v5056, %v5135
        %v5181 = vadd.f32 %v5057, %v5137
        %v5182 = vadd.f32 %v5058, %v5140
        %v5183 = vadd.f32 %v5059, %v5142
        %v5184 = vadd.f32 %v5060, %v5145
        %v5185 = vadd.f32 %v5061, %v5147
        %v5186 = vadd.f32 %v5062, %v5150
        %v5187 = vadd.f32 %v5063, %v5152
        %v5188 = vadd.f32 %v5064, %v5155
        %v5189 = vadd.f32 %v5065, %v5157
        %v5190 = vlaneseq
        %v5191 = vshrl.u32 %v5190, 7
        %v5192 = vsub.s32 6, %v5191
        %v5193 = vrot.slane %v339, %v5192
        %v5194 = vmul.f32 %v301, %v5193
        %v5195 = vmul.f32 %v302, %v5193
        %v5196 = vmul.f32 %v303, %v5193
        %v5197 = vmul.f32 %v304, %v5193
        %v5198 = vmul.f32 %v305, %v5193
        %v5199 = vmul.f32 %v306, %v5193
        %v5200 = vmul.f32 %v307, %v5193
        %v5201 = vmul.f32 %v308, %v5193
        %v5202 = vmul.f32 %v309, %v5193
        %v5203 = vmul.f32 %v310, %v5193
        %v5204 = vmul.f32 %v311, %v5193
        %v5205 = vmul.f32 %v312, %v5193
        %v5206 = vmul.f32 %v313, %v5193
        %v5207 = vmul.f32 %v314, %v5193
        %v5208 = vmul.f32 %v315, %v5193
        %v5209 = vmul.f32 %v316, %v5193
        %v5210 = vmul.f32 %v317, %v5193
        %v5211 = vmul.f32 %v318, %v5193
        %v5212 = vmul.f32 %v319, %v5193
        %v5213 = vmul.f32 %v320, %v5193
        %v5214 = vmul.f32 %v321, %v5193
        %v5215 = vmul.f32 %v322, %v5193
        %v5216 = vmul.f32 %v323, %v5193
        %v5217 = vmul.f32 %v324, %v5193
        %v5242 = vrot.slane %v5194, 6
        %v5243 = vrot.slane %v5195, 6
        %v5244 = vsel %vm4993, %v5242, %v5243
        %v5245 = vrot.slane %v5196, 6
        %v5246 = vsel %vm4993, %v5243, %v5245
        %v5247 = vrot.slane %v5197, 6
        %v5248 = vrot.slane %v5198, 6
        %v5249 = vsel %vm4993, %v5247, %v5248
        %v5250 = vrot.slane %v5199, 6
        %v5251 = vsel %vm4993, %v5248, %v5250
        %v5252 = vrot.slane %v5200, 6
        %v5253 = vrot.slane %v5201, 6
        %v5254 = vsel %vm4993, %v5252, %v5253
        %v5255 = vrot.slane %v5202, 6
        %v5256 = vsel %vm4993, %v5253, %v5255
        %v5257 = vrot.slane %v5203, 6
        %v5258 = vrot.slane %v5204, 6
        %v5259 = vsel %vm4993, %v5257, %v5258
        %v5260 = vrot.slane %v5205, 6
        %v5261 = vsel %vm4993, %v5258, %v5260
        %v5262 = vrot.slane %v5206, 6
        %v5263 = vrot.slane %v5207, 6
        %v5264 = vsel %vm4993, %v5262, %v5263
        %v5265 = vrot.slane %v5208, 6
        %v5266 = vsel %vm4993, %v5263, %v5265
        %v5267 = vrot.slane %v5209, 6
        %v5268 = vrot.slane %v5210, 6
        %v5269 = vsel %vm4993, %v5267, %v5268
        %v5270 = vrot.slane %v5211, 6
        %v5271 = vsel %vm4993, %v5268, %v5270
        %v5272 = vrot.slane %v5212, 6
        %v5273 = vrot.slane %v5213, 6
        %v5274 = vsel %vm4993, %v5272, %v5273
        %v5275 = vrot.slane %v5214, 6
        %v5276 = vsel %vm4993, %v5273, %v5275
        %v5277 = vrot.slane %v5215, 6
        %v5278 = vrot.slane %v5216, 6
        %v5279 = vsel %vm4993, %v5277, %v5278
        %v5280 = vrot.slane %v5217, 6
        %v5281 = vsel %vm4993, %v5278, %v5280
        %v5298 = vadd.f32 %v5174, %v5244
        %v5299 = vadd.f32 %v5175, %v5246
        %v5300 = vadd.f32 %v5176, %v5249
        %v5301 = vadd.f32 %v5177, %v5251
        %v5302 = vadd.f32 %v5178, %v5254
        %v5303 = vadd.f32 %v5179, %v5256
        %v5304 = vadd.f32 %v5180, %v5259
        %v5305 = vadd.f32 %v5181, %v5261
        %v5306 = vadd.f32 %v5182, %v5264
        %v5307 = vadd.f32 %v5183, %v5266
        %v5308 = vadd.f32 %v5184, %v5269
        %v5309 = vadd.f32 %v5185, %v5271
        %v5310 = vadd.f32 %v5186, %v5274
        %v5311 = vadd.f32 %v5187, %v5276
        %v5312 = vadd.f32 %v5188, %v5279
        %v5313 = vadd.f32 %v5189, %v5281
        %v5314 = vlaneseq
        %v5315 = vshrl.u32 %v5314, 7
        %v5316 = vsub.s32 6, %v5315
        %v5317 = vrot.slane %v340, %v5316
        %v5318 = vmul.f32 %v304, %v5317
        %v5319 = vmul.f32 %v305, %v5317
        %v5320 = vmul.f32 %v306, %v5317
        %v5321 = vmul.f32 %v307, %v5317
        %v5322 = vmul.f32 %v308, %v5317
        %v5323 = vmul.f32 %v309, %v5317
        %v5324 = vmul.f32 %v310, %v5317
        %v5325 = vmul.f32 %v311, %v5317
        %v5326 = vmul.f32 %v312, %v5317
        %v5327 = vmul.f32 %v313, %v5317
        %v5328 = vmul.f32 %v314, %v5317
        %v5329 = vmul.f32 %v315, %v5317
        %v5330 = vmul.f32 %v316, %v5317
        %v5331 = vmul.f32 %v317, %v5317
        %v5332 = vmul.f32 %v318, %v5317
        %v5333 = vmul.f32 %v319, %v5317
        %v5334 = vmul.f32 %v320, %v5317
        %v5335 = vmul.f32 %v321, %v5317
        %v5336 = vmul.f32 %v322, %v5317
        %v5337 = vmul.f32 %v323, %v5317
        %v5338 = vmul.f32 %v324, %v5317
        %v5339 = vmul.f32 %v325, %v5317
        %v5340 = vmul.f32 %v326, %v5317
        %v5341 = vmul.f32 %v327, %v5317
        %v5366 = vrot.slane %v5318, 6
        %v5367 = vrot.slane %v5319, 6
        %v5368 = vsel %vm4993, %v5366, %v5367
        %v5369 = vrot.slane %v5320, 6
        %v5370 = vsel %vm4993, %v5367, %v5369
        %v5371 = vrot.slane %v5321, 6
        %v5372 = vrot.slane %v5322, 6
        %v5373 = vsel %vm4993, %v5371, %v5372
        %v5374 = vrot.slane %v5323, 6
        %v5375 = vsel %vm4993, %v5372, %v5374
        %v5376 = vrot.slane %v5324, 6
        %v5377 = vrot.slane %v5325, 6
        %v5378 = vsel %vm4993, %v5376, %v5377
        %v5379 = vrot.slane %v5326, 6
        %v5380 = vsel %vm4993, %v5377, %v5379
        %v5381 = vrot.slane %v5327, 6
        %v5382 = vrot.slane %v5328, 6
        %v5383 = vsel %vm4993, %v5381, %v5382
        %v5384 = vrot.slane %v5329, 6
        %v5385 = vsel %vm4993, %v5382, %v5384
        %v5386 = vrot.slane %v5330, 6
        %v5387 = vrot.slane %v5331, 6
        %v5388 = vsel %vm4993, %v5386, %v5387
        %v5389 = vrot.slane %v5332, 6
        %v5390 = vsel %vm4993, %v5387, %v5389
        %v5391 = vrot.slane %v5333, 6
        %v5392 = vrot.slane %v5334, 6
        %v5393 = vsel %vm4993, %v5391, %v5392
        %v5394 = vrot.slane %v5335, 6
        %v5395 = vsel %vm4993, %v5392, %v5394
        %v5396 = vrot.slane %v5336, 6
        %v5397 = vrot.slane %v5337, 6
        %v5398 = vsel %vm4993, %v5396, %v5397
        %v5399 = vrot.slane %v5338, 6
        %v5400 = vsel %vm4993, %v5397, %v5399
        %v5401 = vrot.slane %v5339, 6
        %v5402 = vrot.slane %v5340, 6
        %v5403 = vsel %vm4993, %v5401, %v5402
        %v5404 = vrot.slane %v5341, 6
        %v5405 = vsel %vm4993, %v5402, %v5404
        %v5422 = vadd.f32 %v5298, %v5368
        %v5423 = vadd.f32 %v5299, %v5370
        %v5424 = vadd.f32 %v5300, %v5373
        %v5425 = vadd.f32 %v5301, %v5375
        %v5426 = vadd.f32 %v5302, %v5378
        %v5427 = vadd.f32 %v5303, %v5380
        %v5428 = vadd.f32 %v5304, %v5383
        %v5429 = vadd.f32 %v5305, %v5385
        %v5430 = vadd.f32 %v5306, %v5388
        %v5431 = vadd.f32 %v5307, %v5390
        %v5432 = vadd.f32 %v5308, %v5393
        %v5433 = vadd.f32 %v5309, %v5395
        %v5434 = vadd.f32 %v5310, %v5398
        %v5435 = vadd.f32 %v5311, %v5400
        %v5436 = vadd.f32 %v5312, %v5403
        %v5437 = vadd.f32 %v5313, %v5405
        %v5438 = vlaneseq
        %v5439 = vshrl.u32 %v5438, 7
        %v5440 = vsub.s32 6, %v5439
        %v5441 = vrot.slane %v341, %v5440
        %v5442 = vmul.f32 %v307, %v5441
        %v5443 = vmul.f32 %v308, %v5441
        %v5444 = vmul.f32 %v309, %v5441
        %v5445 = vmul.f32 %v310, %v5441
        %v5446 = vmul.f32 %v311, %v5441
        %v5447 = vmul.f32 %v312, %v5441
        %v5448 = vmul.f32 %v313, %v5441
        %v5449 = vmul.f32 %v314, %v5441
        %v5450 = vmul.f32 %v315, %v5441
        %v5451 = vmul.f32 %v316, %v5441
        %v5452 = vmul.f32 %v317, %v5441
        %v5453 = vmul.f32 %v318, %v5441
        %v5454 = vmul.f32 %v319, %v5441
        %v5455 = vmul.f32 %v320, %v5441
        %v5456 = vmul.f32 %v321, %v5441
        %v5457 = vmul.f32 %v322, %v5441
        %v5458 = vmul.f32 %v323, %v5441
        %v5459 = vmul.f32 %v324, %v5441
        %v5460 = vmul.f32 %v325, %v5441
        %v5461 = vmul.f32 %v326, %v5441
        %v5462 = vmul.f32 %v327, %v5441
        %v5463 = vmul.f32 %v328, %v5441
        %v5464 = vmul.f32 %v329, %v5441
        %v5465 = vmul.f32 %v330, %v5441
        %v5490 = vrot.slane %v5442, 6
        %v5491 = vrot.slane %v5443, 6
        %v5492 = vsel %vm4993, %v5490, %v5491
        %v5493 = vrot.slane %v5444, 6
        %v5494 = vsel %vm4993, %v5491, %v5493
        %v5495 = vrot.slane %v5445, 6
        %v5496 = vrot.slane %v5446, 6
        %v5497 = vsel %vm4993, %v5495, %v5496
        %v5498 = vrot.slane %v5447, 6
        %v5499 = vsel %vm4993, %v5496, %v5498
        %v5500 = vrot.slane %v5448, 6
        %v5501 = vrot.slane %v5449, 6
        %v5502 = vsel %vm4993, %v5500, %v5501
        %v5503 = vrot.slane %v5450, 6
        %v5504 = vsel %vm4993, %v5501, %v5503
        %v5505 = vrot.slane %v5451, 6
        %v5506 = vrot.slane %v5452, 6
        %v5507 = vsel %vm4993, %v5505, %v5506
        %v5508 = vrot.slane %v5453, 6
        %v5509 = vsel %vm4993, %v5506, %v5508
        %v5510 = vrot.slane %v5454, 6
        %v5511 = vrot.slane %v5455, 6
        %v5512 = vsel %vm4993, %v5510, %v5511
        %v5513 = vrot.slane %v5456, 6
        %v5514 = vsel %vm4993, %v5511, %v5513
        %v5515 = vrot.slane %v5457, 6
        %v5516 = vrot.slane %v5458, 6
        %v5517 = vsel %vm4993, %v5515, %v5516
        %v5518 = vrot.slane %v5459, 6
        %v5519 = vsel %vm4993, %v5516, %v5518
        %v5520 = vrot.slane %v5460, 6
        %v5521 = vrot.slane %v5461, 6
        %v5522 = vsel %vm4993, %v5520, %v5521
        %v5523 = vrot.slane %v5462, 6
        %v5524 = vsel %vm4993, %v5521, %v5523
        %v5525 = vrot.slane %v5463, 6
        %v5526 = vrot.slane %v5464, 6
        %v5527 = vsel %vm4993, %v5525, %v5526
        %v5528 = vrot.slane %v5465, 6
        %v5529 = vsel %vm4993, %v5526, %v5528
        %v5546 = vadd.f32 %v5422, %v5492
        %v5547 = vadd.f32 %v5423, %v5494
        %v5548 = vadd.f32 %v5424, %v5497
        %v5549 = vadd.f32 %v5425, %v5499
        %v5550 = vadd.f32 %v5426, %v5502
        %v5551 = vadd.f32 %v5427, %v5504
        %v5552 = vadd.f32 %v5428, %v5507
        %v5553 = vadd.f32 %v5429, %v5509
        %v5554 = vadd.f32 %v5430, %v5512
        %v5555 = vadd.f32 %v5431, %v5514
        %v5556 = vadd.f32 %v5432, %v5517
        %v5557 = vadd.f32 %v5433, %v5519
        %v5558 = vadd.f32 %v5434, %v5522
        %v5559 = vadd.f32 %v5435, %v5524
        %v5560 = vadd.f32 %v5436, %v5527
        %v5561 = vadd.f32 %v5437, %v5529
        %v5562 = vlaneseq
        %v5563 = vshrl.u32 %v5562, 7
        %v5564 = vsub.s32 6, %v5563
        %v5565 = vrot.slane %v342, %v5564
        %v5566 = vmul.f32 %v310, %v5565
        %v5567 = vmul.f32 %v311, %v5565
        %v5568 = vmul.f32 %v312, %v5565
        %v5569 = vmul.f32 %v313, %v5565
        %v5570 = vmul.f32 %v314, %v5565
        %v5571 = vmul.f32 %v315, %v5565
        %v5572 = vmul.f32 %v316, %v5565
        %v5573 = vmul.f32 %v317, %v5565
        %v5574 = vmul.f32 %v318, %v5565
        %v5575 = vmul.f32 %v319, %v5565
        %v5576 = vmul.f32 %v320, %v5565
        %v5577 = vmul.f32 %v321, %v5565
        %v5578 = vmul.f32 %v322, %v5565
        %v5579 = vmul.f32 %v323, %v5565
        %v5580 = vmul.f32 %v324, %v5565
        %v5581 = vmul.f32 %v325, %v5565
        %v5582 = vmul.f32 %v326, %v5565
        %v5583 = vmul.f32 %v327, %v5565
        %v5584 = vmul.f32 %v328, %v5565
        %v5585 = vmul.f32 %v329, %v5565
        %v5586 = vmul.f32 %v330, %v5565
        %v5587 = vmul.f32 %v331, %v5565
        %v5588 = vmul.f32 %v332, %v5565
        %v5589 = vmul.f32 %v333, %v5565
        %v5614 = vrot.slane %v5566, 6
        %v5615 = vrot.slane %v5567, 6
        %v5616 = vsel %vm4993, %v5614, %v5615
        %v5617 = vrot.slane %v5568, 6
        %v5618 = vsel %vm4993, %v5615, %v5617
        %v5619 = vrot.slane %v5569, 6
        %v5620 = vrot.slane %v5570, 6
        %v5621 = vsel %vm4993, %v5619, %v5620
        %v5622 = vrot.slane %v5571, 6
        %v5623 = vsel %vm4993, %v5620, %v5622
        %v5624 = vrot.slane %v5572, 6
        %v5625 = vrot.slane %v5573, 6
        %v5626 = vsel %vm4993, %v5624, %v5625
        %v5627 = vrot.slane %v5574, 6
        %v5628 = vsel %vm4993, %v5625, %v5627
        %v5629 = vrot.slane %v5575, 6
        %v5630 = vrot.slane %v5576, 6
        %v5631 = vsel %vm4993, %v5629, %v5630
        %v5632 = vrot.slane %v5577, 6
        %v5633 = vsel %vm4993, %v5630, %v5632
        %v5634 = vrot.slane %v5578, 6
        %v5635 = vrot.slane %v5579, 6
        %v5636 = vsel %vm4993, %v5634, %v5635
        %v5637 = vrot.slane %v5580, 6
        %v5638 = vsel %vm4993, %v5635, %v5637
        %v5639 = vrot.slane %v5581, 6
        %v5640 = vrot.slane %v5582, 6
        %v5641 = vsel %vm4993, %v5639, %v5640
        %v5642 = vrot.slane %v5583, 6
        %v5643 = vsel %vm4993, %v5640, %v5642
        %v5644 = vrot.slane %v5584, 6
        %v5645 = vrot.slane %v5585, 6
        %v5646 = vsel %vm4993, %v5644, %v5645
        %v5647 = vrot.slane %v5586, 6
        %v5648 = vsel %vm4993, %v5645, %v5647
        %v5649 = vrot.slane %v5587, 6
        %v5650 = vrot.slane %v5588, 6
        %v5651 = vsel %vm4993, %v5649, %v5650
        %v5652 = vrot.slane %v5589, 6
        %v5653 = vsel %vm4993, %v5650, %v5652
        %v5670 = vadd.f32 %v5546, %v5616
        %v5671 = vadd.f32 %v5547, %v5618
        %v5672 = vadd.f32 %v5548, %v5621
        %v5673 = vadd.f32 %v5549, %v5623
        %v5674 = vadd.f32 %v5550, %v5626
        %v5675 = vadd.f32 %v5551, %v5628
        %v5676 = vadd.f32 %v5552, %v5631
        %v5677 = vadd.f32 %v5553, %v5633
        %v5678 = vadd.f32 %v5554, %v5636
        %v5679 = vadd.f32 %v5555, %v5638
        %v5680 = vadd.f32 %v5556, %v5641
        %v5681 = vadd.f32 %v5557, %v5643
        %v5682 = vadd.f32 %v5558, %v5646
        %v5683 = vadd.f32 %v5559, %v5648
        %v5684 = vadd.f32 %v5560, %v5651
        %v5685 = vadd.f32 %v5561, %v5653
        %v5686 = vlaneseq
        %v5687 = vshrl.u32 %v5686, 7
        %v5688 = vsub.s32 6, %v5687
        %v5689 = vrot.slane %v343, %v5688
        %v5690 = vmul.f32 %v313, %v5689
        %v5691 = vmul.f32 %v314, %v5689
        %v5692 = vmul.f32 %v315, %v5689
        %v5693 = vmul.f32 %v316, %v5689
        %v5694 = vmul.f32 %v317, %v5689
        %v5695 = vmul.f32 %v318, %v5689
        %v5696 = vmul.f32 %v319, %v5689
        %v5697 = vmul.f32 %v320, %v5689
        %v5698 = vmul.f32 %v321, %v5689
        %v5699 = vmul.f32 %v322, %v5689
        %v5700 = vmul.f32 %v323, %v5689
        %v5701 = vmul.f32 %v324, %v5689
        %v5702 = vmul.f32 %v325, %v5689
        %v5703 = vmul.f32 %v326, %v5689
        %v5704 = vmul.f32 %v327, %v5689
        %v5705 = vmul.f32 %v328, %v5689
        %v5706 = vmul.f32 %v329, %v5689
        %v5707 = vmul.f32 %v330, %v5689
        %v5708 = vmul.f32 %v331, %v5689
        %v5709 = vmul.f32 %v332, %v5689
        %v5710 = vmul.f32 %v333, %v5689
        %v5711 = vmul.f32 %v334, %v5689
        %v5712 = vmul.f32 %v335, %v5689
        %v5713 = vmul.f32 %v336, %v5689
        %v5738 = vrot.slane %v5690, 6
        %v5739 = vrot.slane %v5691, 6
        %v5740 = vsel %vm4993, %v5738, %v5739
        %v5741 = vrot.slane %v5692, 6
        %v5742 = vsel %vm4993, %v5739, %v5741
        %v5743 = vrot.slane %v5693, 6
        %v5744 = vrot.slane %v5694, 6
        %v5745 = vsel %vm4993, %v5743, %v5744
        %v5746 = vrot.slane %v5695, 6
        %v5747 = vsel %vm4993, %v5744, %v5746
        %v5748 = vrot.slane %v5696, 6
        %v5749 = vrot.slane %v5697, 6
        %v5750 = vsel %vm4993, %v5748, %v5749
        %v5751 = vrot.slane %v5698, 6
        %v5752 = vsel %vm4993, %v5749, %v5751
        %v5753 = vrot.slane %v5699, 6
        %v5754 = vrot.slane %v5700, 6
        %v5755 = vsel %vm4993, %v5753, %v5754
        %v5756 = vrot.slane %v5701, 6
        %v5757 = vsel %vm4993, %v5754, %v5756
        %v5758 = vrot.slane %v5702, 6
        %v5759 = vrot.slane %v5703, 6
        %v5760 = vsel %vm4993, %v5758, %v5759
        %v5761 = vrot.slane %v5704, 6
        %v5762 = vsel %vm4993, %v5759, %v5761
        %v5763 = vrot.slane %v5705, 6
        %v5764 = vrot.slane %v5706, 6
        %v5765 = vsel %vm4993, %v5763, %v5764
        %v5766 = vrot.slane %v5707, 6
        %v5767 = vsel %vm4993, %v5764, %v5766
        %v5768 = vrot.slane %v5708, 6
        %v5769 = vrot.slane %v5709, 6
        %v5770 = vsel %vm4993, %v5768, %v5769
        %v5771 = vrot.slane %v5710, 6
        %v5772 = vsel %vm4993, %v5769, %v5771
        %v5773 = vrot.slane %v5711, 6
        %v5774 = vrot.slane %v5712, 6
        %v5775 = vsel %vm4993, %v5773, %v5774
        %v5776 = vrot.slane %v5713, 6
        %v5777 = vsel %vm4993, %v5774, %v5776
        %v5794 = vadd.f32 %v5670, %v5740
        %v5795 = vadd.f32 %v5671, %v5742
        %v5796 = vadd.f32 %v5672, %v5745
        %v5797 = vadd.f32 %v5673, %v5747
        %v5798 = vadd.f32 %v5674, %v5750
        %v5799 = vadd.f32 %v5675, %v5752
        %v5800 = vadd.f32 %v5676, %v5755
        %v5801 = vadd.f32 %v5677, %v5757
        %v5802 = vadd.f32 %v5678, %v5760
        %v5803 = vadd.f32 %v5679, %v5762
        %v5804 = vadd.f32 %v5680, %v5765
        %v5805 = vadd.f32 %v5681, %v5767
        %v5806 = vadd.f32 %v5682, %v5770
        %v5807 = vadd.f32 %v5683, %v5772
        %v5808 = vadd.f32 %v5684, %v5775
        %v5809 = vadd.f32 %v5685, %v5777
        %v5810 = vld [vmem:[%s2] sm:$0x1]
        %v5812 = vlaneseq
        %v5813 = vshrl.u32 %v5812, 7
        %v5814 = vsub.s32 0, %v5813
        %v5815 = vrot.slane %v5810, %v5814
        %v5817 = vadd.f32 %v5794, %v5815
        %v5818 = vadd.f32 %v5795, %v5815
        %v5819 = vadd.f32 %v5796, %v5815
        %v5820 = vadd.f32 %v5797, %v5815
        %v5821 = vadd.f32 %v5798, %v5815
        %v5822 = vadd.f32 %v5799, %v5815
        %v5823 = vadd.f32 %v5800, %v5815
        %v5824 = vadd.f32 %v5801, %v5815
        %v5825 = vadd.f32 %v5802, %v5815
        %v5826 = vadd.f32 %v5803, %v5815
        %v5827 = vadd.f32 %v5804, %v5815
        %v5828 = vadd.f32 %v5805, %v5815
        %v5829 = vadd.f32 %v5806, %v5815
        %v5830 = vadd.f32 %v5807, %v5815
        %v5831 = vadd.f32 %v5808, %v5815
        %v5832 = vadd.f32 %v5809, %v5815
        %vm5833 = vcmask 261120
        %v5834 = vsel %vm5833, %v5817, 0.0
        %5835 = vadd.xlane.f32.xlu0 %v5834
        %v5836 = vpop.xlane.xlu0 %5835
        %v5837 = vsel %vm5833, %v5818, 0.0
        %5838 = vadd.xlane.f32.xlu0 %v5837
        %v5839 = vpop.xlane.xlu0 %5838
        %v5840 = vsel %vm5833, %v5819, 0.0
        %5841 = vadd.xlane.f32.xlu0 %v5840
        %v5842 = vpop.xlane.xlu0 %5841
        %v5843 = vsel %vm5833, %v5820, 0.0
        %5844 = vadd.xlane.f32.xlu0 %v5843
        %v5845 = vpop.xlane.xlu0 %5844
        %v5846 = vsel %vm5833, %v5821, 0.0
        %5847 = vadd.xlane.f32.xlu0 %v5846
        %v5848 = vpop.xlane.xlu0 %5847
        %v5849 = vsel %vm5833, %v5822, 0.0
        %5850 = vadd.xlane.f32.xlu0 %v5849
        %v5851 = vpop.xlane.xlu0 %5850
        %v5852 = vsel %vm5833, %v5823, 0.0
        %5853 = vadd.xlane.f32.xlu0 %v5852
        %v5854 = vpop.xlane.xlu0 %5853
        %v5855 = vsel %vm5833, %v5824, 0.0
        %5856 = vadd.xlane.f32.xlu0 %v5855
        %v5857 = vpop.xlane.xlu0 %5856
        %v5858 = vsel %vm5833, %v5825, 0.0
        %5859 = vadd.xlane.f32.xlu0 %v5858
        %v5860 = vpop.xlane.xlu0 %5859
        %v5861 = vsel %vm5833, %v5826, 0.0
        %5862 = vadd.xlane.f32.xlu0 %v5861
        %v5863 = vpop.xlane.xlu0 %5862
        %v5864 = vsel %vm5833, %v5827, 0.0
        %5865 = vadd.xlane.f32.xlu0 %v5864
        %v5866 = vpop.xlane.xlu0 %5865
        %v5867 = vsel %vm5833, %v5828, 0.0
        %5868 = vadd.xlane.f32.xlu0 %v5867
        %v5869 = vpop.xlane.xlu0 %5868
        %v5870 = vsel %vm5833, %v5829, 0.0
        %5871 = vadd.xlane.f32.xlu0 %v5870
        %v5872 = vpop.xlane.xlu0 %5871
        %v5873 = vsel %vm5833, %v5830, 0.0
        %5874 = vadd.xlane.f32.xlu0 %v5873
        %v5875 = vpop.xlane.xlu0 %5874
        %v5876 = vsel %vm5833, %v5831, 0.0
        %5877 = vadd.xlane.f32.xlu0 %v5876
        %v5878 = vpop.xlane.xlu0 %5877
        %v5879 = vsel %vm5833, %v5832, 0.0
        %5880 = vadd.xlane.f32.xlu0 %v5879
        %v5881 = vpop.xlane.xlu0 %5880
        %v5882 = vrcp.pop 32.0
        %v5883 = vmul.f32 %v5836, %v5882
        %v5884 = vmul.f32 %v5839, %v5882
        %v5885 = vmul.f32 %v5842, %v5882
        %v5886 = vmul.f32 %v5845, %v5882
        %v5887 = vmul.f32 %v5848, %v5882
        %v5888 = vmul.f32 %v5851, %v5882
        %v5889 = vmul.f32 %v5854, %v5882
        %v5890 = vmul.f32 %v5857, %v5882
        %v5891 = vmul.f32 %v5860, %v5882
        %v5892 = vmul.f32 %v5863, %v5882
        %v5893 = vmul.f32 %v5866, %v5882
        %v5894 = vmul.f32 %v5869, %v5882
        %v5895 = vmul.f32 %v5872, %v5882
        %v5896 = vmul.f32 %v5875, %v5882
        %v5897 = vmul.f32 %v5878, %v5882
        %v5898 = vmul.f32 %v5881, %v5882
        %v5899 = vsub.f32 %v5817, %v5883
        %v5900 = vsub.f32 %v5818, %v5884
        %v5901 = vsub.f32 %v5819, %v5885
        %v5902 = vsub.f32 %v5820, %v5886
        %v5903 = vsub.f32 %v5821, %v5887
        %v5904 = vsub.f32 %v5822, %v5888
        %v5905 = vsub.f32 %v5823, %v5889
        %v5906 = vsub.f32 %v5824, %v5890
        %v5907 = vsub.f32 %v5825, %v5891
        %v5908 = vsub.f32 %v5826, %v5892
        %v5909 = vsub.f32 %v5827, %v5893
        %v5910 = vsub.f32 %v5828, %v5894
        %v5911 = vsub.f32 %v5829, %v5895
        %v5912 = vsub.f32 %v5830, %v5896
        %v5913 = vsub.f32 %v5831, %v5897
        %v5914 = vsub.f32 %v5832, %v5898
        %v5915 = vmul.f32 %v5899, %v5899
        %v5916 = vmul.f32 %v5900, %v5900
        %v5917 = vmul.f32 %v5901, %v5901
        %v5918 = vmul.f32 %v5902, %v5902
        %v5919 = vmul.f32 %v5903, %v5903
        %v5920 = vmul.f32 %v5904, %v5904
        %v5921 = vmul.f32 %v5905, %v5905
        %v5922 = vmul.f32 %v5906, %v5906
        %v5923 = vmul.f32 %v5907, %v5907
        %v5924 = vmul.f32 %v5908, %v5908
        %v5925 = vmul.f32 %v5909, %v5909
        %v5926 = vmul.f32 %v5910, %v5910
        %v5927 = vmul.f32 %v5911, %v5911
        %v5928 = vmul.f32 %v5912, %v5912
        %v5929 = vmul.f32 %v5913, %v5913
        %v5930 = vmul.f32 %v5914, %v5914
        %v5931 = vsel %vm5833, %v5915, 0.0
        %5932 = vadd.xlane.f32.xlu0 %v5931
        %v5933 = vpop.xlane.xlu0 %5932
        %v5934 = vsel %vm5833, %v5916, 0.0
        %5935 = vadd.xlane.f32.xlu0 %v5934
        %v5936 = vpop.xlane.xlu0 %5935
        %v5937 = vsel %vm5833, %v5917, 0.0
        %5938 = vadd.xlane.f32.xlu0 %v5937
        %v5939 = vpop.xlane.xlu0 %5938
        %v5940 = vsel %vm5833, %v5918, 0.0
        %5941 = vadd.xlane.f32.xlu0 %v5940
        %v5942 = vpop.xlane.xlu0 %5941
        %v5943 = vsel %vm5833, %v5919, 0.0
        %5944 = vadd.xlane.f32.xlu0 %v5943
        %v5945 = vpop.xlane.xlu0 %5944
        %v5946 = vsel %vm5833, %v5920, 0.0
        %5947 = vadd.xlane.f32.xlu0 %v5946
        %v5948 = vpop.xlane.xlu0 %5947
        %v5949 = vsel %vm5833, %v5921, 0.0
        %5950 = vadd.xlane.f32.xlu0 %v5949
        %v5951 = vpop.xlane.xlu0 %5950
        %v5952 = vsel %vm5833, %v5922, 0.0
        %5953 = vadd.xlane.f32.xlu0 %v5952
        %v5954 = vpop.xlane.xlu0 %5953
        %v5955 = vsel %vm5833, %v5923, 0.0
        %5956 = vadd.xlane.f32.xlu0 %v5955
        %v5957 = vpop.xlane.xlu0 %5956
        %v5958 = vsel %vm5833, %v5924, 0.0
        %5959 = vadd.xlane.f32.xlu0 %v5958
        %v5960 = vpop.xlane.xlu0 %5959
        %v5961 = vsel %vm5833, %v5925, 0.0
        %5962 = vadd.xlane.f32.xlu0 %v5961
        %v5963 = vpop.xlane.xlu0 %5962
        %v5964 = vsel %vm5833, %v5926, 0.0
        %5965 = vadd.xlane.f32.xlu0 %v5964
        %v5966 = vpop.xlane.xlu0 %5965
        %v5967 = vsel %vm5833, %v5927, 0.0
        %5968 = vadd.xlane.f32.xlu0 %v5967
        %v5969 = vpop.xlane.xlu0 %5968
        %v5970 = vsel %vm5833, %v5928, 0.0
        %5971 = vadd.xlane.f32.xlu0 %v5970
        %v5972 = vpop.xlane.xlu0 %5971
        %v5973 = vsel %vm5833, %v5929, 0.0
        %5974 = vadd.xlane.f32.xlu0 %v5973
        %v5975 = vpop.xlane.xlu0 %5974
        %v5976 = vsel %vm5833, %v5930, 0.0
        %5977 = vadd.xlane.f32.xlu0 %v5976
        %v5978 = vpop.xlane.xlu0 %5977
        %v5979 = vmul.f32 %v5933, %v5882
        %v5980 = vmul.f32 %v5936, %v5882
        %v5981 = vmul.f32 %v5939, %v5882
        %v5982 = vmul.f32 %v5942, %v5882
        %v5983 = vmul.f32 %v5945, %v5882
        %v5984 = vmul.f32 %v5948, %v5882
        %v5985 = vmul.f32 %v5951, %v5882
        %v5986 = vmul.f32 %v5954, %v5882
        %v5987 = vmul.f32 %v5957, %v5882
        %v5988 = vmul.f32 %v5960, %v5882
        %v5989 = vmul.f32 %v5963, %v5882
        %v5990 = vmul.f32 %v5966, %v5882
        %v5991 = vmul.f32 %v5969, %v5882
        %v5992 = vmul.f32 %v5972, %v5882
        %v5993 = vmul.f32 %v5975, %v5882
        %v5994 = vmul.f32 %v5978, %v5882
        %v5995 = vadd.f32 %v5979, 1e-06
        %v5996 = vadd.f32 %v5980, 1e-06
        %v5997 = vadd.f32 %v5981, 1e-06
        %v5998 = vadd.f32 %v5982, 1e-06
        %v5999 = vadd.f32 %v5983, 1e-06
        %v6000 = vadd.f32 %v5984, 1e-06
        %v6001 = vadd.f32 %v5985, 1e-06
        %v6002 = vadd.f32 %v5986, 1e-06
        %v6003 = vadd.f32 %v5987, 1e-06
        %v6004 = vadd.f32 %v5988, 1e-06
        %v6005 = vadd.f32 %v5989, 1e-06
        %v6006 = vadd.f32 %v5990, 1e-06
        %v6007 = vadd.f32 %v5991, 1e-06
        %v6008 = vadd.f32 %v5992, 1e-06
        %v6009 = vadd.f32 %v5993, 1e-06
        %v6010 = vadd.f32 %v5994, 1e-06
        %v6011 = vrsqrt.pop %v5995
        %v6012 = vrsqrt.pop %v5996
        %v6013 = vrsqrt.pop %v5997
        %v6014 = vrsqrt.pop %v5998
        %v6015 = vrsqrt.pop %v5999
        %v6016 = vrsqrt.pop %v6000
        %v6017 = vrsqrt.pop %v6001
        %v6018 = vrsqrt.pop %v6002
        %v6019 = vrsqrt.pop %v6003
        %v6020 = vrsqrt.pop %v6004
        %v6021 = vrsqrt.pop %v6005
        %v6022 = vrsqrt.pop %v6006
        %v6023 = vrsqrt.pop %v6007
        %v6024 = vrsqrt.pop %v6008
        %v6025 = vrsqrt.pop %v6009
        %v6026 = vrsqrt.pop %v6010
        %v6027 = vmul.f32 %v5899, %v6011
        %v6028 = vmul.f32 %v5900, %v6012
        %v6029 = vmul.f32 %v5901, %v6013
        %v6030 = vmul.f32 %v5902, %v6014
        %v6031 = vmul.f32 %v5903, %v6015
        %v6032 = vmul.f32 %v5904, %v6016
        %v6033 = vmul.f32 %v5905, %v6017
        %v6034 = vmul.f32 %v5906, %v6018
        %v6035 = vmul.f32 %v5907, %v6019
        %v6036 = vmul.f32 %v5908, %v6020
        %v6037 = vmul.f32 %v5909, %v6021
        %v6038 = vmul.f32 %v5910, %v6022
        %v6039 = vmul.f32 %v5911, %v6023
        %v6040 = vmul.f32 %v5912, %v6024
        %v6041 = vmul.f32 %v5913, %v6025
        %v6042 = vmul.f32 %v5914, %v6026
        %v6043 = vld [vmem:[%s3] sm:$0xff]
        %v6044 = vld [vmem:[%s3 + $0x8] sm:$0xff]
        %v6045 = vld [vmem:[%s3 + $0x10] sm:$0xff]
        %v6046 = vld [vmem:[%s3 + $0x18] sm:$0xff]
        %v6047 = vld [vmem:[%s4] sm:$0x1]
        %v6049 = vlaneseq
        %v6050 = vshrl.u32 %v6049, 7
        %v6051 = vsub.s32 0, %v6050
        %v6052 = vrot.slane %v6047, %v6051
        %v6055 = vsel %vm5833, %v6027, 0
        %v6058 = vsel %vm5833, %v6028, 0
        %v6061 = vsel %vm5833, %v6029, 0
        %v6064 = vsel %vm5833, %v6030, 0
        %v6067 = vsel %vm5833, %v6031, 0
        %v6070 = vsel %vm5833, %v6032, 0
        %v6073 = vsel %vm5833, %v6033, 0
        %v6076 = vsel %vm5833, %v6034, 0
        %v6079 = vsel %vm5833, %v6035, 0
        %v6082 = vsel %vm5833, %v6036, 0
        %v6085 = vsel %vm5833, %v6037, 0
        %v6088 = vsel %vm5833, %v6038, 0
        %v6091 = vsel %vm5833, %v6039, 0
        %v6094 = vsel %vm5833, %v6040, 0
        %v6097 = vsel %vm5833, %v6041, 0
        %v6100 = vsel %vm5833, %v6042, 0
        %6102 = vmatprep.subr.mxu0 0.0
        %6103 = vmatpush1.msra.mxu0 %v6043
        %6104 = vmatprep.subr.mxu0 0.0
        %6105 = vmatpush1.msra.mxu0 %v6044
        %6106 = vmatprep.subr.mxu0 0.0
        %6107 = vmatpush1.msra.mxu0 %v6045
        %6108 = vmatprep.subr.mxu0 0.0
        %6109 = vmatpush1.msra.mxu0 %v6046
        %6110 = vmatprep.subr.mxu0 0.0
        %6111 = vmatpush1.msra.mxu0 0.0
        %6112 = vmatprep.subr.mxu0 0.0
        %6113 = vmatpush1.msra.mxu0 0.0
        %6114 = vmatprep.subr.mxu0 0.0
        %6115 = vmatpush1.msra.mxu0 0.0
        %6116 = vmatprep.subr.mxu0 0.0
        %6117 = vmatpush1.msra.mxu0 0.0
        %6118 = vmatprep.subr.mxu0 0.0
        %6119 = vmatpush1.msra.mxu0 0.0
        %6120 = vmatprep.subr.mxu0 0.0
        %6121 = vmatpush1.msra.mxu0 0.0
        %6122 = vmatprep.subr.mxu0 0.0
        %6123 = vmatpush1.msra.mxu0 0.0
        %6124 = vmatprep.subr.mxu0 0.0
        %6125 = vmatpush1.msra.mxu0 0.0
        %6126 = vmatprep.subr.mxu0 0.0
        %6127 = vmatpush1.msra.mxu0 0.0
        %6128 = vmatprep.subr.mxu0 0.0
        %6129 = vmatpush1.msra.mxu0 0.0
        %6130 = vmatprep.subr.mxu0 0.0
        %6131 = vmatpush1.msra.mxu0 0.0
        %6132 = vmatprep.subr.mxu0 0.0
        %6133 = vmatpush1.msra.mxu0 0.0
        %6134 = vmatprep.subr.mxu0 0.0
        %6135 = vmatpush1.msra.mxu0 0.0
        %6136 = vmatprep.subr.mxu0 0.0
        %6137 = vmatpush1.msra.mxu0 0.0
        %6138 = vmatprep.subr.mxu0 0.0
        %6139 = vmatpush1.msra.mxu0 0.0
        %6140 = vmatprep.subr.mxu0 0.0
        %6141 = vmatpush1.msra.mxu0 0.0
        %6142 = vmatprep.subr.mxu0 0.0
        %6143 = vmatpush1.msra.mxu0 0.0
        %6144 = vmatprep.subr.mxu0 0.0
        %6145 = vmatpush1.msra.mxu0 0.0
        %6146 = vmatprep.subr.mxu0 0.0
        %6147 = vmatpush1.msra.mxu0 0.0
        %6148 = vmatprep.subr.mxu0 0.0
        %6149 = vmatpush1.msra.mxu0 0.0
        %6150 = vmatprep.subr.mxu0 0.0
        %6151 = vmatpush1.msra.mxu0 0.0
        %6152 = vmatprep.subr.mxu0 0.0
        %6153 = vmatpush1.msra.mxu0 0.0
        %6154 = vmatprep.subr.mxu0 0.0
        %6155 = vmatpush1.msra.mxu0 0.0
        %6156 = vmatprep.subr.mxu0 0.0
        %6157 = vmatpush1.msra.mxu0 0.0
        %6158 = vmatprep.subr.mxu0 0.0
        %6159 = vmatpush1.msra.mxu0 0.0
        %6160 = vmatprep.subr.mxu0 0.0
        %6161 = vmatpush1.msra.mxu0 0.0
        %6162 = vmatprep.subr.mxu0 0.0
        %6163 = vmatpush1.msra.mxu0 0.0
        %6164 = vmatprep.subr.mxu0 0.0
        %6165 = vmatpush1.msra.mxu0 0.0
        %6166 = vmatprep.mubr.f32.mxu0 0.0
        %6167 = vmatmul.mubr.f32.gmra.mrb[0].mxu0 %v6055
        %v6168 = vpop.f32.mrb[0].mxu0
        %v6169 = vadd.f32 %v6052, %v6168
        %v6170 = vpop.f32.mrb[0].mxu0
        %6171 = vmatprep.mubr.f32.mxu0 0.0
        %6172 = vmatmul.mubr.f32.gmra.mrb[0].mxu0 %v6058
        %v6173 = vpop.f32.mrb[0].mxu0
        %v6174 = vadd.f32 %v6052, %v6173
        %v6175 = vpop.f32.mrb[0].mxu0
        %6176 = vmatprep.mubr.f32.mxu0 0.0
        %6177 = vmatmul.mubr.f32.gmra.mrb[0].mxu0 %v6061
        %v6178 = vpop.f32.mrb[0].mxu0
        %v6179 = vadd.f32 %v6052, %v6178
        %v6180 = vpop.f32.mrb[0].mxu0
        %6181 = vmatprep.mubr.f32.mxu0 0.0
        %6182 = vmatmul.mubr.f32.gmra.mrb[0].mxu0 %v6064
        %v6183 = vpop.f32.mrb[0].mxu0
        %v6184 = vadd.f32 %v6052, %v6183
        %v6185 = vpop.f32.mrb[0].mxu0
        %6186 = vmatprep.mubr.f32.mxu0 0.0
        %6187 = vmatmul.mubr.f32.gmra.mrb[0].mxu0 %v6067
        %v6188 = vpop.f32.mrb[0].mxu0
        %v6189 = vadd.f32 %v6052, %v6188
        %v6190 = vpop.f32.mrb[0].mxu0
        %6191 = vmatprep.mubr.f32.mxu0 0.0
        %6192 = vmatmul.mubr.f32.gmra.mrb[0].mxu0 %v6070
        %v6193 = vpop.f32.mrb[0].mxu0
        %v6194 = vadd.f32 %v6052, %v6193
        %v6195 = vpop.f32.mrb[0].mxu0
        %6196 = vmatprep.mubr.f32.mxu0 0.0
        %6197 = vmatmul.mubr.f32.gmra.mrb[0].mxu0 %v6073
        %v6198 = vpop.f32.mrb[0].mxu0
        %v6199 = vadd.f32 %v6052, %v6198
        %v6200 = vpop.f32.mrb[0].mxu0
        %6201 = vmatprep.mubr.f32.mxu0 0.0
        %6202 = vmatmul.mubr.f32.gmra.mrb[0].mxu0 %v6076
        %v6203 = vpop.f32.mrb[0].mxu0
        %v6204 = vadd.f32 %v6052, %v6203
        %v6205 = vpop.f32.mrb[0].mxu0
        %6206 = vmatprep.mubr.f32.mxu0 0.0
        %6207 = vmatmul.mubr.f32.gmra.mrb[0].mxu0 %v6079
        %v6208 = vpop.f32.mrb[0].mxu0
        %v6209 = vadd.f32 %v6052, %v6208
        %v6210 = vpop.f32.mrb[0].mxu0
        %6211 = vmatprep.mubr.f32.mxu0 0.0
        %6212 = vmatmul.mubr.f32.gmra.mrb[0].mxu0 %v6082
        %v6213 = vpop.f32.mrb[0].mxu0
        %v6214 = vadd.f32 %v6052, %v6213
        %v6215 = vpop.f32.mrb[0].mxu0
        %6216 = vmatprep.mubr.f32.mxu0 0.0
        %6217 = vmatmul.mubr.f32.gmra.mrb[0].mxu0 %v6085
        %v6218 = vpop.f32.mrb[0].mxu0
        %v6219 = vadd.f32 %v6052, %v6218
        %v6220 = vpop.f32.mrb[0].mxu0
        %6221 = vmatprep.mubr.f32.mxu0 0.0
        %6222 = vmatmul.mubr.f32.gmra.mrb[0].mxu0 %v6088
        %v6223 = vpop.f32.mrb[0].mxu0
        %v6224 = vadd.f32 %v6052, %v6223
        %v6225 = vpop.f32.mrb[0].mxu0
        %6226 = vmatprep.mubr.f32.mxu0 0.0
        %6227 = vmatmul.mubr.f32.gmra.mrb[0].mxu0 %v6091
        %v6228 = vpop.f32.mrb[0].mxu0
        %v6229 = vadd.f32 %v6052, %v6228
        %v6230 = vpop.f32.mrb[0].mxu0
        %6231 = vmatprep.mubr.f32.mxu0 0.0
        %6232 = vmatmul.mubr.f32.gmra.mrb[0].mxu0 %v6094
        %v6233 = vpop.f32.mrb[0].mxu0
        %v6234 = vadd.f32 %v6052, %v6233
        %v6235 = vpop.f32.mrb[0].mxu0
        %6236 = vmatprep.mubr.f32.mxu0 0.0
        %6237 = vmatmul.mubr.f32.gmra.mrb[0].mxu0 %v6097
        %v6238 = vpop.f32.mrb[0].mxu0
        %v6239 = vadd.f32 %v6052, %v6238
        %v6240 = vpop.f32.mrb[0].mxu0
        %6241 = vmatprep.mubr.f32.mxu0 0.0
        %6242 = vmatmul.mubr.f32.gmra.mrb[0].mxu0 %v6100
        %v6243 = vpop.f32.mrb[0].mxu0
        %v6244 = vadd.f32 %v6052, %v6243
        %v6245 = vpop.f32.mrb[0].mxu0
        %6246 = vdwg.mxu0
        %v6247 = vmul.f32 %v6169, 0.5
        %v6248 = vmul.f32 %v6174, 0.5
        %v6249 = vmul.f32 %v6179, 0.5
        %v6250 = vmul.f32 %v6184, 0.5
        %v6251 = vmul.f32 %v6189, 0.5
        %v6252 = vmul.f32 %v6194, 0.5
        %v6253 = vmul.f32 %v6199, 0.5
        %v6254 = vmul.f32 %v6204, 0.5
        %v6255 = vmul.f32 %v6209, 0.5
        %v6256 = vmul.f32 %v6214, 0.5
        %v6257 = vmul.f32 %v6219, 0.5
        %v6258 = vmul.f32 %v6224, 0.5
        %v6259 = vmul.f32 %v6229, 0.5
        %v6260 = vmul.f32 %v6234, 0.5
        %v6261 = vmul.f32 %v6239, 0.5
        %v6262 = vmul.f32 %v6244, 0.5
        %v6263 = vmul.f32 %v6169, 0.70710677
        %v6264 = vmul.f32 %v6174, 0.70710677
        %v6265 = vmul.f32 %v6179, 0.70710677
        %v6266 = vmul.f32 %v6184, 0.70710677
        %v6267 = vmul.f32 %v6189, 0.70710677
        %v6268 = vmul.f32 %v6194, 0.70710677
        %v6269 = vmul.f32 %v6199, 0.70710677
        %v6270 = vmul.f32 %v6204, 0.70710677
        %v6271 = vmul.f32 %v6209, 0.70710677
        %v6272 = vmul.f32 %v6214, 0.70710677
        %v6273 = vmul.f32 %v6219, 0.70710677
        %v6274 = vmul.f32 %v6224, 0.70710677
        %v6275 = vmul.f32 %v6229, 0.70710677
        %v6276 = vmul.f32 %v6234, 0.70710677
        %v6277 = vmul.f32 %v6239, 0.70710677
        %v6278 = vmul.f32 %v6244, 0.70710677
        %v6279 = vand.u32 2147483647, %v6263
        %v6280 = vand.u32 2147483647, %v6264
        %v6281 = vand.u32 2147483647, %v6265
        %v6282 = vand.u32 2147483647, %v6266
        %v6283 = vand.u32 2147483647, %v6267
        %v6284 = vand.u32 2147483647, %v6268
        %v6285 = vand.u32 2147483647, %v6269
        %v6286 = vand.u32 2147483647, %v6270
        %v6287 = vand.u32 2147483647, %v6271
        %v6288 = vand.u32 2147483647, %v6272
        %v6289 = vand.u32 2147483647, %v6273
        %v6290 = vand.u32 2147483647, %v6274
        %v6291 = vand.u32 2147483647, %v6275
        %v6292 = vand.u32 2147483647, %v6276
        %v6293 = vand.u32 2147483647, %v6277
        %v6294 = vand.u32 2147483647, %v6278
        %v6295 = vmul.f32 %v6279, 0.3275911
        %v6296 = vmul.f32 %v6280, 0.3275911
        %v6297 = vmul.f32 %v6281, 0.3275911
        %v6298 = vmul.f32 %v6282, 0.3275911
        %v6299 = vmul.f32 %v6283, 0.3275911
        %v6300 = vmul.f32 %v6284, 0.3275911
        %v6301 = vmul.f32 %v6285, 0.3275911
        %v6302 = vmul.f32 %v6286, 0.3275911
        %v6303 = vmul.f32 %v6287, 0.3275911
        %v6304 = vmul.f32 %v6288, 0.3275911
        %v6305 = vmul.f32 %v6289, 0.3275911
        %v6306 = vmul.f32 %v6290, 0.3275911
        %v6307 = vmul.f32 %v6291, 0.3275911
        %v6308 = vmul.f32 %v6292, 0.3275911
        %v6309 = vmul.f32 %v6293, 0.3275911
        %v6310 = vmul.f32 %v6294, 0.3275911
        %v6311 = vadd.f32 %v6295, 1.0
        %v6312 = vadd.f32 %v6296, 1.0
        %v6313 = vadd.f32 %v6297, 1.0
        %v6314 = vadd.f32 %v6298, 1.0
        %v6315 = vadd.f32 %v6299, 1.0
        %v6316 = vadd.f32 %v6300, 1.0
        %v6317 = vadd.f32 %v6301, 1.0
        %v6318 = vadd.f32 %v6302, 1.0
        %v6319 = vadd.f32 %v6303, 1.0
        %v6320 = vadd.f32 %v6304, 1.0
        %v6321 = vadd.f32 %v6305, 1.0
        %v6322 = vadd.f32 %v6306, 1.0
        %v6323 = vadd.f32 %v6307, 1.0
        %v6324 = vadd.f32 %v6308, 1.0
        %v6325 = vadd.f32 %v6309, 1.0
        %v6326 = vadd.f32 %v6310, 1.0
        %v6327 = vrcp.pop %v6311
        %v6328 = vmul.f32 1.0, %v6327
        %v6329 = vrcp.pop %v6312
        %v6330 = vmul.f32 1.0, %v6329
        %v6331 = vrcp.pop %v6313
        %v6332 = vmul.f32 1.0, %v6331
        %v6333 = vrcp.pop %v6314
        %v6334 = vmul.f32 1.0, %v6333
        %v6335 = vrcp.pop %v6315
        %v6336 = vmul.f32 1.0, %v6335
        %v6337 = vrcp.pop %v6316
        %v6338 = vmul.f32 1.0, %v6337
        %v6339 = vrcp.pop %v6317
        %v6340 = vmul.f32 1.0, %v6339
        %v6341 = vrcp.pop %v6318
        %v6342 = vmul.f32 1.0, %v6341
        %v6343 = vrcp.pop %v6319
        %v6344 = vmul.f32 1.0, %v6343
        %v6345 = vrcp.pop %v6320
        %v6346 = vmul.f32 1.0, %v6345
        %v6347 = vrcp.pop %v6321
        %v6348 = vmul.f32 1.0, %v6347
        %v6349 = vrcp.pop %v6322
        %v6350 = vmul.f32 1.0, %v6349
        %v6351 = vrcp.pop %v6323
        %v6352 = vmul.f32 1.0, %v6351
        %v6353 = vrcp.pop %v6324
        %v6354 = vmul.f32 1.0, %v6353
        %v6355 = vrcp.pop %v6325
        %v6356 = vmul.f32 1.0, %v6355
        %v6357 = vrcp.pop %v6326
        %v6358 = vmul.f32 1.0, %v6357
        %v6359 = vmul.f32 %v6328, 1.0614054
        %v6360 = vmul.f32 %v6330, 1.0614054
        %v6361 = vmul.f32 %v6332, 1.0614054
        %v6362 = vmul.f32 %v6334, 1.0614054
        %v6363 = vmul.f32 %v6336, 1.0614054
        %v6364 = vmul.f32 %v6338, 1.0614054
        %v6365 = vmul.f32 %v6340, 1.0614054
        %v6366 = vmul.f32 %v6342, 1.0614054
        %v6367 = vmul.f32 %v6344, 1.0614054
        %v6368 = vmul.f32 %v6346, 1.0614054
        %v6369 = vmul.f32 %v6348, 1.0614054
        %v6370 = vmul.f32 %v6350, 1.0614054
        %v6371 = vmul.f32 %v6352, 1.0614054
        %v6372 = vmul.f32 %v6354, 1.0614054
        %v6373 = vmul.f32 %v6356, 1.0614054
        %v6374 = vmul.f32 %v6358, 1.0614054
        %v6375 = vadd.f32 %v6359, -1.4531521
        %v6376 = vadd.f32 %v6360, -1.4531521
        %v6377 = vadd.f32 %v6361, -1.4531521
        %v6378 = vadd.f32 %v6362, -1.4531521
        %v6379 = vadd.f32 %v6363, -1.4531521
        %v6380 = vadd.f32 %v6364, -1.4531521
        %v6381 = vadd.f32 %v6365, -1.4531521
        %v6382 = vadd.f32 %v6366, -1.4531521
        %v6383 = vadd.f32 %v6367, -1.4531521
        %v6384 = vadd.f32 %v6368, -1.4531521
        %v6385 = vadd.f32 %v6369, -1.4531521
        %v6386 = vadd.f32 %v6370, -1.4531521
        %v6387 = vadd.f32 %v6371, -1.4531521
        %v6388 = vadd.f32 %v6372, -1.4531521
        %v6389 = vadd.f32 %v6373, -1.4531521
        %v6390 = vadd.f32 %v6374, -1.4531521
        %v6391 = vmul.f32 %v6375, %v6328
        %v6392 = vmul.f32 %v6376, %v6330
        %v6393 = vmul.f32 %v6377, %v6332
        %v6394 = vmul.f32 %v6378, %v6334
        %v6395 = vmul.f32 %v6379, %v6336
        %v6396 = vmul.f32 %v6380, %v6338
        %v6397 = vmul.f32 %v6381, %v6340
        %v6398 = vmul.f32 %v6382, %v6342
        %v6399 = vmul.f32 %v6383, %v6344
        %v6400 = vmul.f32 %v6384, %v6346
        %v6401 = vmul.f32 %v6385, %v6348
        %v6402 = vmul.f32 %v6386, %v6350
        %v6403 = vmul.f32 %v6387, %v6352
        %v6404 = vmul.f32 %v6388, %v6354
        %v6405 = vmul.f32 %v6389, %v6356
        %v6406 = vmul.f32 %v6390, %v6358
        %v6407 = vadd.f32 %v6391, 1.4214138
        %v6408 = vadd.f32 %v6392, 1.4214138
        %v6409 = vadd.f32 %v6393, 1.4214138
        %v6410 = vadd.f32 %v6394, 1.4214138
        %v6411 = vadd.f32 %v6395, 1.4214138
        %v6412 = vadd.f32 %v6396, 1.4214138
        %v6413 = vadd.f32 %v6397, 1.4214138
        %v6414 = vadd.f32 %v6398, 1.4214138
        %v6415 = vadd.f32 %v6399, 1.4214138
        %v6416 = vadd.f32 %v6400, 1.4214138
        %v6417 = vadd.f32 %v6401, 1.4214138
        %v6418 = vadd.f32 %v6402, 1.4214138
        %v6419 = vadd.f32 %v6403, 1.4214138
        %v6420 = vadd.f32 %v6404, 1.4214138
        %v6421 = vadd.f32 %v6405, 1.4214138
        %v6422 = vadd.f32 %v6406, 1.4214138
        %v6423 = vmul.f32 %v6407, %v6328
        %v6424 = vmul.f32 %v6408, %v6330
        %v6425 = vmul.f32 %v6409, %v6332
        %v6426 = vmul.f32 %v6410, %v6334
        %v6427 = vmul.f32 %v6411, %v6336
        %v6428 = vmul.f32 %v6412, %v6338
        %v6429 = vmul.f32 %v6413, %v6340
        %v6430 = vmul.f32 %v6414, %v6342
        %v6431 = vmul.f32 %v6415, %v6344
        %v6432 = vmul.f32 %v6416, %v6346
        %v6433 = vmul.f32 %v6417, %v6348
        %v6434 = vmul.f32 %v6418, %v6350
        %v6435 = vmul.f32 %v6419, %v6352
        %v6436 = vmul.f32 %v6420, %v6354
        %v6437 = vmul.f32 %v6421, %v6356
        %v6438 = vmul.f32 %v6422, %v6358
        %v6439 = vadd.f32 %v6423, -0.28449672
        %v6440 = vadd.f32 %v6424, -0.28449672
        %v6441 = vadd.f32 %v6425, -0.28449672
        %v6442 = vadd.f32 %v6426, -0.28449672
        %v6443 = vadd.f32 %v6427, -0.28449672
        %v6444 = vadd.f32 %v6428, -0.28449672
        %v6445 = vadd.f32 %v6429, -0.28449672
        %v6446 = vadd.f32 %v6430, -0.28449672
        %v6447 = vadd.f32 %v6431, -0.28449672
        %v6448 = vadd.f32 %v6432, -0.28449672
        %v6449 = vadd.f32 %v6433, -0.28449672
        %v6450 = vadd.f32 %v6434, -0.28449672
        %v6451 = vadd.f32 %v6435, -0.28449672
        %v6452 = vadd.f32 %v6436, -0.28449672
        %v6453 = vadd.f32 %v6437, -0.28449672
        %v6454 = vadd.f32 %v6438, -0.28449672
        %v6455 = vmul.f32 %v6439, %v6328
        %v6456 = vmul.f32 %v6440, %v6330
        %v6457 = vmul.f32 %v6441, %v6332
        %v6458 = vmul.f32 %v6442, %v6334
        %v6459 = vmul.f32 %v6443, %v6336
        %v6460 = vmul.f32 %v6444, %v6338
        %v6461 = vmul.f32 %v6445, %v6340
        %v6462 = vmul.f32 %v6446, %v6342
        %v6463 = vmul.f32 %v6447, %v6344
        %v6464 = vmul.f32 %v6448, %v6346
        %v6465 = vmul.f32 %v6449, %v6348
        %v6466 = vmul.f32 %v6450, %v6350
        %v6467 = vmul.f32 %v6451, %v6352
        %v6468 = vmul.f32 %v6452, %v6354
        %v6469 = vmul.f32 %v6453, %v6356
        %v6470 = vmul.f32 %v6454, %v6358
        %v6471 = vadd.f32 %v6455, 0.2548296
        %v6472 = vadd.f32 %v6456, 0.2548296
        %v6473 = vadd.f32 %v6457, 0.2548296
        %v6474 = vadd.f32 %v6458, 0.2548296
        %v6475 = vadd.f32 %v6459, 0.2548296
        %v6476 = vadd.f32 %v6460, 0.2548296
        %v6477 = vadd.f32 %v6461, 0.2548296
        %v6478 = vadd.f32 %v6462, 0.2548296
        %v6479 = vadd.f32 %v6463, 0.2548296
        %v6480 = vadd.f32 %v6464, 0.2548296
        %v6481 = vadd.f32 %v6465, 0.2548296
        %v6482 = vadd.f32 %v6466, 0.2548296
        %v6483 = vadd.f32 %v6467, 0.2548296
        %v6484 = vadd.f32 %v6468, 0.2548296
        %v6485 = vadd.f32 %v6469, 0.2548296
        %v6486 = vadd.f32 %v6470, 0.2548296
        %v6487 = vmul.f32 %v6471, %v6328
        %v6488 = vmul.f32 %v6472, %v6330
        %v6489 = vmul.f32 %v6473, %v6332
        %v6490 = vmul.f32 %v6474, %v6334
        %v6491 = vmul.f32 %v6475, %v6336
        %v6492 = vmul.f32 %v6476, %v6338
        %v6493 = vmul.f32 %v6477, %v6340
        %v6494 = vmul.f32 %v6478, %v6342
        %v6495 = vmul.f32 %v6479, %v6344
        %v6496 = vmul.f32 %v6480, %v6346
        %v6497 = vmul.f32 %v6481, %v6348
        %v6498 = vmul.f32 %v6482, %v6350
        %v6499 = vmul.f32 %v6483, %v6352
        %v6500 = vmul.f32 %v6484, %v6354
        %v6501 = vmul.f32 %v6485, %v6356
        %v6502 = vmul.f32 %v6486, %v6358
        %v6503 = vsub.f32 0.0, %v6279
        %v6504 = vsub.f32 0.0, %v6280
        %v6505 = vsub.f32 0.0, %v6281
        %v6506 = vsub.f32 0.0, %v6282
        %v6507 = vsub.f32 0.0, %v6283
        %v6508 = vsub.f32 0.0, %v6284
        %v6509 = vsub.f32 0.0, %v6285
        %v6510 = vsub.f32 0.0, %v6286
        %v6511 = vsub.f32 0.0, %v6287
        %v6512 = vsub.f32 0.0, %v6288
        %v6513 = vsub.f32 0.0, %v6289
        %v6514 = vsub.f32 0.0, %v6290
        %v6515 = vsub.f32 0.0, %v6291
        %v6516 = vsub.f32 0.0, %v6292
        %v6517 = vsub.f32 0.0, %v6293
        %v6518 = vsub.f32 0.0, %v6294
        %v6519 = vmul.f32 %v6503, %v6279
        %v6520 = vmul.f32 %v6504, %v6280
        %v6521 = vmul.f32 %v6505, %v6281
        %v6522 = vmul.f32 %v6506, %v6282
        %v6523 = vmul.f32 %v6507, %v6283
        %v6524 = vmul.f32 %v6508, %v6284
        %v6525 = vmul.f32 %v6509, %v6285
        %v6526 = vmul.f32 %v6510, %v6286
        %v6527 = vmul.f32 %v6511, %v6287
        %v6528 = vmul.f32 %v6512, %v6288
        %v6529 = vmul.f32 %v6513, %v6289
        %v6530 = vmul.f32 %v6514, %v6290
        %v6531 = vmul.f32 %v6515, %v6291
        %v6532 = vmul.f32 %v6516, %v6292
        %v6533 = vmul.f32 %v6517, %v6293
        %v6534 = vmul.f32 %v6518, %v6294
        %v6535 = vmul.f32 %v6519, 1.442695
        %v6536 = vpow.pop %v6535
        %v6537 = vmul.f32 %v6520, 1.442695
        %v6538 = vpow.pop %v6537
        %v6539 = vmul.f32 %v6521, 1.442695
        %v6540 = vpow.pop %v6539
        %v6541 = vmul.f32 %v6522, 1.442695
        %v6542 = vpow.pop %v6541
        %v6543 = vmul.f32 %v6523, 1.442695
        %v6544 = vpow.pop %v6543
        %v6545 = vmul.f32 %v6524, 1.442695
        %v6546 = vpow.pop %v6545
        %v6547 = vmul.f32 %v6525, 1.442695
        %v6548 = vpow.pop %v6547
        %v6549 = vmul.f32 %v6526, 1.442695
        %v6550 = vpow.pop %v6549
        %v6551 = vmul.f32 %v6527, 1.442695
        %v6552 = vpow.pop %v6551
        %v6553 = vmul.f32 %v6528, 1.442695
        %v6554 = vpow.pop %v6553
        %v6555 = vmul.f32 %v6529, 1.442695
        %v6556 = vpow.pop %v6555
        %v6557 = vmul.f32 %v6530, 1.442695
        %v6558 = vpow.pop %v6557
        %v6559 = vmul.f32 %v6531, 1.442695
        %v6560 = vpow.pop %v6559
        %v6561 = vmul.f32 %v6532, 1.442695
        %v6562 = vpow.pop %v6561
        %v6563 = vmul.f32 %v6533, 1.442695
        %v6564 = vpow.pop %v6563
        %v6565 = vmul.f32 %v6534, 1.442695
        %v6566 = vpow.pop %v6565
        %v6567 = vmul.f32 %v6487, %v6536
        %v6568 = vmul.f32 %v6488, %v6538
        %v6569 = vmul.f32 %v6489, %v6540
        %v6570 = vmul.f32 %v6490, %v6542
        %v6571 = vmul.f32 %v6491, %v6544
        %v6572 = vmul.f32 %v6492, %v6546
        %v6573 = vmul.f32 %v6493, %v6548
        %v6574 = vmul.f32 %v6494, %v6550
        %v6575 = vmul.f32 %v6495, %v6552
        %v6576 = vmul.f32 %v6496, %v6554
        %v6577 = vmul.f32 %v6497, %v6556
        %v6578 = vmul.f32 %v6498, %v6558
        %v6579 = vmul.f32 %v6499, %v6560
        %v6580 = vmul.f32 %v6500, %v6562
        %v6581 = vmul.f32 %v6501, %v6564
        %v6582 = vmul.f32 %v6502, %v6566
        %v6583 = vsub.f32 1.0, %v6567
        %v6584 = vsub.f32 1.0, %v6568
        %v6585 = vsub.f32 1.0, %v6569
        %v6586 = vsub.f32 1.0, %v6570
        %v6587 = vsub.f32 1.0, %v6571
        %v6588 = vsub.f32 1.0, %v6572
        %v6589 = vsub.f32 1.0, %v6573
        %v6590 = vsub.f32 1.0, %v6574
        %v6591 = vsub.f32 1.0, %v6575
        %v6592 = vsub.f32 1.0, %v6576
        %v6593 = vsub.f32 1.0, %v6577
        %v6594 = vsub.f32 1.0, %v6578
        %v6595 = vsub.f32 1.0, %v6579
        %v6596 = vsub.f32 1.0, %v6580
        %v6597 = vsub.f32 1.0, %v6581
        %v6598 = vsub.f32 1.0, %v6582
        %vm6599 = vcmp.ge.f32.partialorder %v6263, 0.0
        %vm6600 = vcmp.ge.f32.partialorder %v6264, 0.0
        %vm6601 = vcmp.ge.f32.partialorder %v6265, 0.0
        %vm6602 = vcmp.ge.f32.partialorder %v6266, 0.0
        %vm6603 = vcmp.ge.f32.partialorder %v6267, 0.0
        %vm6604 = vcmp.ge.f32.partialorder %v6268, 0.0
        %vm6605 = vcmp.ge.f32.partialorder %v6269, 0.0
        %vm6606 = vcmp.ge.f32.partialorder %v6270, 0.0
        %vm6607 = vcmp.ge.f32.partialorder %v6271, 0.0
        %vm6608 = vcmp.ge.f32.partialorder %v6272, 0.0
        %vm6609 = vcmp.ge.f32.partialorder %v6273, 0.0
        %vm6610 = vcmp.ge.f32.partialorder %v6274, 0.0
        %vm6611 = vcmp.ge.f32.partialorder %v6275, 0.0
        %vm6612 = vcmp.ge.f32.partialorder %v6276, 0.0
        %vm6613 = vcmp.ge.f32.partialorder %v6277, 0.0
        %vm6614 = vcmp.ge.f32.partialorder %v6278, 0.0
        %v6615 = vsub.f32 0.0, %v6583
        %v6616 = vsub.f32 0.0, %v6584
        %v6617 = vsub.f32 0.0, %v6585
        %v6618 = vsub.f32 0.0, %v6586
        %v6619 = vsub.f32 0.0, %v6587
        %v6620 = vsub.f32 0.0, %v6588
        %v6621 = vsub.f32 0.0, %v6589
        %v6622 = vsub.f32 0.0, %v6590
        %v6623 = vsub.f32 0.0, %v6591
        %v6624 = vsub.f32 0.0, %v6592
        %v6625 = vsub.f32 0.0, %v6593
        %v6626 = vsub.f32 0.0, %v6594
        %v6627 = vsub.f32 0.0, %v6595
        %v6628 = vsub.f32 0.0, %v6596
        %v6629 = vsub.f32 0.0, %v6597
        %v6630 = vsub.f32 0.0, %v6598
        %v6631 = vsel %vm6599, %v6583, %v6615
        %v6632 = vsel %vm6600, %v6584, %v6616
        %v6633 = vsel %vm6601, %v6585, %v6617
        %v6634 = vsel %vm6602, %v6586, %v6618
        %v6635 = vsel %vm6603, %v6587, %v6619
        %v6636 = vsel %vm6604, %v6588, %v6620
        %v6637 = vsel %vm6605, %v6589, %v6621
        %v6638 = vsel %vm6606, %v6590, %v6622
        %v6639 = vsel %vm6607, %v6591, %v6623
        %v6640 = vsel %vm6608, %v6592, %v6624
        %v6641 = vsel %vm6609, %v6593, %v6625
        %v6642 = vsel %vm6610, %v6594, %v6626
        %v6643 = vsel %vm6611, %v6595, %v6627
        %v6644 = vsel %vm6612, %v6596, %v6628
        %v6645 = vsel %vm6613, %v6597, %v6629
        %v6646 = vsel %vm6614, %v6598, %v6630
        %v6647 = vadd.f32 %v6631, 1.0
        %v6648 = vadd.f32 %v6632, 1.0
        %v6649 = vadd.f32 %v6633, 1.0
        %v6650 = vadd.f32 %v6634, 1.0
        %v6651 = vadd.f32 %v6635, 1.0
        %v6652 = vadd.f32 %v6636, 1.0
        %v6653 = vadd.f32 %v6637, 1.0
        %v6654 = vadd.f32 %v6638, 1.0
        %v6655 = vadd.f32 %v6639, 1.0
        %v6656 = vadd.f32 %v6640, 1.0
        %v6657 = vadd.f32 %v6641, 1.0
        %v6658 = vadd.f32 %v6642, 1.0
        %v6659 = vadd.f32 %v6643, 1.0
        %v6660 = vadd.f32 %v6644, 1.0
        %v6661 = vadd.f32 %v6645, 1.0
        %v6662 = vadd.f32 %v6646, 1.0
        %v6663 = vmul.f32 %v6247, %v6647
        %v6664 = vmul.f32 %v6248, %v6648
        %v6665 = vmul.f32 %v6249, %v6649
        %v6666 = vmul.f32 %v6250, %v6650
        %v6667 = vmul.f32 %v6251, %v6651
        %v6668 = vmul.f32 %v6252, %v6652
        %v6669 = vmul.f32 %v6253, %v6653
        %v6670 = vmul.f32 %v6254, %v6654
        %v6671 = vmul.f32 %v6255, %v6655
        %v6672 = vmul.f32 %v6256, %v6656
        %v6673 = vmul.f32 %v6257, %v6657
        %v6674 = vmul.f32 %v6258, %v6658
        %v6675 = vmul.f32 %v6259, %v6659
        %v6676 = vmul.f32 %v6260, %v6660
        %v6677 = vmul.f32 %v6261, %v6661
        %v6678 = vmul.f32 %v6262, %v6662
        %v6679 = vld [vmem:[%s5] sm:$0xff]
        %v6680 = vld [vmem:[%s5 + $0x8] sm:$0xff]
        %v6681 = vld [vmem:[%s5 + $0x10] sm:$0xff]
        %v6682 = vld [vmem:[%s5 + $0x18] sm:$0xff]
        %v6683 = vld [vmem:[%s5 + $0x20] sm:$0xff]
        %v6684 = vld [vmem:[%s5 + $0x28] sm:$0xff]
        %v6685 = vld [vmem:[%s5 + $0x30] sm:$0xff]
        %v6686 = vld [vmem:[%s5 + $0x38] sm:$0xff]
        %v6687 = vld [vmem:[%s5 + $0x40] sm:$0xff]
        %v6688 = vld [vmem:[%s5 + $0x48] sm:$0xff]
        %v6689 = vld [vmem:[%s5 + $0x50] sm:$0xff]
        %v6690 = vld [vmem:[%s5 + $0x58] sm:$0xff]
        %v6691 = vld [vmem:[%s5 + $0x60] sm:$0xff]
        %v6692 = vld [vmem:[%s5 + $0x68] sm:$0xff]
        %v6693 = vld [vmem:[%s5 + $0x70] sm:$0xff]
        %v6694 = vld [vmem:[%s5 + $0x78] sm:$0xff]
        %v6695 = vld [vmem:[%s6] sm:$0x1]
        %v6697 = vlaneseq
        %v6698 = vshrl.u32 %v6697, 7
        %v6699 = vsub.s32 0, %v6698
        %v6700 = vrot.slane %v6695, %v6699
        %6702 = vmatprep.subr.mxu0 0.0
        %6703 = vmatpush1.msra.mxu0 %v6679
        %6704 = vmatprep.subr.mxu0 0.0
        %6705 = vmatpush1.msra.mxu0 %v6680
        %6706 = vmatprep.subr.mxu0 0.0
        %6707 = vmatpush1.msra.mxu0 %v6681
        %6708 = vmatprep.subr.mxu0 0.0
        %6709 = vmatpush1.msra.mxu0 %v6682
        %6710 = vmatprep.subr.mxu0 0.0
        %6711 = vmatpush1.msra.mxu0 %v6683
        %6712 = vmatprep.subr.mxu0 0.0
        %6713 = vmatpush1.msra.mxu0 %v6684
        %6714 = vmatprep.subr.mxu0 0.0
        %6715 = vmatpush1.msra.mxu0 %v6685
        %6716 = vmatprep.subr.mxu0 0.0
        %6717 = vmatpush1.msra.mxu0 %v6686
        %6718 = vmatprep.subr.mxu0 0.0
        %6719 = vmatpush1.msra.mxu0 %v6687
        %6720 = vmatprep.subr.mxu0 0.0
        %6721 = vmatpush1.msra.mxu0 %v6688
        %6722 = vmatprep.subr.mxu0 0.0
        %6723 = vmatpush1.msra.mxu0 %v6689
        %6724 = vmatprep.subr.mxu0 0.0
        %6725 = vmatpush1.msra.mxu0 %v6690
        %6726 = vmatprep.subr.mxu0 0.0
        %6727 = vmatpush1.msra.mxu0 %v6691
        %6728 = vmatprep.subr.mxu0 0.0
        %6729 = vmatpush1.msra.mxu0 %v6692
        %6730 = vmatprep.subr.mxu0 0.0
        %6731 = vmatpush1.msra.mxu0 %v6693
        %6732 = vmatprep.subr.mxu0 0.0
        %6733 = vmatpush1.msra.mxu0 %v6694
        %6734 = vmatprep.subr.mxu0 0.0
        %6735 = vmatpush1.msra.mxu0 0.0
        %6736 = vmatprep.subr.mxu0 0.0
        %6737 = vmatpush1.msra.mxu0 0.0
        %6738 = vmatprep.subr.mxu0 0.0
        %6739 = vmatpush1.msra.mxu0 0.0
        %6740 = vmatprep.subr.mxu0 0.0
        %6741 = vmatpush1.msra.mxu0 0.0
        %6742 = vmatprep.subr.mxu0 0.0
        %6743 = vmatpush1.msra.mxu0 0.0
        %6744 = vmatprep.subr.mxu0 0.0
        %6745 = vmatpush1.msra.mxu0 0.0
        %6746 = vmatprep.subr.mxu0 0.0
        %6747 = vmatpush1.msra.mxu0 0.0
        %6748 = vmatprep.subr.mxu0 0.0
        %6749 = vmatpush1.msra.mxu0 0.0
        %6750 = vmatprep.subr.mxu0 0.0
        %6751 = vmatpush1.msra.mxu0 0.0
        %6752 = vmatprep.subr.mxu0 0.0
        %6753 = vmatpush1.msra.mxu0 0.0
        %6754 = vmatprep.subr.mxu0 0.0
        %6755 = vmatpush1.msra.mxu0 0.0
        %6756 = vmatprep.subr.mxu0 0.0
        %6757 = vmatpush1.msra.mxu0 0.0
        %6758 = vmatprep.subr.mxu0 0.0
        %6759 = vmatpush1.msra.mxu0 0.0
        %6760 = vmatprep.subr.mxu0 0.0
        %6761 = vmatpush1.msra.mxu0 0.0
        %6762 = vmatprep.subr.mxu0 0.0
        %6763 = vmatpush1.msra.mxu0 0.0
        %6764 = vmatprep.subr.mxu0 0.0
        %6765 = vmatpush1.msra.mxu0 0.0
        %6766 = vmatprep.mubr.f32.mxu0 0.0
        %6767 = vmatmul.mubr.f32.gmra.mrb[0].mxu0 %v6663
        %v6768 = vpop.f32.mrb[0].mxu0
        %v6769 = vadd.f32 %v6700, %v6768
        %v6770 = vpop.f32.mrb[0].mxu0
        %6771 = vmatprep.mubr.f32.mxu0 0.0
        %6772 = vmatmul.mubr.f32.gmra.mrb[0].mxu0 %v6664
        %v6773 = vpop.f32.mrb[0].mxu0
        %v6774 = vadd.f32 %v6700, %v6773
        %v6775 = vpop.f32.mrb[0].mxu0
        %6776 = vmatprep.mubr.f32.mxu0 0.0
        %6777 = vmatmul.mubr.f32.gmra.mrb[0].mxu0 %v6665
        %v6778 = vpop.f32.mrb[0].mxu0
        %v6779 = vadd.f32 %v6700, %v6778
        %v6780 = vpop.f32.mrb[0].mxu0
        %6781 = vmatprep.mubr.f32.mxu0 0.0
        %6782 = vmatmul.mubr.f32.gmra.mrb[0].mxu0 %v6666
        %v6783 = vpop.f32.mrb[0].mxu0
        %v6784 = vadd.f32 %v6700, %v6783
        %v6785 = vpop.f32.mrb[0].mxu0
        %6786 = vmatprep.mubr.f32.mxu0 0.0
        %6787 = vmatmul.mubr.f32.gmra.mrb[0].mxu0 %v6667
        %v6788 = vpop.f32.mrb[0].mxu0
        %v6789 = vadd.f32 %v6700, %v6788
        %v6790 = vpop.f32.mrb[0].mxu0
        %6791 = vmatprep.mubr.f32.mxu0 0.0
        %6792 = vmatmul.mubr.f32.gmra.mrb[0].mxu0 %v6668
        %v6793 = vpop.f32.mrb[0].mxu0
        %v6794 = vadd.f32 %v6700, %v6793
        %v6795 = vpop.f32.mrb[0].mxu0
        %6796 = vmatprep.mubr.f32.mxu0 0.0
        %6797 = vmatmul.mubr.f32.gmra.mrb[0].mxu0 %v6669
        %v6798 = vpop.f32.mrb[0].mxu0
        %v6799 = vadd.f32 %v6700, %v6798
        %v6800 = vpop.f32.mrb[0].mxu0
        %6801 = vmatprep.mubr.f32.mxu0 0.0
        %6802 = vmatmul.mubr.f32.gmra.mrb[0].mxu0 %v6670
        %v6803 = vpop.f32.mrb[0].mxu0
        %v6804 = vadd.f32 %v6700, %v6803
        %v6805 = vpop.f32.mrb[0].mxu0
        %6806 = vmatprep.mubr.f32.mxu0 0.0
        %6807 = vmatmul.mubr.f32.gmra.mrb[0].mxu0 %v6671
        %v6808 = vpop.f32.mrb[0].mxu0
        %v6809 = vadd.f32 %v6700, %v6808
        %v6810 = vpop.f32.mrb[0].mxu0
        %6811 = vmatprep.mubr.f32.mxu0 0.0
        %6812 = vmatmul.mubr.f32.gmra.mrb[0].mxu0 %v6672
        %v6813 = vpop.f32.mrb[0].mxu0
        %v6814 = vadd.f32 %v6700, %v6813
        %v6815 = vpop.f32.mrb[0].mxu0
        %6816 = vmatprep.mubr.f32.mxu0 0.0
        %6817 = vmatmul.mubr.f32.gmra.mrb[0].mxu0 %v6673
        %v6818 = vpop.f32.mrb[0].mxu0
        %v6819 = vadd.f32 %v6700, %v6818
        %v6820 = vpop.f32.mrb[0].mxu0
        %6821 = vmatprep.mubr.f32.mxu0 0.0
        %6822 = vmatmul.mubr.f32.gmra.mrb[0].mxu0 %v6674
        %v6823 = vpop.f32.mrb[0].mxu0
        %v6824 = vadd.f32 %v6700, %v6823
        %v6825 = vpop.f32.mrb[0].mxu0
        %6826 = vmatprep.mubr.f32.mxu0 0.0
        %6827 = vmatmul.mubr.f32.gmra.mrb[0].mxu0 %v6675
        %v6828 = vpop.f32.mrb[0].mxu0
        %v6829 = vadd.f32 %v6700, %v6828
        %v6830 = vpop.f32.mrb[0].mxu0
        %6831 = vmatprep.mubr.f32.mxu0 0.0
        %6832 = vmatmul.mubr.f32.gmra.mrb[0].mxu0 %v6676
        %v6833 = vpop.f32.mrb[0].mxu0
        %v6834 = vadd.f32 %v6700, %v6833
        %v6835 = vpop.f32.mrb[0].mxu0
        %6836 = vmatprep.mubr.f32.mxu0 0.0
        %6837 = vmatmul.mubr.f32.gmra.mrb[0].mxu0 %v6677
        %v6838 = vpop.f32.mrb[0].mxu0
        %v6839 = vadd.f32 %v6700, %v6838
        %v6840 = vpop.f32.mrb[0].mxu0
        %6841 = vmatprep.mubr.f32.mxu0 0.0
        %6842 = vmatmul.mubr.f32.gmra.mrb[0].mxu0 %v6678
        %v6843 = vpop.f32.mrb[0].mxu0
        %v6844 = vadd.f32 %v6700, %v6843
        %v6845 = vpop.f32.mrb[0].mxu0
        %6846 = vdwg.mxu0
        %v6863 = vrot.slane %v6769, 5
        %v6864 = vrot.slane %v6774, 5
        %v6865 = vsel %vm4124, %v6863, %v6864
        %v6866 = vrot.slane %v6779, 5
        %v6867 = vrot.slane %v6784, 5
        %v6868 = vsel %vm4124, %v6866, %v6867
        %v6869 = vrot.slane %v6789, 5
        %v6870 = vrot.slane %v6794, 5
        %v6871 = vsel %vm4124, %v6869, %v6870
        %v6872 = vrot.slane %v6799, 5
        %v6873 = vrot.slane %v6804, 5
        %v6874 = vsel %vm4124, %v6872, %v6873
        %v6875 = vrot.slane %v6809, 5
        %v6876 = vrot.slane %v6814, 5
        %v6877 = vsel %vm4124, %v6875, %v6876
        %v6878 = vrot.slane %v6819, 5
        %v6879 = vrot.slane %v6824, 5
        %v6880 = vsel %vm4124, %v6878, %v6879
        %v6881 = vrot.slane %v6829, 5
        %v6882 = vrot.slane %v6834, 5
        %v6883 = vsel %vm4124, %v6881, %v6882
        %v6884 = vrot.slane %v6839, 5
        %v6885 = vrot.slane %v6844, 5
        %v6886 = vsel %vm4124, %v6884, %v6885
        %v6911 = vadd.f32 %v304, %v6863
        %v6912 = vadd.f32 %v305, %v6865
        %v6913 = vadd.f32 %v306, %v6864
        %v6914 = vadd.f32 %v307, %v6866
        %v6915 = vadd.f32 %v308, %v6868
        %v6916 = vadd.f32 %v309, %v6867
        %v6917 = vadd.f32 %v310, %v6869
        %v6918 = vadd.f32 %v311, %v6871
        %v6919 = vadd.f32 %v312, %v6870
        %v6920 = vadd.f32 %v313, %v6872
        %v6921 = vadd.f32 %v314, %v6874
        %v6922 = vadd.f32 %v315, %v6873
        %v6923 = vadd.f32 %v316, %v6875
        %v6924 = vadd.f32 %v317, %v6877
        %v6925 = vadd.f32 %v318, %v6876
        %v6926 = vadd.f32 %v319, %v6878
        %v6927 = vadd.f32 %v320, %v6880
        %v6928 = vadd.f32 %v321, %v6879
        %v6929 = vadd.f32 %v322, %v6881
        %v6930 = vadd.f32 %v323, %v6883
        %v6931 = vadd.f32 %v324, %v6882
        %v6932 = vadd.f32 %v325, %v6884
        %v6933 = vadd.f32 %v326, %v6886
        %v6934 = vadd.f32 %v327, %v6885
        %vm6935 = vcmask 261123
        %6936 = vst.msk [vmem:[%s285 - $0x3] sm:$0xf8] %vm6935, %v6911
        %6937 = vst.msk [vmem:[%s285 + $0x5] sm:$0xff] %vm5833, %v6912
        %vm6938 = vcmask 256000
        %6939 = vst.msk [vmem:[%s285 + $0xd] sm:$0x7] %vm6938, %v6913
        %6940 = vst.msk [vmem:[%s285 + $0xd] sm:$0xf8] %vm6935, %v6914
        %6941 = vst.msk [vmem:[%s285 + $0x15] sm:$0xff] %vm5833, %v6915
        %6942 = vst.msk [vmem:[%s285 + $0x1d] sm:$0x7] %vm6938, %v6916
        %6943 = vst.msk [vmem:[%s285 + $0x1d] sm:$0xf8] %vm6935, %v6917
        %6944 = vst.msk [vmem:[%s285 + $0x25] sm:$0xff] %vm5833, %v6918
        %6945 = vst.msk [vmem:[%s285 + $0x2d] sm:$0x7] %vm6938, %v6919
        %6946 = vst.msk [vmem:[%s285 + $0x2d] sm:$0xf8] %vm6935, %v6920
        %6947 = vst.msk [vmem:[%s285 + $0x35] sm:$0xff] %vm5833, %v6921
        %6948 = vst.msk [vmem:[%s285 + $0x3d] sm:$0x7] %vm6938, %v6922
        %6949 = vst.msk [vmem:[%s285 + $0x3d] sm:$0xf8] %vm6935, %v6923
        %6950 = vst.msk [vmem:[%s285 + $0x45] sm:$0xff] %vm5833, %v6924
        %6951 = vst.msk [vmem:[%s285 + $0x4d] sm:$0x7] %vm6938, %v6925
        %6952 = vst.msk [vmem:[%s285 + $0x4d] sm:$0xf8] %vm6935, %v6926
        %6953 = vst.msk [vmem:[%s285 + $0x55] sm:$0xff] %vm5833, %v6927
        %6954 = vst.msk [vmem:[%s285 + $0x5d] sm:$0x7] %vm6938, %v6928
        %6955 = vst.msk [vmem:[%s285 + $0x5d] sm:$0xf8] %vm6935, %v6929
        %6956 = vst.msk [vmem:[%s285 + $0x65] sm:$0xff] %vm5833, %v6930
        %6957 = vst.msk [vmem:[%s285 + $0x6d] sm:$0x7] %vm6938, %v6931
        %6958 = vst.msk [vmem:[%s285 + $0x6d] sm:$0xf8] %vm6935, %v6932
        %6959 = vst.msk [vmem:[%s285 + $0x75] sm:$0xff] %vm5833, %v6933
        %6960 = vst.msk [vmem:[%s285 + $0x7d] sm:$0x7] %vm6938, %v6934
        %s6961 = sand.u32 %s195, 1
        %s6962 = scalar_lea.sflag [#allocation3], %s6961
        %s6963 = sand.u32 %s195, 1
        %s6964 = smul.addr %s6963, 128
        %s6965 = scalar_lea.vmem [#allocation2], %s6964
        // Predicated region
        $region49: #{tpu_custom_call.1} parent=47 // pred_check
          %p6966 = pneg %p205
        $region50: #{tpu_custom_call.1} parent=47 // pred_check_branch
          %6968 = sbr.rel (%p6966) target = $region52
        $region51: #{tpu_custom_call.1} parent=47 // pred_region
          %s6969 = smul.u32 8, %s26
          %s6971 = ssub.s32 2048, 2048
          %6972 = vsyncadd %s6962, %s6971
          %s6973 = smul.addr %s6969, 2
          %s6974 = smul.addr %s25, 32
          %s6975 = sadd.s32 %s6973, %s6974
          %s6976 = smul.addr %s6975, 128
          %s6977 = scalar_lea.hbm %s7, %s6976
          %s6978 = sshll.u32 %s6965, 4
          %s6979 = int_to_ptr.vmem [resolvable:$true] %s6978
          %6984 = dma.vmem_to_hbm [thread:$0]  %s6979, 2048, %s6977, %s6962, 128, 128, 8
        $region52: #{tpu_custom_call.1} parent=47 // pred_fallthru
          _
      $region48: #{tpu_custom_call.1} parent=5 // pred_fallthru
        _
      %p6985 = scmp.le.s32.totalorder 2, %s16
      // Predicated region
      $region53: #{tpu_custom_call.1} parent=5 // pred_check
        %p6986 = pneg %p6985
      $region54: #{tpu_custom_call.1} parent=5 // pred_check_branch
        %6988 = sbr.rel (%p6986) target = $region56
      $region55: #{tpu_custom_call.1} parent=5 // pred_region
        %s6989 = ssub.s32 %s16, 2
        // Predicated region
        $region57: #{tpu_custom_call.1} parent=55 // pred_check
          %p6990 = pneg %p211
        $region58: #{tpu_custom_call.1} parent=55 // pred_check_branch
          %6992 = sbr.rel (%p6990) target = $region60
        $region59: #{tpu_custom_call.1} parent=55 // pred_region
          %s6993 = sand.u32 %s196, 1
          %s6994 = scalar_lea.sflag [#allocation3], %s6993
          %s6995 = sand.u32 %s196, 1
          %s6996 = smul.addr %s6995, 128
          %s6997 = scalar_lea.vmem [#allocation2], %s6996
          %6998 = dma.done %s6994, 2048
        $region60: #{tpu_custom_call.1} parent=55 // pred_fallthru
          _
      $region56: #{tpu_custom_call.1} parent=5 // pred_fallthru
        _
    $region6: #{tpu_custom_call.1} parent=1 // loop_footer
      %s20 = sadd.s32 1, %s16
    $region7: #{tpu_custom_call.1} parent=1 // loop_footer_branch
      %15 = sbr.rel target = $region3
    $region8: #{tpu_custom_call.1} parent=1 // loop_exit
      _
    %6999 = vsyncpa [#allocation3], 1
    %s7000 = scalar_lea.sflag [#allocation3], 1
    %7001 = vsyncpa %s7000, 1

</llo_original>
